<compile_context>
chip_gen: v6e
topology: v6e:2x2x1
jax: 0.10.0
libtpu: 0.0.40
codegen_flags: <defaults>
</compile_context>

<pallas_src>
import functools
from typing import NamedTuple

import jax
import jax.numpy as jnp
from jax import lax
from jax.experimental import pallas as pl
from jax.experimental.pallas import tpu as pltpu


# ----------------------------------------------------------------------------- genotype

class Genotype(NamedTuple):
    normal: list
    normal_concat: list
    reduce: list
    reduce_concat: list


GENOTYPE = Genotype(
    normal=[
        [('sep_conv_3x3', 0), ('skip_connect', 1)],
        [('dil_conv_3x3', 1), ('max_pool_3x3', 0)],
        [('avg_pool_3x3', 2), ('skip_connect', 3)],
        [('sep_conv_3x3', 0), ('skip_connect', 2)],
    ],
    normal_concat=[2, 3, 4, 5],
    reduce=[],                      # unused: reduction=False
    reduce_concat=[2, 3, 4, 5],
)


def build_plan(genotype):
    """Static op plan: per node, a tuple of (kind, input_state_idx, param_slot)."""
    plan, n_dc, n_pool = [], 0, 0
    for edges in genotype.normal:
        node = []
        for name, s_idx in edges:
            if name == 'skip_connect':
                node.append(('skip', s_idx, 0))
            elif name == 'max_pool_3x3':
                node.append(('max', s_idx, n_pool)); n_pool += 1
            elif name == 'avg_pool_3x3':
                node.append(('avg', s_idx, n_pool)); n_pool += 1
            elif name == 'dil_conv_3x3':
                node.append(('dil', s_idx, n_dc)); n_dc += 1
            elif name == 'sep_conv_3x3':
                node.append(('sep', s_idx, n_dc)); n_dc += 2   # two DilConv stages
            else:
                raise ValueError(name)
        plan.append(tuple(node))
    return tuple(plan), n_dc, n_pool


# The fused kernel below is specialized (lane-packed / block-diagonal weights) to this
# exact DAG wiring.  The pure-JAX reference handles any plan from build_plan.
# TODO(synk): generalize the packing schedule for arbitrary genotypes.
_PACKED_PLAN = (
    (('sep', 0, 0), ('skip', 1, 0)),
    (('dil', 1, 2), ('max', 0, 0)),
    (('avg', 2, 1), ('skip', 3, 0)),
    (('sep', 0, 3), ('skip', 2, 0)),
)


# ----------------------------------------------------------------------------- fused Pallas kernel

def cell_kernel(x0_ref, x1_ref,
                w_pre_ref, pre_scale_ref, pre_bias_ref,
                wd_s1a_ref, wd_s1b_ref, w_s1_ref, s1_scale_ref, s1_bias_ref,
                wd_s2_ref, w_s2_ref, s2_scale_ref, s2_bias_ref,
                pool_scale_ref, pool_bias_ref, inv_cnt_ref,
                o_ref,
                zpad_ref, mpad_ref,
                *, C):
    """Whole augment cell: preproc0/1 -> DAG edges -> node sums -> per-slice output stores.

    zpad_ref: (nb, H+4, W+4, 2C) workspace; its width-2 border ring is zero-filled once and
              serves every dilation-1/2 conv and the avg-pool (interiors are overwritten
              per group, reads never leave the pre-filled ring).
    mpad_ref: (nb, H+2, W+2, C) workspace with a width-1 -inf ring for the max-pool.
    """
    f32 = jnp.float32
    nb, H, W, C_pp = x0_ref.shape
    C_p = x1_ref.shape[-1]
    NHW = nb * H * W

    def relu(t):
        return jnp.maximum(t, 0.0)

    def affine_matmul(x2d, w_ref, scale_ref, bias_ref):
        # 1x1 conv(s) as an MXU matmul (f32 operands, f32 accumulate) + folded-BN affine.
        y = jnp.dot(x2d, w_ref[...], preferred_element_type=f32)
        return y * scale_ref[...] + bias_ref[...]

    # ---- one-time halo fills (only the border strips; interiors are overwritten per group)
    zpad_ref[:, 0:2, :, :] = jnp.zeros((nb, 2, W + 4, 2 * C), f32)
    zpad_ref[:, H + 2:H + 4, :, :] = jnp.zeros((nb, 2, W + 4, 2 * C), f32)
    zpad_ref[:, 2:H + 2, 0:2, :] = jnp.zeros((nb, H, 2, 2 * C), f32)
    zpad_ref[:, 2:H + 2, W + 2:W + 4, :] = jnp.zeros((nb, H, 2, 2 * C), f32)
    ninf = float('-inf')
    mpad_ref[:, 0:1, :, :] = jnp.full((nb, 1, W + 2, C), ninf, f32)
    mpad_ref[:, H + 1:H + 2, :, :] = jnp.full((nb, 1, W + 2, C), ninf, f32)
    mpad_ref[:, 1:H + 1, 0:1, :] = jnp.full((nb, H, 1, C), ninf, f32)
    mpad_ref[:, 1:H + 1, W + 1:W + 2, :] = jnp.full((nb, H, 1, C), ninf, f32)

    def dw3x3(x, wd9, d):
        # Depthwise 3x3, dilation d, zero padding.  x: (nb,H,W,CS); wd9: (9,CS) value.
        # One interior store, then 9 window reads consumed immediately (no taps list,
        # per-tap weight vectors come from the single preloaded wd9 value).
        CS = x.shape[-1]
        zpad_ref[:, 2:2 + H, 2:2 + W, 0:CS] = x
        acc = None
        for ky in range(3):
            for kx in range(3):
                y0 = 2 + (ky - 1) * d
                x0 = 2 + (kx - 1) * d
                t = zpad_ref[:, y0:y0 + H, x0:x0 + W, 0:CS]
                term = t * wd9[3 * ky + kx]
                acc = term if acc is None else acc + term
        return acc

    def pool3x3(x, pad_ref, org, combine):
        # 3x3 / stride 1 / pad 1 window reduction using a pre-filled-halo workspace.
        pad_ref[:, org:org + H, org:org + W, 0:C] = x
        acc = None
        for ky in range(3):
            for kx in range(3):
                t = pad_ref[:, org + ky - 1:org + ky - 1 + H,
                            org + kx - 1:org + kx - 1 + W, 0:C]
                acc = t if acc is None else combine(acc, t)
        return acc

    # ---- preprocessing: both StdConv(ReLU -> 1x1 conv -> BN) in one block-diagonal MXU pass
    xin = jnp.concatenate([relu(x0_ref[...]), relu(x1_ref[...])], axis=-1)
    y01 = affine_matmul(xin.reshape(NHW, C_pp + C_p), w_pre_ref, pre_scale_ref, pre_bias_ref)
    s0 = y01[:, 0:C].reshape(nb, H, W, C)
    s1 = y01[:, C:2 * C].reshape(nb, H, W, C)

    # ---- max_pool_3x3(s0) -> BN affine (pool slot 0); computed early to end s0's live range
    mp = (pool3x3(s0, mpad_ref, 1, jnp.maximum)
          * pool_scale_ref[0:1, :] + pool_bias_ref[0:1, :])

    # ---- stage-1 DilConvs, lane-packed (slots 0 & 3 on relu(s0) at d=1; slot 2 on relu(s1)
    #      at d=2), pointwise 1x1s batched into ONE 3C-wide block-diagonal MXU pass.
    r0 = relu(s0)
    dwa = dw3x3(jnp.concatenate([r0, r0], axis=-1), wd_s1a_ref[...], 1)      # (nb,H,W,2C)
    dwb = dw3x3(relu(s1), wd_s1b_ref[...], 2)                                # (nb,H,W,C)
    u = affine_matmul(jnp.concatenate([dwa, dwb], axis=-1).reshape(NHW, 3 * C),
                      w_s1_ref, s1_scale_ref, s1_bias_ref)                   # [u0|u3|u2]

    # ---- stage-2 of both sep_convs, lane-packed (slots 1 & 4), ONE 2C-wide MXU pass
    xb = relu(u[:, 0:2 * C]).reshape(nb, H, W, 2 * C)
    dwc = dw3x3(xb, wd_s2_ref[...], 1)
    v = affine_matmul(dwc.reshape(NHW, 2 * C), w_s2_ref, s2_scale_ref, s2_bias_ref)

    v0 = v[:, 0:C].reshape(nb, H, W, C)           # sep_conv_3x3(s0) -> node 2
    v3 = v[:, C:2 * C].reshape(nb, H, W, C)       # sep_conv_3x3(s0) -> node 5
    u2 = u[:, 2 * C:3 * C].reshape(nb, H, W, C)   # dil_conv_3x3(s1) -> node 3

    # ---- DAG node sums; each concat state stored into its output slice as soon as final
    st2 = v0 + s1                                  # node 2 = sep(s0) + skip(s1)
    o_ref[:, :, :, 0:C] = st2
    st3 = u2 + mp                                  # node 3 = dil(s1) + maxpool(s0)
    o_ref[:, :, :, C:2 * C] = st3
    ap = (pool3x3(st2, zpad_ref, 2, jnp.add) * inv_cnt_ref[...]) \
        * pool_scale_ref[1:2, :] + pool_bias_ref[1:2, :]
    o_ref[:, :, :, 2 * C:3 * C] = ap + st3         # node 4 = avgpool(s2) + skip(s3)
    o_ref[:, :, :, 3 * C:4 * C] = v3 + st2         # node 5 = sep(s0) + skip(s2)


# ----------------------------------------------------------------------------- wrapper

def _resident_spec(shape):
    nd = len(shape)
    return pl.BlockSpec(shape, lambda i, _nd=nd: (0,) * _nd)


def _avgpool_inv_count(H, W):
    # Reciprocal of the valid-tap count for 3x3/s1/p1 avg pooling, count_include_pad=False.
    ones = jnp.pad(jnp.ones((H, W), jnp.float32), ((1, 1), (1, 1)))
    cnt = sum(ones[ky:ky + H, kx:kx + W] for ky in range(3) for kx in range(3))
    return (1.0 / cnt).reshape(1, H, W, 1)


def _pack_kernel_params(p, C_pp, C_p, C):
    """Pack the canonical per-op parameters into the lane-packed / block-diagonal kernel
    operands (ordering [slot0 | slot3 | slot2] for stage 1, [slot1 | slot4] for stage 2)."""
    f32 = jnp.float32
    dw, pw = p['dw'], p['pw']
    dsc, dbi = p['dc_scale'], p['dc_bias']

    w_pre = jnp.zeros((C_pp + C_p, 2 * C), f32)
    w_pre = w_pre.at[:C_pp, :C].set(p['pre0_w']).at[C_pp:, C:].set(p['pre1_w'])
    pre_scale = jnp.concatenate([p['pre0_scale'], p['pre1_scale']]).reshape(1, 2 * C)
    pre_bias = jnp.concatenate([p['pre0_bias'], p['pre1_bias']]).reshape(1, 2 * C)

    wd_s1a = jnp.concatenate([dw[0], dw[3]], axis=-1).reshape(9, 2 * C)
    wd_s1b = dw[2].reshape(9, C)
    w_s1 = jnp.zeros((3 * C, 3 * C), f32)
    w_s1 = (w_s1.at[0:C, 0:C].set(pw[0])
                 .at[C:2 * C, C:2 * C].set(pw[3])
                 .at[2 * C:, 2 * C:].set(pw[2]))
    s1_scale = jnp.concatenate([dsc[0], dsc[3], dsc[2]]).reshape(1, 3 * C)
    s1_bias = jnp.concatenate([dbi[0], dbi[3], dbi[2]]).reshape(1, 3 * C)

    wd_s2 = jnp.concatenate([dw[1], dw[4]], axis=-1).reshape(9, 2 * C)
    w_s2 = jnp.zeros((2 * C, 2 * C), f32)
    w_s2 = w_s2.at[0:C, 0:C].set(pw[1]).at[C:, C:].set(pw[4])
    s2_scale = jnp.concatenate([dsc[1], dsc[4]]).reshape(1, 2 * C)
    s2_bias = jnp.concatenate([dbi[1], dbi[4]]).reshape(1, 2 * C)

    return dict(w_pre=w_pre, pre_scale=pre_scale, pre_bias=pre_bias,
                wd_s1a=wd_s1a, wd_s1b=wd_s1b, w_s1=w_s1, s1_scale=s1_scale, s1_bias=s1_bias,
                wd_s2=wd_s2, w_s2=w_s2, s2_scale=s2_scale, s2_bias=s2_bias)


def cell_forward(params, s0_nchw, s1_nchw, *, plan, concat_idx,
                 batch_block=None, vmem_limit_bytes=None):
    """AugmentCell forward.  Accepts / returns NCHW (PyTorch layout); the fused Pallas
    kernel works in NHWC (channels on the TPU lane axis) with a parallel batch grid."""
    if plan != _PACKED_PLAN or tuple(concat_idx) != (2, 3, 4, 5):
        # TODO(synk): generalize the lane-packing schedule beyond this genotype.
        raise NotImplementedError("fused kernel is specialized to the provided genotype")

    N, C_pp, H, W = s0_nchw.shape
    C_p = s1_nchw.shape[1]
    C = params['pw'].shape[-1]
    n_cat = len(concat_idx)

    nb = N if batch_block is None else batch_block   # pick the largest tile that fits VMEM
    assert N % nb == 0

    s0 = jnp.transpose(s0_nchw, (0, 2, 3, 1))
    s1 = jnp.transpose(s1_nchw, (0, 2, 3, 1))
    kp = _pack_kernel_params(params, C_pp, C_p, C)
    inv_cnt = jnp.broadcast_to(_avgpool_inv_count(H, W), (1, H, W, C))

    weight_args = (kp['w_pre'], kp['pre_scale'], kp['pre_bias'],
                   kp['wd_s1a'], kp['wd_s1b'], kp['w_s1'], kp['s1_scale'], kp['s1_bias'],
                   kp['wd_s2'], kp['w_s2'], kp['s2_scale'], kp['s2_bias'],
                   params['pool_scale'], params['pool_bias'], inv_cnt)

    in_specs = ([pl.BlockSpec((nb, H, W, C_pp), lambda i: (i, 0, 0, 0)),
                 pl.BlockSpec((nb, H, W, C_p), lambda i: (i, 0, 0, 0))]
                + [_resident_spec(a.shape) for a in weight_args])
    out_spec = pl.BlockSpec((nb, H, W, n_cat * C), lambda i: (i, 0, 0, 0))

    # Advisory cost estimate so XLA schedules the surrounding transposes around the call.
    nhw = N * H * W
    mm_flops = 2 * nhw * ((C_pp + C_p) * 2 * C + (3 * C) * (3 * C) + (2 * C) * (2 * C))
    dw_flops = 2 * nhw * 9 * (2 * C + C + 2 * C)
    pool_flops = 2 * nhw * 9 * C
    flops = mm_flops + dw_flops + pool_flops + 16 * nhw * C
    bytes_accessed = 4 * (int(s0.size) + int(s1.size)
                          + sum(int(a.size) for a in weight_args)
                          + nhw * n_cat * C)

    compiler_kwargs = dict(dimension_semantics=("parallel",))
    if vmem_limit_bytes is not None:
        # Production sizes (esp. v7x 64 MiB / v6e 32 MiB scoped default) should set this
        # and shrink batch_block so double-buffered blocks fit the budget.
        compiler_kwargs["vmem_limit_bytes"] = vmem_limit_bytes

    out_nhwc = pl.pallas_call(
        functools.partial(cell_kernel, C=C),
        out_shape=jax.ShapeDtypeStruct((N, H, W, n_cat * C), jnp.float32),
        grid=(N // nb,),
        in_specs=in_specs,
        out_specs=out_spec,
        scratch_shapes=[pltpu.VMEM((nb, H + 4, W + 4, 2 * C), jnp.float32),   # zero-halo ws
                        pltpu.VMEM((nb, H + 2, W + 2, C), jnp.float32)],      # -inf-halo ws
        compiler_params=pltpu.CompilerParams(**compiler_kwargs),
        cost_estimate=pl.CostEstimate(flops=flops, transcendentals=0,
                                      bytes_accessed=bytes_accessed),
    )(s0, s1, *weight_args)

    # nn.Dropout(0.3): eval-mode identity (see TODO at top of file)
    return jnp.transpose(out_nhwc, (0, 3, 1, 2))     # back to NCHW


# ----------------------------------------------------------------------------- parameter init

def _folded_bn(key, shape):
    # eval-mode BatchNorm with running_mean=0, running_var=1 folded into scale/bias
    kg, kb = jax.random.split(key)
    gamma = 1.0 + 0.1 * jax.random.normal(kg, shape, jnp.float32)
    beta = 0.1 * jax.random.normal(kb, shape, jnp.float32)
    return gamma / jnp.sqrt(1.0 + 1e-5), beta


def init_cell_params(key, genotype, C_pp, C_p, C):
    plan, n_dc, n_pool = build_plan(genotype)
    k = jax.random.split(key, 8)
    pre0_w = 0.1 * jax.random.normal(k[0], (C_pp, C), jnp.float32)
    pre1_w = 0.1 * jax.random.normal(k[1], (C_p, C), jnp.float32)
    pre0_scale, pre0_bias = _folded_bn(k[2], (C,))
    pre1_scale, pre1_bias = _folded_bn(k[3], (C,))
    dw = 0.1 * jax.random.normal(k[4], (n_dc, 3, 3, C), jnp.float32)    # depthwise
    pw = 0.1 * jax.random.normal(k[5], (n_dc, C, C), jnp.float32)       # pointwise
    dc_scale, dc_bias = _folded_bn(k[6], (n_dc, C))
    pool_scale, pool_bias = _folded_bn(k[7], (n_pool, C))
    params = dict(pre0_w=pre0_w, pre0_scale=pre0_scale, pre0_bias=pre0_bias,
                  pre1_w=pre1_w, pre1_scale=pre1_scale, pre1_bias=pre1_bias,
                  dw=dw, pw=pw, dc_scale=dc_scale, dc_bias=dc_bias,
                  pool_scale=pool_scale, pool_bias=pool_bias)
    return params, plan


# ----------------------------------------------------------------------------- pure-JAX reference

def cell_reference(params, s0_nchw, s1_nchw, *, plan, concat_idx):
    """Generic (per-edge) non-Pallas reference with identical math in f32."""
    f32 = jnp.float32
    HIGH = lax.Precision.HIGHEST
    N, C_pp, H, W = s0_nchw.shape
    C = params['pw'].shape[-1]
    NHW = N * H * W
    inv_cnt = _avgpool_inv_count(H, W)

    def relu(t):
        return jnp.maximum(t, 0.0)

    def conv1x1_bn(x, w, scale, bias):
        y = jnp.dot(x.reshape(NHW, -1), w, preferred_element_type=f32, precision=HIGH)
        return (y * scale + bias).reshape(N, H, W, -1)

    def dil_conv(x, slot, d):
        xp = jnp.pad(relu(x), ((0, 0), (d, d), (d, d), (0, 0)))
        acc = jnp.zeros((N, H, W, C), f32)
        for ky in range(3):
            for kx in range(3):
                acc = acc + xp[:, ky * d:ky * d + H, kx * d:kx * d + W, :] \
                    * params['dw'][slot, ky, kx]
        return conv1x1_bn(acc, params['pw'][slot],
                          params['dc_scale'][slot], params['dc_bias'][slot])

    def max_pool(x, slot):
        xp = jnp.pad(x, ((0, 0), (1, 1), (1, 1), (0, 0)), constant_values=-jnp.inf)
        acc = None
        for ky in range(3):
            for kx in range(3):
                t = xp[:, ky:ky + H, kx:kx + W, :]
                acc = t if acc is None else jnp.maximum(acc, t)
        return acc * params['pool_scale'][slot] + params['pool_bias'][slot]

    def avg_pool(x, slot):
        xp = jnp.pad(x, ((0, 0), (1, 1), (1, 1), (0, 0)))
        acc = sum(xp[:, ky:ky + H, kx:kx + W, :] for ky in range(3) for kx in range(3))
        return (acc * inv_cnt) * params['pool_scale'][slot] + params['pool_bias'][slot]

    x0 = jnp.transpose(s0_nchw, (0, 2, 3, 1))
    x1 = jnp.transpose(s1_nchw, (0, 2, 3, 1))
    states = [conv1x1_bn(relu(x0), params['pre0_w'], params['pre0_scale'], params['pre0_bias']),
              conv1x1_bn(relu(x1), params['pre1_w'], params['pre1_scale'], params['pre1_bias'])]

    for node in plan:
        outs = []
        for kind, s_idx, slot in node:
            x = states[s_idx]
            if kind == 'skip':
                outs.append(x)                     # DropPath_(p=0) == identity
            elif kind == 'max':
                outs.append(max_pool(x, slot))
            elif kind == 'avg':
                outs.append(avg_pool(x, slot))
            elif kind == 'dil':
                outs.append(dil_conv(x, slot, 2))  # dil_conv_3x3: dilation 2, pad 2
            else:                                  # 'sep': two chained DilConv(dil=1)
                outs.append(dil_conv(dil_conv(x, slot, 1), slot + 1, 1))
        s_cur = outs[0]
        for extra in outs[1:]:
            s_cur = s_cur + extra
        states.append(s_cur)

    out = jnp.concatenate([states[i] for i in concat_idx], axis=-1)
    return jnp.transpose(out, (0, 3, 1, 2))


# ----------------------------------------------------------------------------- main

if __name__ == "__main__":
    key = jax.random.PRNGKey(0)
    N, C_pp, C_p, C, H, W = 2, 4, 4, 8, 8, 8

    kparam, k0, k1 = jax.random.split(key, 3)
    params, plan = init_cell_params(kparam, GENOTYPE, C_pp, C_p, C)
    concat_idx = tuple(GENOTYPE.normal_concat)

    s0 = jax.random.normal(k0, (N, C_pp, H, W), jnp.float32)   # NCHW, like PyTorch
    s1 = jax.random.normal(k1, (N, C_p, H, W), jnp.float32)

    # batch_block=1 exercises the parallel batch grid; production picks the largest
    # block that fits the per-chip VMEM budget (v7x 64 MiB / v6e 32 MiB scoped default).
    fwd = jax.jit(functools.partial(cell_forward, plan=plan, concat_idx=concat_idx,
                                    batch_block=1))
    out = jax.block_until_ready(fwd(params, s0, s1))

    expected = (N, len(concat_idx) * C, H, W)
    assert out.shape == expected, (out.shape, expected)
    assert bool(jnp.all(jnp.isfinite(out)))

    # validate the fused/packed kernel against an independent pure-JAX per-edge reference
    # (f32 everywhere; residual tolerance only covers Mosaic-vs-XLA matmul accumulation)
    ref_fn = jax.jit(functools.partial(cell_reference, plan=plan, concat_idx=concat_idx))
    ref = jax.block_until_ready(ref_fn(params, s0, s1))
    assert bool(jnp.allclose(out, ref, rtol=5e-3, atol=5e-3)), \
        float(jnp.max(jnp.abs(out - ref)))

    print("KERNEL_OK")
</pallas_src>

<mosaic_0001>
module attributes {stable_mosaic.version = 11 : i64} {
  func.func @cell_kernel(%arg0: i32, %arg1: memref<1x8x8x4xf32, #tpu.memory_space<vmem>>, %arg2: memref<1x8x8x4xf32, #tpu.memory_space<vmem>>, %arg3: memref<8x16xf32, #tpu.memory_space<vmem>>, %arg4: memref<1x16xf32, #tpu.memory_space<vmem>>, %arg5: memref<1x16xf32, #tpu.memory_space<vmem>>, %arg6: memref<9x16xf32, #tpu.memory_space<vmem>>, %arg7: memref<9x8xf32, #tpu.memory_space<vmem>>, %arg8: memref<24x24xf32, #tpu.memory_space<vmem>>, %arg9: memref<1x24xf32, #tpu.memory_space<vmem>>, %arg10: memref<1x24xf32, #tpu.memory_space<vmem>>, %arg11: memref<9x16xf32, #tpu.memory_space<vmem>>, %arg12: memref<16x16xf32, #tpu.memory_space<vmem>>, %arg13: memref<1x16xf32, #tpu.memory_space<vmem>>, %arg14: memref<1x16xf32, #tpu.memory_space<vmem>>, %arg15: memref<2x8xf32, #tpu.memory_space<vmem>>, %arg16: memref<2x8xf32, #tpu.memory_space<vmem>>, %arg17: memref<1x8x8x8xf32, #tpu.memory_space<vmem>>, %arg18: memref<1x8x8x32xf32, #tpu.memory_space<vmem>>, %arg19: memref<1x12x12x16xf32, #tpu.memory_space<vmem>>, %arg20: memref<1x10x10x8xf32, #tpu.memory_space<vmem>>) attributes {dimension_semantics = [#tpu.dimension_semantics<parallel>], iteration_bounds = array<i64: 2>, scalar_prefetch = 0 : i64, scratch_operands = 2 : i64, tpu.core_type = #tpu.core_type<tc>, window_params = [{transform_indices = @transform_0, window_bounds = array<i64: 1, 8, 8, 4>}, {transform_indices = @transform_1, window_bounds = array<i64: 1, 8, 8, 4>}, {pipeline_mode = #tpu.pipeline_mode<synchronous>, transform_indices = @transform_2, window_bounds = array<i64: 8, 16>}, {pipeline_mode = #tpu.pipeline_mode<synchronous>, transform_indices = @transform_3, window_bounds = array<i64: 1, 16>}, {pipeline_mode = #tpu.pipeline_mode<synchronous>, transform_indices = @transform_4, window_bounds = array<i64: 1, 16>}, {pipeline_mode = #tpu.pipeline_mode<synchronous>, transform_indices = @transform_5, window_bounds = array<i64: 9, 16>}, {pipeline_mode = #tpu.pipeline_mode<synchronous>, transform_indices = @transform_6, window_bounds = array<i64: 9, 8>}, {pipeline_mode = #tpu.pipeline_mode<synchronous>, transform_indices = @transform_7, window_bounds = array<i64: 24, 24>}, {pipeline_mode = #tpu.pipeline_mode<synchronous>, transform_indices = @transform_8, window_bounds = array<i64: 1, 24>}, {pipeline_mode = #tpu.pipeline_mode<synchronous>, transform_indices = @transform_9, window_bounds = array<i64: 1, 24>}, {pipeline_mode = #tpu.pipeline_mode<synchronous>, transform_indices = @transform_10, window_bounds = array<i64: 9, 16>}, {pipeline_mode = #tpu.pipeline_mode<synchronous>, transform_indices = @transform_11, window_bounds = array<i64: 16, 16>}, {pipeline_mode = #tpu.pipeline_mode<synchronous>, transform_indices = @transform_12, window_bounds = array<i64: 1, 16>}, {pipeline_mode = #tpu.pipeline_mode<synchronous>, transform_indices = @transform_13, window_bounds = array<i64: 1, 16>}, {pipeline_mode = #tpu.pipeline_mode<synchronous>, transform_indices = @transform_14, window_bounds = array<i64: 2, 8>}, {pipeline_mode = #tpu.pipeline_mode<synchronous>, transform_indices = @transform_15, window_bounds = array<i64: 2, 8>}, {pipeline_mode = #tpu.pipeline_mode<synchronous>, transform_indices = @transform_16, window_bounds = array<i64: 1, 8, 8, 8>}, {transform_indices = @transform_17, window_bounds = array<i64: 1, 8, 8, 32>}]} {
    %cst = arith.constant 0.000000e+00 : f32
    %0 = vector.broadcast %cst : f32 to vector<1x2x12x16xf32>
    %c0 = arith.constant 0 : index
    %c0_0 = arith.constant 0 : index
    %c0_1 = arith.constant 0 : index
    %c0_2 = arith.constant 0 : index
    %1 = vector.load %arg19[%c0, %c0_0, %c0_1, %c0_2] : memref<1x12x12x16xf32, #tpu.memory_space<vmem>>, vector<1x2x12x16xf32>
    tpu.vector_store %arg19[%c0, %c0_0, %c0_1, %c0_2], %0 {strides = array<i32>} : memref<1x12x12x16xf32, #tpu.memory_space<vmem>>, vector<1x2x12x16xf32>,
    %cst_3 = arith.constant 0.000000e+00 : f32
    %2 = vector.broadcast %cst_3 : f32 to vector<1x2x12x16xf32>
    %c0_4 = arith.constant 0 : index
    %c10 = arith.constant 10 : index
    %c0_5 = arith.constant 0 : index
    %c0_6 = arith.constant 0 : index
    %3 = vector.load %arg19[%c0_4, %c10, %c0_5, %c0_6] : memref<1x12x12x16xf32, #tpu.memory_space<vmem>>, vector<1x2x12x16xf32>
    tpu.vector_store %arg19[%c0_4, %c10, %c0_5, %c0_6], %2 {strides = array<i32>} : memref<1x12x12x16xf32, #tpu.memory_space<vmem>>, vector<1x2x12x16xf32>,
    %cst_7 = arith.constant 0.000000e+00 : f32
    %4 = vector.broadcast %cst_7 : f32 to vector<1x8x2x16xf32>
    %c0_8 = arith.constant 0 : index
    %c2 = arith.constant 2 : index
    %c0_9 = arith.constant 0 : index
    %c0_10 = arith.constant 0 : index
    %5 = vector.load %arg19[%c0_8, %c2, %c0_9, %c0_10] : memref<1x12x12x16xf32, #tpu.memory_space<vmem>>, vector<1x8x2x16xf32>
    tpu.vector_store %arg19[%c0_8, %c2, %c0_9, %c0_10], %4 {strides = array<i32>} : memref<1x12x12x16xf32, #tpu.memory_space<vmem>>, vector<1x8x2x16xf32>,
    %cst_11 = arith.constant 0.000000e+00 : f32
    %6 = vector.broadcast %cst_11 : f32 to vector<1x8x2x16xf32>
    %c0_12 = arith.constant 0 : index
    %c2_13 = arith.constant 2 : index
    %c10_14 = arith.constant 10 : index
    %c0_15 = arith.constant 0 : index
    %7 = vector.load %arg19[%c0_12, %c2_13, %c10_14, %c0_15] : memref<1x12x12x16xf32, #tpu.memory_space<vmem>>, vector<1x8x2x16xf32>
    tpu.vector_store %arg19[%c0_12, %c2_13, %c10_14, %c0_15], %6 {strides = array<i32>} : memref<1x12x12x16xf32, #tpu.memory_space<vmem>>, vector<1x8x2x16xf32>,
    %cst_16 = arith.constant 0xFF800000 : f32
    %8 = vector.broadcast %cst_16 : f32 to vector<1x1x10x8xf32>
    %c0_17 = arith.constant 0 : index
    %c0_18 = arith.constant 0 : index
    %c0_19 = arith.constant 0 : index
    %c0_20 = arith.constant 0 : index
    %9 = vector.load %arg20[%c0_17, %c0_18, %c0_19, %c0_20] : memref<1x10x10x8xf32, #tpu.memory_space<vmem>>, vector<1x1x10x8xf32>
    tpu.vector_store %arg20[%c0_17, %c0_18, %c0_19, %c0_20], %8 {strides = array<i32>} : memref<1x10x10x8xf32, #tpu.memory_space<vmem>>, vector<1x1x10x8xf32>,
    %cst_21 = arith.constant 0xFF800000 : f32
    %10 = vector.broadcast %cst_21 : f32 to vector<1x1x10x8xf32>
    %c0_22 = arith.constant 0 : index
    %c9 = arith.constant 9 : index
    %c0_23 = arith.constant 0 : index
    %c0_24 = arith.constant 0 : index
    %11 = vector.load %arg20[%c0_22, %c9, %c0_23, %c0_24] : memref<1x10x10x8xf32, #tpu.memory_space<vmem>>, vector<1x1x10x8xf32>
    tpu.vector_store %arg20[%c0_22, %c9, %c0_23, %c0_24], %10 {strides = array<i32>} : memref<1x10x10x8xf32, #tpu.memory_space<vmem>>, vector<1x1x10x8xf32>,
    %cst_25 = arith.constant 0xFF800000 : f32
    %12 = vector.broadcast %cst_25 : f32 to vector<1x8x1x8xf32>
    %c0_26 = arith.constant 0 : index
    %c1 = arith.constant 1 : index
    %c0_27 = arith.constant 0 : index
    %c0_28 = arith.constant 0 : index
    %13 = vector.load %arg20[%c0_26, %c1, %c0_27, %c0_28] : memref<1x10x10x8xf32, #tpu.memory_space<vmem>>, vector<1x8x1x8xf32>
    tpu.vector_store %arg20[%c0_26, %c1, %c0_27, %c0_28], %12 {strides = array<i32>} : memref<1x10x10x8xf32, #tpu.memory_space<vmem>>, vector<1x8x1x8xf32>,
    %cst_29 = arith.constant 0xFF800000 : f32
    %14 = vector.broadcast %cst_29 : f32 to vector<1x8x1x8xf32>
    %c0_30 = arith.constant 0 : index
    %c1_31 = arith.constant 1 : index
    %c9_32 = arith.constant 9 : index
    %c0_33 = arith.constant 0 : index
    %15 = vector.load %arg20[%c0_30, %c1_31, %c9_32, %c0_33] : memref<1x10x10x8xf32, #tpu.memory_space<vmem>>, vector<1x8x1x8xf32>
    tpu.vector_store %arg20[%c0_30, %c1_31, %c9_32, %c0_33], %14 {strides = array<i32>} : memref<1x10x10x8xf32, #tpu.memory_space<vmem>>, vector<1x8x1x8xf32>,
    %c0_34 = arith.constant 0 : index
    %c0_35 = arith.constant 0 : index
    %c0_36 = arith.constant 0 : index
    %c0_37 = arith.constant 0 : index
    %16 = vector.load %arg1[%c0_34, %c0_35, %c0_36, %c0_37] : memref<1x8x8x4xf32, #tpu.memory_space<vmem>>, vector<1x8x8x4xf32>
    %cst_38 = arith.constant 0.000000e+00 : f32
    %17 = vector.broadcast %cst_38 : f32 to vector<1x8x8x4xf32>
    %18 = arith.maximumf %16, %17 : vector<1x8x8x4xf32>
    %c0_39 = arith.constant 0 : index
    %c0_40 = arith.constant 0 : index
    %c0_41 = arith.constant 0 : index
    %c0_42 = arith.constant 0 : index
    %19 = vector.load %arg2[%c0_39, %c0_40, %c0_41, %c0_42] : memref<1x8x8x4xf32, #tpu.memory_space<vmem>>, vector<1x8x8x4xf32>
    %cst_43 = arith.constant 0.000000e+00 : f32
    %20 = vector.broadcast %cst_43 : f32 to vector<1x8x8x4xf32>
    %21 = arith.maximumf %19, %20 : vector<1x8x8x4xf32>
    %22 = tpu.concatenate %18, %21 in 3 : vector<1x8x8x4xf32>, vector<1x8x8x4xf32> -> vector<1x8x8x8xf32>
    %23 = vector.shape_cast %22 : vector<1x8x8x8xf32> to vector<64x8xf32>
    %c0_44 = arith.constant 0 : index
    %c0_45 = arith.constant 0 : index
    %24 = vector.load %arg3[%c0_44, %c0_45] : memref<8x16xf32, #tpu.memory_space<vmem>>, vector<8x16xf32>
    %cst_46 = arith.constant dense<0.000000e+00> : vector<64x16xf32>
    %25 = tpu.matmul %23, %24, %cst_46 {dimension_numbers = #tpu.dot_dimension_numbers<[1], [0], [0], [1], [0, 0, 1, 1], [], []>} : vector<64x8xf32>, vector<8x16xf32>, vector<64x16xf32> -> vector<64x16xf32>
    %c0_47 = arith.constant 0 : index
    %c0_48 = arith.constant 0 : index
    %26 = vector.load %arg4[%c0_47, %c0_48] : memref<1x16xf32, #tpu.memory_space<vmem>>, vector<1x16xf32>
    %27 = vector.broadcast %26 : vector<1x16xf32> to vector<64x16xf32>
    %28 = arith.mulf %25, %27 : vector<64x16xf32>
    %c0_49 = arith.constant 0 : index
    %c0_50 = arith.constant 0 : index
    %29 = vector.load %arg5[%c0_49, %c0_50] : memref<1x16xf32, #tpu.memory_space<vmem>>, vector<1x16xf32>
    %30 = vector.broadcast %29 : vector<1x16xf32> to vector<64x16xf32>
    %31 = arith.addf %28, %30 : vector<64x16xf32>
    %32 = vector.extract_strided_slice %31 {offsets = [0, 0], sizes = [64, 8], strides = [1, 1]} : vector<64x16xf32> to vector<64x8xf32>
    %33 = vector.shape_cast %32 : vector<64x8xf32> to vector<1x8x8x8xf32>
    %34 = vector.extract_strided_slice %31 {offsets = [0, 8], sizes = [64, 8], strides = [1, 1]} : vector<64x16xf32> to vector<64x8xf32>
    %35 = vector.shape_cast %34 : vector<64x8xf32> to vector<1x8x8x8xf32>
    %c0_51 = arith.constant 0 : index
    %c1_52 = arith.constant 1 : index
    %c1_53 = arith.constant 1 : index
    %c0_54 = arith.constant 0 : index
    %36 = vector.load %arg20[%c0_51, %c1_52, %c1_53, %c0_54] : memref<1x10x10x8xf32, #tpu.memory_space<vmem>>, vector<1x8x8x8xf32>
    tpu.vector_store %arg20[%c0_51, %c1_52, %c1_53, %c0_54], %33 {strides = array<i32>} : memref<1x10x10x8xf32, #tpu.memory_space<vmem>>, vector<1x8x8x8xf32>,
    %c0_55 = arith.constant 0 : index
    %c0_56 = arith.constant 0 : index
    %c0_57 = arith.constant 0 : index
    %c0_58 = arith.constant 0 : index
    %37 = vector.load %arg20[%c0_55, %c0_56, %c0_57, %c0_58] : memref<1x10x10x8xf32, #tpu.memory_space<vmem>>, vector<1x8x8x8xf32>
    %c0_59 = arith.constant 0 : index
    %c0_60 = arith.constant 0 : index
    %c1_61 = arith.constant 1 : index
    %c0_62 = arith.constant 0 : index
    %38 = vector.load %arg20[%c0_59, %c0_60, %c1_61, %c0_62] : memref<1x10x10x8xf32, #tpu.memory_space<vmem>>, vector<1x8x8x8xf32>
    %39 = arith.maximumf %37, %38 : vector<1x8x8x8xf32>
    %c0_63 = arith.constant 0 : index
    %c0_64 = arith.constant 0 : index
    %c2_65 = arith.constant 2 : index
    %c0_66 = arith.constant 0 : index
    %40 = vector.load %arg20[%c0_63, %c0_64, %c2_65, %c0_66] : memref<1x10x10x8xf32, #tpu.memory_space<vmem>>, vector<1x8x8x8xf32>
    %41 = arith.maximumf %39, %40 : vector<1x8x8x8xf32>
    %c0_67 = arith.constant 0 : index
    %c1_68 = arith.constant 1 : index
    %c0_69 = arith.constant 0 : index
    %c0_70 = arith.constant 0 : index
    %42 = vector.load %arg20[%c0_67, %c1_68, %c0_69, %c0_70] : memref<1x10x10x8xf32, #tpu.memory_space<vmem>>, vector<1x8x8x8xf32>
    %43 = arith.maximumf %41, %42 : vector<1x8x8x8xf32>
    %c0_71 = arith.constant 0 : index
    %c1_72 = arith.constant 1 : index
    %c1_73 = arith.constant 1 : index
    %c0_74 = arith.constant 0 : index
    %44 = vector.load %arg20[%c0_71, %c1_72, %c1_73, %c0_74] : memref<1x10x10x8xf32, #tpu.memory_space<vmem>>, vector<1x8x8x8xf32>
    %45 = arith.maximumf %43, %44 : vector<1x8x8x8xf32>
    %c0_75 = arith.constant 0 : index
    %c1_76 = arith.constant 1 : index
    %c2_77 = arith.constant 2 : index
    %c0_78 = arith.constant 0 : index
    %46 = vector.load %arg20[%c0_75, %c1_76, %c2_77, %c0_78] : memref<1x10x10x8xf32, #tpu.memory_space<vmem>>, vector<1x8x8x8xf32>
    %47 = arith.maximumf %45, %46 : vector<1x8x8x8xf32>
    %c0_79 = arith.constant 0 : index
    %c2_80 = arith.constant 2 : index
    %c0_81 = arith.constant 0 : index
    %c0_82 = arith.constant 0 : index
    %48 = vector.load %arg20[%c0_79, %c2_80, %c0_81, %c0_82] : memref<1x10x10x8xf32, #tpu.memory_space<vmem>>, vector<1x8x8x8xf32>
    %49 = arith.maximumf %47, %48 : vector<1x8x8x8xf32>
    %c0_83 = arith.constant 0 : index
    %c2_84 = arith.constant 2 : index
    %c1_85 = arith.constant 1 : index
    %c0_86 = arith.constant 0 : index
    %50 = vector.load %arg20[%c0_83, %c2_84, %c1_85, %c0_86] : memref<1x10x10x8xf32, #tpu.memory_space<vmem>>, vector<1x8x8x8xf32>
    %51 = arith.maximumf %49, %50 : vector<1x8x8x8xf32>
    %c0_87 = arith.constant 0 : index
    %c2_88 = arith.constant 2 : index
    %c2_89 = arith.constant 2 : index
    %c0_90 = arith.constant 0 : index
    %52 = vector.load %arg20[%c0_87, %c2_88, %c2_89, %c0_90] : memref<1x10x10x8xf32, #tpu.memory_space<vmem>>, vector<1x8x8x8xf32>
    %53 = arith.maximumf %51, %52 : vector<1x8x8x8xf32>
    %c0_91 = arith.constant 0 : index
    %c0_92 = arith.constant 0 : index
    %54 = vector.load %arg15[%c0_91, %c0_92] : memref<2x8xf32, #tpu.memory_space<vmem>>, vector<1x8xf32>
    %55 = vector.shape_cast %54 : vector<1x8xf32> to vector<1x1x1x8xf32>
    %56 = vector.broadcast %55 : vector<1x1x1x8xf32> to vector<1x8x8x8xf32>
    %57 = arith.mulf %53, %56 : vector<1x8x8x8xf32>
    %c0_93 = arith.constant 0 : index
    %c0_94 = arith.constant 0 : index
    %58 = vector.load %arg16[%c0_93, %c0_94] : memref<2x8xf32, #tpu.memory_space<vmem>>, vector<1x8xf32>
    %59 = vector.shape_cast %58 : vector<1x8xf32> to vector<1x1x1x8xf32>
    %60 = vector.broadcast %59 : vector<1x1x1x8xf32> to vector<1x8x8x8xf32>
    %61 = arith.addf %57, %60 : vector<1x8x8x8xf32>
    %cst_95 = arith.constant 0.000000e+00 : f32
    %62 = vector.broadcast %cst_95 : f32 to vector<1x8x8x8xf32>
    %63 = arith.maximumf %33, %62 : vector<1x8x8x8xf32>
    %64 = tpu.concatenate %63, %63 in 3 : vector<1x8x8x8xf32>, vector<1x8x8x8xf32> -> vector<1x8x8x16xf32>
    %c0_96 = arith.constant 0 : index
    %c0_97 = arith.constant 0 : index
    %65 = vector.load %arg6[%c0_96, %c0_97] : memref<9x16xf32, #tpu.memory_space<vmem>>, vector<9x16xf32>
    %c0_98 = arith.constant 0 : index
    %c2_99 = arith.constant 2 : index
    %c2_100 = arith.constant 2 : index
    %c0_101 = arith.constant 0 : index
    %66 = vector.load %arg19[%c0_98, %c2_99, %c2_100, %c0_101] : memref<1x12x12x16xf32, #tpu.memory_space<vmem>>, vector<1x8x8x16xf32>
    tpu.vector_store %arg19[%c0_98, %c2_99, %c2_100, %c0_101], %64 {strides = array<i32>} : memref<1x12x12x16xf32, #tpu.memory_space<vmem>>, vector<1x8x8x16xf32>,
    %c0_102 = arith.constant 0 : index
    %c1_103 = arith.constant 1 : index
    %c1_104 = arith.constant 1 : index
    %c0_105 = arith.constant 0 : index
    %67 = vector.load %arg19[%c0_102, %c1_103, %c1_104, %c0_105] : memref<1x12x12x16xf32, #tpu.memory_space<vmem>>, vector<1x8x8x16xf32>
    %68 = vector.extract_strided_slice %65 {offsets = [0, 0], sizes = [1, 16], strides = [1, 1]} : vector<9x16xf32> to vector<1x16xf32>
    %69 = vector.shape_cast %68 : vector<1x16xf32> to vector<16xf32>
    %70 = vector.shape_cast %69 : vector<16xf32> to vector<1x1x1x16xf32>
    %71 = vector.broadcast %70 : vector<1x1x1x16xf32> to vector<1x8x8x16xf32>
    %72 = arith.mulf %67, %71 : vector<1x8x8x16xf32>
    %c0_106 = arith.constant 0 : index
    %c1_107 = arith.constant 1 : index
    %c2_108 = arith.constant 2 : index
    %c0_109 = arith.constant 0 : index
    %73 = vector.load %arg19[%c0_106, %c1_107, %c2_108, %c0_109] : memref<1x12x12x16xf32, #tpu.memory_space<vmem>>, vector<1x8x8x16xf32>
    %74 = vector.extract_strided_slice %65 {offsets = [1, 0], sizes = [1, 16], strides = [1, 1]} : vector<9x16xf32> to vector<1x16xf32>
    %75 = vector.shape_cast %74 : vector<1x16xf32> to vector<16xf32>
    %76 = vector.shape_cast %75 : vector<16xf32> to vector<1x1x1x16xf32>
    %77 = vector.broadcast %76 : vector<1x1x1x16xf32> to vector<1x8x8x16xf32>
    %78 = arith.mulf %73, %77 : vector<1x8x8x16xf32>
    %79 = arith.addf %72, %78 : vector<1x8x8x16xf32>
    %c0_110 = arith.constant 0 : index
    %c1_111 = arith.constant 1 : index
    %c3 = arith.constant 3 : index
    %c0_112 = arith.constant 0 : index
    %80 = vector.load %arg19[%c0_110, %c1_111, %c3, %c0_112] : memref<1x12x12x16xf32, #tpu.memory_space<vmem>>, vector<1x8x8x16xf32>
    %81 = vector.extract_strided_slice %65 {offsets = [2, 0], sizes = [1, 16], strides = [1, 1]} : vector<9x16xf32> to vector<1x16xf32>
    %82 = vector.shape_cast %81 : vector<1x16xf32> to vector<16xf32>
    %83 = vector.shape_cast %82 : vector<16xf32> to vector<1x1x1x16xf32>
    %84 = vector.broadcast %83 : vector<1x1x1x16xf32> to vector<1x8x8x16xf32>
    %85 = arith.mulf %80, %84 : vector<1x8x8x16xf32>
    %86 = arith.addf %79, %85 : vector<1x8x8x16xf32>
    %c0_113 = arith.constant 0 : index
    %c2_114 = arith.constant 2 : index
    %c1_115 = arith.constant 1 : index
    %c0_116 = arith.constant 0 : index
    %87 = vector.load %arg19[%c0_113, %c2_114, %c1_115, %c0_116] : memref<1x12x12x16xf32, #tpu.memory_space<vmem>>, vector<1x8x8x16xf32>
    %88 = vector.extract_strided_slice %65 {offsets = [3, 0], sizes = [1, 16], strides = [1, 1]} : vector<9x16xf32> to vector<1x16xf32>
    %89 = vector.shape_cast %88 : vector<1x16xf32> to vector<16xf32>
    %90 = vector.shape_cast %89 : vector<16xf32> to vector<1x1x1x16xf32>
    %91 = vector.broadcast %90 : vector<1x1x1x16xf32> to vector<1x8x8x16xf32>
    %92 = arith.mulf %87, %91 : vector<1x8x8x16xf32>
    %93 = arith.addf %86, %92 : vector<1x8x8x16xf32>
    %c0_117 = arith.constant 0 : index
    %c2_118 = arith.constant 2 : index
    %c2_119 = arith.constant 2 : index
    %c0_120 = arith.constant 0 : index
    %94 = vector.load %arg19[%c0_117, %c2_118, %c2_119, %c0_120] : memref<1x12x12x16xf32, #tpu.memory_space<vmem>>, vector<1x8x8x16xf32>
    %95 = vector.extract_strided_slice %65 {offsets = [4, 0], sizes = [1, 16], strides = [1, 1]} : vector<9x16xf32> to vector<1x16xf32>
    %96 = vector.shape_cast %95 : vector<1x16xf32> to vector<16xf32>
    %97 = vector.shape_cast %96 : vector<16xf32> to vector<1x1x1x16xf32>
    %98 = vector.broadcast %97 : vector<1x1x1x16xf32> to vector<1x8x8x16xf32>
    %99 = arith.mulf %94, %98 : vector<1x8x8x16xf32>
    %100 = arith.addf %93, %99 : vector<1x8x8x16xf32>
    %c0_121 = arith.constant 0 : index
    %c2_122 = arith.constant 2 : index
    %c3_123 = arith.constant 3 : index
    %c0_124 = arith.constant 0 : index
    %101 = vector.load %arg19[%c0_121, %c2_122, %c3_123, %c0_124] : memref<1x12x12x16xf32, #tpu.memory_space<vmem>>, vector<1x8x8x16xf32>
    %102 = vector.extract_strided_slice %65 {offsets = [5, 0], sizes = [1, 16], strides = [1, 1]} : vector<9x16xf32> to vector<1x16xf32>
    %103 = vector.shape_cast %102 : vector<1x16xf32> to vector<16xf32>
    %104 = vector.shape_cast %103 : vector<16xf32> to vector<1x1x1x16xf32>
    %105 = vector.broadcast %104 : vector<1x1x1x16xf32> to vector<1x8x8x16xf32>
    %106 = arith.mulf %101, %105 : vector<1x8x8x16xf32>
    %107 = arith.addf %100, %106 : vector<1x8x8x16xf32>
    %c0_125 = arith.constant 0 : index
    %c3_126 = arith.constant 3 : index
    %c1_127 = arith.constant 1 : index
    %c0_128 = arith.constant 0 : index
    %108 = vector.load %arg19[%c0_125, %c3_126, %c1_127, %c0_128] : memref<1x12x12x16xf32, #tpu.memory_space<vmem>>, vector<1x8x8x16xf32>
    %109 = vector.extract_strided_slice %65 {offsets = [6, 0], sizes = [1, 16], strides = [1, 1]} : vector<9x16xf32> to vector<1x16xf32>
    %110 = vector.shape_cast %109 : vector<1x16xf32> to vector<16xf32>
    %111 = vector.shape_cast %110 : vector<16xf32> to vector<1x1x1x16xf32>
    %112 = vector.broadcast %111 : vector<1x1x1x16xf32> to vector<1x8x8x16xf32>
    %113 = arith.mulf %108, %112 : vector<1x8x8x16xf32>
    %114 = arith.addf %107, %113 : vector<1x8x8x16xf32>
    %c0_129 = arith.constant 0 : index
    %c3_130 = arith.constant 3 : index
    %c2_131 = arith.constant 2 : index
    %c0_132 = arith.constant 0 : index
    %115 = vector.load %arg19[%c0_129, %c3_130, %c2_131, %c0_132] : memref<1x12x12x16xf32, #tpu.memory_space<vmem>>, vector<1x8x8x16xf32>
    %116 = vector.extract_strided_slice %65 {offsets = [7, 0], sizes = [1, 16], strides = [1, 1]} : vector<9x16xf32> to vector<1x16xf32>
    %117 = vector.shape_cast %116 : vector<1x16xf32> to vector<16xf32>
    %118 = vector.shape_cast %117 : vector<16xf32> to vector<1x1x1x16xf32>
    %119 = vector.broadcast %118 : vector<1x1x1x16xf32> to vector<1x8x8x16xf32>
    %120 = arith.mulf %115, %119 : vector<1x8x8x16xf32>
    %121 = arith.addf %114, %120 : vector<1x8x8x16xf32>
    %c0_133 = arith.constant 0 : index
    %c3_134 = arith.constant 3 : index
    %c3_135 = arith.constant 3 : index
    %c0_136 = arith.constant 0 : index
    %122 = vector.load %arg19[%c0_133, %c3_134, %c3_135, %c0_136] : memref<1x12x12x16xf32, #tpu.memory_space<vmem>>, vector<1x8x8x16xf32>
    %123 = vector.extract_strided_slice %65 {offsets = [8, 0], sizes = [1, 16], strides = [1, 1]} : vector<9x16xf32> to vector<1x16xf32>
    %124 = vector.shape_cast %123 : vector<1x16xf32> to vector<16xf32>
    %125 = vector.shape_cast %124 : vector<16xf32> to vector<1x1x1x16xf32>
    %126 = vector.broadcast %125 : vector<1x1x1x16xf32> to vector<1x8x8x16xf32>
    %127 = arith.mulf %122, %126 : vector<1x8x8x16xf32>
    %128 = arith.addf %121, %127 : vector<1x8x8x16xf32>
    %cst_137 = arith.constant 0.000000e+00 : f32
    %129 = vector.broadcast %cst_137 : f32 to vector<1x8x8x8xf32>
    %130 = arith.maximumf %35, %129 : vector<1x8x8x8xf32>
    %c0_138 = arith.constant 0 : index
    %c0_139 = arith.constant 0 : index
    %131 = vector.load %arg7[%c0_138, %c0_139] : memref<9x8xf32, #tpu.memory_space<vmem>>, vector<9x8xf32>
    %c0_140 = arith.constant 0 : index
    %c2_141 = arith.constant 2 : index
    %c2_142 = arith.constant 2 : index
    %c0_143 = arith.constant 0 : index
    %132 = vector.load %arg19[%c0_140, %c2_141, %c2_142, %c0_143] : memref<1x12x12x16xf32, #tpu.memory_space<vmem>>, vector<1x8x8x8xf32>
    tpu.vector_store %arg19[%c0_140, %c2_141, %c2_142, %c0_143], %130 {strides = array<i32>} : memref<1x12x12x16xf32, #tpu.memory_space<vmem>>, vector<1x8x8x8xf32>,
    %c0_144 = arith.constant 0 : index
    %c0_145 = arith.constant 0 : index
    %c0_146 = arith.constant 0 : index
    %c0_147 = arith.constant 0 : index
    %133 = vector.load %arg19[%c0_144, %c0_145, %c0_146, %c0_147] : memref<1x12x12x16xf32, #tpu.memory_space<vmem>>, vector<1x8x8x8xf32>
    %134 = vector.extract_strided_slice %131 {offsets = [0, 0], sizes = [1, 8], strides = [1, 1]} : vector<9x8xf32> to vector<1x8xf32>
    %135 = vector.shape_cast %134 : vector<1x8xf32> to vector<8xf32>
    %136 = vector.shape_cast %135 : vector<8xf32> to vector<1x1x1x8xf32>
    %137 = vector.broadcast %136 : vector<1x1x1x8xf32> to vector<1x8x8x8xf32>
    %138 = arith.mulf %133, %137 : vector<1x8x8x8xf32>
    %c0_148 = arith.constant 0 : index
    %c0_149 = arith.constant 0 : index
    %c2_150 = arith.constant 2 : index
    %c0_151 = arith.constant 0 : index
    %139 = vector.load %arg19[%c0_148, %c0_149, %c2_150, %c0_151] : memref<1x12x12x16xf32, #tpu.memory_space<vmem>>, vector<1x8x8x8xf32>
    %140 = vector.extract_strided_slice %131 {offsets = [1, 0], sizes = [1, 8], strides = [1, 1]} : vector<9x8xf32> to vector<1x8xf32>
    %141 = vector.shape_cast %140 : vector<1x8xf32> to vector<8xf32>
    %142 = vector.shape_cast %141 : vector<8xf32> to vector<1x1x1x8xf32>
    %143 = vector.broadcast %142 : vector<1x1x1x8xf32> to vector<1x8x8x8xf32>
    %144 = arith.mulf %139, %143 : vector<1x8x8x8xf32>
    %145 = arith.addf %138, %144 : vector<1x8x8x8xf32>
    %c0_152 = arith.constant 0 : index
    %c0_153 = arith.constant 0 : index
    %c4 = arith.constant 4 : index
    %c0_154 = arith.constant 0 : index
    %146 = vector.load %arg19[%c0_152, %c0_153, %c4, %c0_154] : memref<1x12x12x16xf32, #tpu.memory_space<vmem>>, vector<1x8x8x8xf32>
    %147 = vector.extract_strided_slice %131 {offsets = [2, 0], sizes = [1, 8], strides = [1, 1]} : vector<9x8xf32> to vector<1x8xf32>
    %148 = vector.shape_cast %147 : vector<1x8xf32> to vector<8xf32>
    %149 = vector.shape_cast %148 : vector<8xf32> to vector<1x1x1x8xf32>
    %150 = vector.broadcast %149 : vector<1x1x1x8xf32> to vector<1x8x8x8xf32>
    %151 = arith.mulf %146, %150 : vector<1x8x8x8xf32>
    %152 = arith.addf %145, %151 : vector<1x8x8x8xf32>
    %c0_155 = arith.constant 0 : index
    %c2_156 = arith.constant 2 : index
    %c0_157 = arith.constant 0 : index
    %c0_158 = arith.constant 0 : index
    %153 = vector.load %arg19[%c0_155, %c2_156, %c0_157, %c0_158] : memref<1x12x12x16xf32, #tpu.memory_space<vmem>>, vector<1x8x8x8xf32>
    %154 = vector.extract_strided_slice %131 {offsets = [3, 0], sizes = [1, 8], strides = [1, 1]} : vector<9x8xf32> to vector<1x8xf32>
    %155 = vector.shape_cast %154 : vector<1x8xf32> to vector<8xf32>
    %156 = vector.shape_cast %155 : vector<8xf32> to vector<1x1x1x8xf32>
    %157 = vector.broadcast %156 : vector<1x1x1x8xf32> to vector<1x8x8x8xf32>
    %158 = arith.mulf %153, %157 : vector<1x8x8x8xf32>
    %159 = arith.addf %152, %158 : vector<1x8x8x8xf32>
    %c0_159 = arith.constant 0 : index
    %c2_160 = arith.constant 2 : index
    %c2_161 = arith.constant 2 : index
    %c0_162 = arith.constant 0 : index
    %160 = vector.load %arg19[%c0_159, %c2_160, %c2_161, %c0_162] : memref<1x12x12x16xf32, #tpu.memory_space<vmem>>, vector<1x8x8x8xf32>
    %161 = vector.extract_strided_slice %131 {offsets = [4, 0], sizes = [1, 8], strides = [1, 1]} : vector<9x8xf32> to vector<1x8xf32>
    %162 = vector.shape_cast %161 : vector<1x8xf32> to vector<8xf32>
    %163 = vector.shape_cast %162 : vector<8xf32> to vector<1x1x1x8xf32>
    %164 = vector.broadcast %163 : vector<1x1x1x8xf32> to vector<1x8x8x8xf32>
    %165 = arith.mulf %160, %164 : vector<1x8x8x8xf32>
    %166 = arith.addf %159, %165 : vector<1x8x8x8xf32>
    %c0_163 = arith.constant 0 : index
    %c2_164 = arith.constant 2 : index
    %c4_165 = arith.constant 4 : index
    %c0_166 = arith.constant 0 : index
    %167 = vector.load %arg19[%c0_163, %c2_164, %c4_165, %c0_166] : memref<1x12x12x16xf32, #tpu.memory_space<vmem>>, vector<1x8x8x8xf32>
    %168 = vector.extract_strided_slice %131 {offsets = [5, 0], sizes = [1, 8], strides = [1, 1]} : vector<9x8xf32> to vector<1x8xf32>
    %169 = vector.shape_cast %168 : vector<1x8xf32> to vector<8xf32>
    %170 = vector.shape_cast %169 : vector<8xf32> to vector<1x1x1x8xf32>
    %171 = vector.broadcast %170 : vector<1x1x1x8xf32> to vector<1x8x8x8xf32>
    %172 = arith.mulf %167, %171 : vector<1x8x8x8xf32>
    %173 = arith.addf %166, %172 : vector<1x8x8x8xf32>
    %c0_167 = arith.constant 0 : index
    %c4_168 = arith.constant 4 : index
    %c0_169 = arith.constant 0 : index
    %c0_170 = arith.constant 0 : index
    %174 = vector.load %arg19[%c0_167, %c4_168, %c0_169, %c0_170] : memref<1x12x12x16xf32, #tpu.memory_space<vmem>>, vector<1x8x8x8xf32>
    %175 = vector.extract_strided_slice %131 {offsets = [6, 0], sizes = [1, 8], strides = [1, 1]} : vector<9x8xf32> to vector<1x8xf32>
    %176 = vector.shape_cast %175 : vector<1x8xf32> to vector<8xf32>
    %177 = vector.shape_cast %176 : vector<8xf32> to vector<1x1x1x8xf32>
    %178 = vector.broadcast %177 : vector<1x1x1x8xf32> to vector<1x8x8x8xf32>
    %179 = arith.mulf %174, %178 : vector<1x8x8x8xf32>
    %180 = arith.addf %173, %179 : vector<1x8x8x8xf32>
    %c0_171 = arith.constant 0 : index
    %c4_172 = arith.constant 4 : index
    %c2_173 = arith.constant 2 : index
    %c0_174 = arith.constant 0 : index
    %181 = vector.load %arg19[%c0_171, %c4_172, %c2_173, %c0_174] : memref<1x12x12x16xf32, #tpu.memory_space<vmem>>, vector<1x8x8x8xf32>
    %182 = vector.extract_strided_slice %131 {offsets = [7, 0], sizes = [1, 8], strides = [1, 1]} : vector<9x8xf32> to vector<1x8xf32>
    %183 = vector.shape_cast %182 : vector<1x8xf32> to vector<8xf32>
    %184 = vector.shape_cast %183 : vector<8xf32> to vector<1x1x1x8xf32>
    %185 = vector.broadcast %184 : vector<1x1x1x8xf32> to vector<1x8x8x8xf32>
    %186 = arith.mulf %181, %185 : vector<1x8x8x8xf32>
    %187 = arith.addf %180, %186 : vector<1x8x8x8xf32>
    %c0_175 = arith.constant 0 : index
    %c4_176 = arith.constant 4 : index
    %c4_177 = arith.constant 4 : index
    %c0_178 = arith.constant 0 : index
    %188 = vector.load %arg19[%c0_175, %c4_176, %c4_177, %c0_178] : memref<1x12x12x16xf32, #tpu.memory_space<vmem>>, vector<1x8x8x8xf32>
    %189 = vector.extract_strided_slice %131 {offsets = [8, 0], sizes = [1, 8], strides = [1, 1]} : vector<9x8xf32> to vector<1x8xf32>
    %190 = vector.shape_cast %189 : vector<1x8xf32> to vector<8xf32>
    %191 = vector.shape_cast %190 : vector<8xf32> to vector<1x1x1x8xf32>
    %192 = vector.broadcast %191 : vector<1x1x1x8xf32> to vector<1x8x8x8xf32>
    %193 = arith.mulf %188, %192 : vector<1x8x8x8xf32>
    %194 = arith.addf %187, %193 : vector<1x8x8x8xf32>
    %195 = tpu.concatenate %128, %194 in 3 : vector<1x8x8x16xf32>, vector<1x8x8x8xf32> -> vector<1x8x8x24xf32>
    %196 = vector.shape_cast %195 : vector<1x8x8x24xf32> to vector<64x24xf32>
    %c0_179 = arith.constant 0 : index
    %c0_180 = arith.constant 0 : index
    %197 = vector.load %arg8[%c0_179, %c0_180] : memref<24x24xf32, #tpu.memory_space<vmem>>, vector<24x24xf32>
    %cst_181 = arith.constant dense<0.000000e+00> : vector<64x24xf32>
    %198 = tpu.matmul %196, %197, %cst_181 {dimension_numbers = #tpu.dot_dimension_numbers<[1], [0], [0], [1], [0, 0, 1, 1], [], []>} : vector<64x24xf32>, vector<24x24xf32>, vector<64x24xf32> -> vector<64x24xf32>
    %c0_182 = arith.constant 0 : index
    %c0_183 = arith.constant 0 : index
    %199 = vector.load %arg9[%c0_182, %c0_183] : memref<1x24xf32, #tpu.memory_space<vmem>>, vector<1x24xf32>
    %200 = vector.broadcast %199 : vector<1x24xf32> to vector<64x24xf32>
    %201 = arith.mulf %198, %200 : vector<64x24xf32>
    %c0_184 = arith.constant 0 : index
    %c0_185 = arith.constant 0 : index
    %202 = vector.load %arg10[%c0_184, %c0_185] : memref<1x24xf32, #tpu.memory_space<vmem>>, vector<1x24xf32>
    %203 = vector.broadcast %202 : vector<1x24xf32> to vector<64x24xf32>
    %204 = arith.addf %201, %203 : vector<64x24xf32>
    %205 = vector.extract_strided_slice %204 {offsets = [0, 0], sizes = [64, 16], strides = [1, 1]} : vector<64x24xf32> to vector<64x16xf32>
    %cst_186 = arith.constant 0.000000e+00 : f32
    %206 = vector.broadcast %cst_186 : f32 to vector<64x16xf32>
    %207 = arith.maximumf %205, %206 : vector<64x16xf32>
    %208 = vector.shape_cast %207 : vector<64x16xf32> to vector<1x8x8x16xf32>
    %c0_187 = arith.constant 0 : index
    %c0_188 = arith.constant 0 : index
    %209 = vector.load %arg11[%c0_187, %c0_188] : memref<9x16xf32, #tpu.memory_space<vmem>>, vector<9x16xf32>
    %c0_189 = arith.constant 0 : index
    %c2_190 = arith.constant 2 : index
    %c2_191 = arith.constant 2 : index
    %c0_192 = arith.constant 0 : index
    %210 = vector.load %arg19[%c0_189, %c2_190, %c2_191, %c0_192] : memref<1x12x12x16xf32, #tpu.memory_space<vmem>>, vector<1x8x8x16xf32>
    tpu.vector_store %arg19[%c0_189, %c2_190, %c2_191, %c0_192], %208 {strides = array<i32>} : memref<1x12x12x16xf32, #tpu.memory_space<vmem>>, vector<1x8x8x16xf32>,
    %c0_193 = arith.constant 0 : index
    %c1_194 = arith.constant 1 : index
    %c1_195 = arith.constant 1 : index
    %c0_196 = arith.constant 0 : index
    %211 = vector.load %arg19[%c0_193, %c1_194, %c1_195, %c0_196] : memref<1x12x12x16xf32, #tpu.memory_space<vmem>>, vector<1x8x8x16xf32>
    %212 = vector.extract_strided_slice %209 {offsets = [0, 0], sizes = [1, 16], strides = [1, 1]} : vector<9x16xf32> to vector<1x16xf32>
    %213 = vector.shape_cast %212 : vector<1x16xf32> to vector<16xf32>
    %214 = vector.shape_cast %213 : vector<16xf32> to vector<1x1x1x16xf32>
    %215 = vector.broadcast %214 : vector<1x1x1x16xf32> to vector<1x8x8x16xf32>
    %216 = arith.mulf %211, %215 : vector<1x8x8x16xf32>
    %c0_197 = arith.constant 0 : index
    %c1_198 = arith.constant 1 : index
    %c2_199 = arith.constant 2 : index
    %c0_200 = arith.constant 0 : index
    %217 = vector.load %arg19[%c0_197, %c1_198, %c2_199, %c0_200] : memref<1x12x12x16xf32, #tpu.memory_space<vmem>>, vector<1x8x8x16xf32>
    %218 = vector.extract_strided_slice %209 {offsets = [1, 0], sizes = [1, 16], strides = [1, 1]} : vector<9x16xf32> to vector<1x16xf32>
    %219 = vector.shape_cast %218 : vector<1x16xf32> to vector<16xf32>
    %220 = vector.shape_cast %219 : vector<16xf32> to vector<1x1x1x16xf32>
    %221 = vector.broadcast %220 : vector<1x1x1x16xf32> to vector<1x8x8x16xf32>
    %222 = arith.mulf %217, %221 : vector<1x8x8x16xf32>
    %223 = arith.addf %216, %222 : vector<1x8x8x16xf32>
    %c0_201 = arith.constant 0 : index
    %c1_202 = arith.constant 1 : index
    %c3_203 = arith.constant 3 : index
    %c0_204 = arith.constant 0 : index
    %224 = vector.load %arg19[%c0_201, %c1_202, %c3_203, %c0_204] : memref<1x12x12x16xf32, #tpu.memory_space<vmem>>, vector<1x8x8x16xf32>
    %225 = vector.extract_strided_slice %209 {offsets = [2, 0], sizes = [1, 16], strides = [1, 1]} : vector<9x16xf32> to vector<1x16xf32>
    %226 = vector.shape_cast %225 : vector<1x16xf32> to vector<16xf32>
    %227 = vector.shape_cast %226 : vector<16xf32> to vector<1x1x1x16xf32>
    %228 = vector.broadcast %227 : vector<1x1x1x16xf32> to vector<1x8x8x16xf32>
    %229 = arith.mulf %224, %228 : vector<1x8x8x16xf32>
    %230 = arith.addf %223, %229 : vector<1x8x8x16xf32>
    %c0_205 = arith.constant 0 : index
    %c2_206 = arith.constant 2 : index
    %c1_207 = arith.constant 1 : index
    %c0_208 = arith.constant 0 : index
    %231 = vector.load %arg19[%c0_205, %c2_206, %c1_207, %c0_208] : memref<1x12x12x16xf32, #tpu.memory_space<vmem>>, vector<1x8x8x16xf32>
    %232 = vector.extract_strided_slice %209 {offsets = [3, 0], sizes = [1, 16], strides = [1, 1]} : vector<9x16xf32> to vector<1x16xf32>
    %233 = vector.shape_cast %232 : vector<1x16xf32> to vector<16xf32>
    %234 = vector.shape_cast %233 : vector<16xf32> to vector<1x1x1x16xf32>
    %235 = vector.broadcast %234 : vector<1x1x1x16xf32> to vector<1x8x8x16xf32>
    %236 = arith.mulf %231, %235 : vector<1x8x8x16xf32>
    %237 = arith.addf %230, %236 : vector<1x8x8x16xf32>
    %c0_209 = arith.constant 0 : index
    %c2_210 = arith.constant 2 : index
    %c2_211 = arith.constant 2 : index
    %c0_212 = arith.constant 0 : index
    %238 = vector.load %arg19[%c0_209, %c2_210, %c2_211, %c0_212] : memref<1x12x12x16xf32, #tpu.memory_space<vmem>>, vector<1x8x8x16xf32>
    %239 = vector.extract_strided_slice %209 {offsets = [4, 0], sizes = [1, 16], strides = [1, 1]} : vector<9x16xf32> to vector<1x16xf32>
    %240 = vector.shape_cast %239 : vector<1x16xf32> to vector<16xf32>
    %241 = vector.shape_cast %240 : vector<16xf32> to vector<1x1x1x16xf32>
    %242 = vector.broadcast %241 : vector<1x1x1x16xf32> to vector<1x8x8x16xf32>
    %243 = arith.mulf %238, %242 : vector<1x8x8x16xf32>
    %244 = arith.addf %237, %243 : vector<1x8x8x16xf32>
    %c0_213 = arith.constant 0 : index
    %c2_214 = arith.constant 2 : index
    %c3_215 = arith.constant 3 : index
    %c0_216 = arith.constant 0 : index
    %245 = vector.load %arg19[%c0_213, %c2_214, %c3_215, %c0_216] : memref<1x12x12x16xf32, #tpu.memory_space<vmem>>, vector<1x8x8x16xf32>
    %246 = vector.extract_strided_slice %209 {offsets = [5, 0], sizes = [1, 16], strides = [1, 1]} : vector<9x16xf32> to vector<1x16xf32>
    %247 = vector.shape_cast %246 : vector<1x16xf32> to vector<16xf32>
    %248 = vector.shape_cast %247 : vector<16xf32> to vector<1x1x1x16xf32>
    %249 = vector.broadcast %248 : vector<1x1x1x16xf32> to vector<1x8x8x16xf32>
    %250 = arith.mulf %245, %249 : vector<1x8x8x16xf32>
    %251 = arith.addf %244, %250 : vector<1x8x8x16xf32>
    %c0_217 = arith.constant 0 : index
    %c3_218 = arith.constant 3 : index
    %c1_219 = arith.constant 1 : index
    %c0_220 = arith.constant 0 : index
    %252 = vector.load %arg19[%c0_217, %c3_218, %c1_219, %c0_220] : memref<1x12x12x16xf32, #tpu.memory_space<vmem>>, vector<1x8x8x16xf32>
    %253 = vector.extract_strided_slice %209 {offsets = [6, 0], sizes = [1, 16], strides = [1, 1]} : vector<9x16xf32> to vector<1x16xf32>
    %254 = vector.shape_cast %253 : vector<1x16xf32> to vector<16xf32>
    %255 = vector.shape_cast %254 : vector<16xf32> to vector<1x1x1x16xf32>
    %256 = vector.broadcast %255 : vector<1x1x1x16xf32> to vector<1x8x8x16xf32>
    %257 = arith.mulf %252, %256 : vector<1x8x8x16xf32>
    %258 = arith.addf %251, %257 : vector<1x8x8x16xf32>
    %c0_221 = arith.constant 0 : index
    %c3_222 = arith.constant 3 : index
    %c2_223 = arith.constant 2 : index
    %c0_224 = arith.constant 0 : index
    %259 = vector.load %arg19[%c0_221, %c3_222, %c2_223, %c0_224] : memref<1x12x12x16xf32, #tpu.memory_space<vmem>>, vector<1x8x8x16xf32>
    %260 = vector.extract_strided_slice %209 {offsets = [7, 0], sizes = [1, 16], strides = [1, 1]} : vector<9x16xf32> to vector<1x16xf32>
    %261 = vector.shape_cast %260 : vector<1x16xf32> to vector<16xf32>
    %262 = vector.shape_cast %261 : vector<16xf32> to vector<1x1x1x16xf32>
    %263 = vector.broadcast %262 : vector<1x1x1x16xf32> to vector<1x8x8x16xf32>
    %264 = arith.mulf %259, %263 : vector<1x8x8x16xf32>
    %265 = arith.addf %258, %264 : vector<1x8x8x16xf32>
    %c0_225 = arith.constant 0 : index
    %c3_226 = arith.constant 3 : index
    %c3_227 = arith.constant 3 : index
    %c0_228 = arith.constant 0 : index
    %266 = vector.load %arg19[%c0_225, %c3_226, %c3_227, %c0_228] : memref<1x12x12x16xf32, #tpu.memory_space<vmem>>, vector<1x8x8x16xf32>
    %267 = vector.extract_strided_slice %209 {offsets = [8, 0], sizes = [1, 16], strides = [1, 1]} : vector<9x16xf32> to vector<1x16xf32>
    %268 = vector.shape_cast %267 : vector<1x16xf32> to vector<16xf32>
    %269 = vector.shape_cast %268 : vector<16xf32> to vector<1x1x1x16xf32>
    %270 = vector.broadcast %269 : vector<1x1x1x16xf32> to vector<1x8x8x16xf32>
    %271 = arith.mulf %266, %270 : vector<1x8x8x16xf32>
    %272 = arith.addf %265, %271 : vector<1x8x8x16xf32>
    %273 = vector.shape_cast %272 : vector<1x8x8x16xf32> to vector<64x16xf32>
    %c0_229 = arith.constant 0 : index
    %c0_230 = arith.constant 0 : index
    %274 = vector.load %arg12[%c0_229, %c0_230] : memref<16x16xf32, #tpu.memory_space<vmem>>, vector<16x16xf32>
    %cst_231 = arith.constant dense<0.000000e+00> : vector<64x16xf32>
    %275 = tpu.matmul %273, %274, %cst_231 {dimension_numbers = #tpu.dot_dimension_numbers<[1], [0], [0], [1], [0, 0, 1, 1], [], []>} : vector<64x16xf32>, vector<16x16xf32>, vector<64x16xf32> -> vector<64x16xf32>
    %c0_232 = arith.constant 0 : index
    %c0_233 = arith.constant 0 : index
    %276 = vector.load %arg13[%c0_232, %c0_233] : memref<1x16xf32, #tpu.memory_space<vmem>>, vector<1x16xf32>
    %277 = vector.broadcast %276 : vector<1x16xf32> to vector<64x16xf32>
    %278 = arith.mulf %275, %277 : vector<64x16xf32>
    %c0_234 = arith.constant 0 : index
    %c0_235 = arith.constant 0 : index
    %279 = vector.load %arg14[%c0_234, %c0_235] : memref<1x16xf32, #tpu.memory_space<vmem>>, vector<1x16xf32>
    %280 = vector.broadcast %279 : vector<1x16xf32> to vector<64x16xf32>
    %281 = arith.addf %278, %280 : vector<64x16xf32>
    %282 = vector.extract_strided_slice %281 {offsets = [0, 0], sizes = [64, 8], strides = [1, 1]} : vector<64x16xf32> to vector<64x8xf32>
    %283 = vector.shape_cast %282 : vector<64x8xf32> to vector<1x8x8x8xf32>
    %284 = vector.extract_strided_slice %281 {offsets = [0, 8], sizes = [64, 8], strides = [1, 1]} : vector<64x16xf32> to vector<64x8xf32>
    %285 = vector.shape_cast %284 : vector<64x8xf32> to vector<1x8x8x8xf32>
    %286 = vector.extract_strided_slice %204 {offsets = [0, 16], sizes = [64, 8], strides = [1, 1]} : vector<64x24xf32> to vector<64x8xf32>
    %287 = vector.shape_cast %286 : vector<64x8xf32> to vector<1x8x8x8xf32>
    %288 = arith.addf %283, %35 : vector<1x8x8x8xf32>
    %c0_236 = arith.constant 0 : index
    %c0_237 = arith.constant 0 : index
    %c0_238 = arith.constant 0 : index
    %c0_239 = arith.constant 0 : index
    %289 = vector.load %arg18[%c0_236, %c0_237, %c0_238, %c0_239] : memref<1x8x8x32xf32, #tpu.memory_space<vmem>>, vector<1x8x8x8xf32>
    tpu.vector_store %arg18[%c0_236, %c0_237, %c0_238, %c0_239], %288 {strides = array<i32>} : memref<1x8x8x32xf32, #tpu.memory_space<vmem>>, vector<1x8x8x8xf32>,
    %290 = arith.addf %287, %61 : vector<1x8x8x8xf32>
    %c0_240 = arith.constant 0 : index
    %c0_241 = arith.constant 0 : index
    %c0_242 = arith.constant 0 : index
    %c8 = arith.constant 8 : index
    %291 = vector.load %arg18[%c0_240, %c0_241, %c0_242, %c8] : memref<1x8x8x32xf32, #tpu.memory_space<vmem>>, vector<1x8x8x8xf32>
    tpu.vector_store %arg18[%c0_240, %c0_241, %c0_242, %c8], %290 {strides = array<i32>} : memref<1x8x8x32xf32, #tpu.memory_space<vmem>>, vector<1x8x8x8xf32>,
    %c0_243 = arith.constant 0 : index
    %c2_244 = arith.constant 2 : index
    %c2_245 = arith.constant 2 : index
    %c0_246 = arith.constant 0 : index
    %292 = vector.load %arg19[%c0_243, %c2_244, %c2_245, %c0_246] : memref<1x12x12x16xf32, #tpu.memory_space<vmem>>, vector<1x8x8x8xf32>
    tpu.vector_store %arg19[%c0_243, %c2_244, %c2_245, %c0_246], %288 {strides = array<i32>} : memref<1x12x12x16xf32, #tpu.memory_space<vmem>>, vector<1x8x8x8xf32>,
    %c0_247 = arith.constant 0 : index
    %c1_248 = arith.constant 1 : index
    %c1_249 = arith.constant 1 : index
    %c0_250 = arith.constant 0 : index
    %293 = vector.load %arg19[%c0_247, %c1_248, %c1_249, %c0_250] : memref<1x12x12x16xf32, #tpu.memory_space<vmem>>, vector<1x8x8x8xf32>
    %c0_251 = arith.constant 0 : index
    %c1_252 = arith.constant 1 : index
    %c2_253 = arith.constant 2 : index
    %c0_254 = arith.constant 0 : index
    %294 = vector.load %arg19[%c0_251, %c1_252, %c2_253, %c0_254] : memref<1x12x12x16xf32, #tpu.memory_space<vmem>>, vector<1x8x8x8xf32>
    %295 = arith.addf %293, %294 : vector<1x8x8x8xf32>
    %c0_255 = arith.constant 0 : index
    %c1_256 = arith.constant 1 : index
    %c3_257 = arith.constant 3 : index
    %c0_258 = arith.constant 0 : index
    %296 = vector.load %arg19[%c0_255, %c1_256, %c3_257, %c0_258] : memref<1x12x12x16xf32, #tpu.memory_space<vmem>>, vector<1x8x8x8xf32>
    %297 = arith.addf %295, %296 : vector<1x8x8x8xf32>
    %c0_259 = arith.constant 0 : index
    %c2_260 = arith.constant 2 : index
    %c1_261 = arith.constant 1 : index
    %c0_262 = arith.constant 0 : index
    %298 = vector.load %arg19[%c0_259, %c2_260, %c1_261, %c0_262] : memref<1x12x12x16xf32, #tpu.memory_space<vmem>>, vector<1x8x8x8xf32>
    %299 = arith.addf %297, %298 : vector<1x8x8x8xf32>
    %c0_263 = arith.constant 0 : index
    %c2_264 = arith.constant 2 : index
    %c2_265 = arith.constant 2 : index
    %c0_266 = arith.constant 0 : index
    %300 = vector.load %arg19[%c0_263, %c2_264, %c2_265, %c0_266] : memref<1x12x12x16xf32, #tpu.memory_space<vmem>>, vector<1x8x8x8xf32>
    %301 = arith.addf %299, %300 : vector<1x8x8x8xf32>
    %c0_267 = arith.constant 0 : index
    %c2_268 = arith.constant 2 : index
    %c3_269 = arith.constant 3 : index
    %c0_270 = arith.constant 0 : index
    %302 = vector.load %arg19[%c0_267, %c2_268, %c3_269, %c0_270] : memref<1x12x12x16xf32, #tpu.memory_space<vmem>>, vector<1x8x8x8xf32>
    %303 = arith.addf %301, %302 : vector<1x8x8x8xf32>
    %c0_271 = arith.constant 0 : index
    %c3_272 = arith.constant 3 : index
    %c1_273 = arith.constant 1 : index
    %c0_274 = arith.constant 0 : index
    %304 = vector.load %arg19[%c0_271, %c3_272, %c1_273, %c0_274] : memref<1x12x12x16xf32, #tpu.memory_space<vmem>>, vector<1x8x8x8xf32>
    %305 = arith.addf %303, %304 : vector<1x8x8x8xf32>
    %c0_275 = arith.constant 0 : index
    %c3_276 = arith.constant 3 : index
    %c2_277 = arith.constant 2 : index
    %c0_278 = arith.constant 0 : index
    %306 = vector.load %arg19[%c0_275, %c3_276, %c2_277, %c0_278] : memref<1x12x12x16xf32, #tpu.memory_space<vmem>>, vector<1x8x8x8xf32>
    %307 = arith.addf %305, %306 : vector<1x8x8x8xf32>
    %c0_279 = arith.constant 0 : index
    %c3_280 = arith.constant 3 : index
    %c3_281 = arith.constant 3 : index
    %c0_282 = arith.constant 0 : index
    %308 = vector.load %arg19[%c0_279, %c3_280, %c3_281, %c0_282] : memref<1x12x12x16xf32, #tpu.memory_space<vmem>>, vector<1x8x8x8xf32>
    %309 = arith.addf %307, %308 : vector<1x8x8x8xf32>
    %c0_283 = arith.constant 0 : index
    %c0_284 = arith.constant 0 : index
    %c0_285 = arith.constant 0 : index
    %c0_286 = arith.constant 0 : index
    %310 = vector.load %arg17[%c0_283, %c0_284, %c0_285, %c0_286] : memref<1x8x8x8xf32, #tpu.memory_space<vmem>>, vector<1x8x8x8xf32>
    %311 = arith.mulf %309, %310 : vector<1x8x8x8xf32>
    %c1_287 = arith.constant 1 : index
    %c0_288 = arith.constant 0 : index
    %312 = vector.load %arg15[%c1_287, %c0_288] : memref<2x8xf32, #tpu.memory_space<vmem>>, vector<1x8xf32>
    %313 = vector.shape_cast %312 : vector<1x8xf32> to vector<1x1x1x8xf32>
    %314 = vector.broadcast %313 : vector<1x1x1x8xf32> to vector<1x8x8x8xf32>
    %315 = arith.mulf %311, %314 : vector<1x8x8x8xf32>
    %c1_289 = arith.constant 1 : index
    %c0_290 = arith.constant 0 : index
    %316 = vector.load %arg16[%c1_289, %c0_290] : memref<2x8xf32, #tpu.memory_space<vmem>>, vector<1x8xf32>
    %317 = vector.shape_cast %316 : vector<1x8xf32> to vector<1x1x1x8xf32>
    %318 = vector.broadcast %317 : vector<1x1x1x8xf32> to vector<1x8x8x8xf32>
    %319 = arith.addf %315, %318 : vector<1x8x8x8xf32>
    %320 = arith.addf %319, %290 : vector<1x8x8x8xf32>
    %c0_291 = arith.constant 0 : index
    %c0_292 = arith.constant 0 : index
    %c0_293 = arith.constant 0 : index
    %c16 = arith.constant 16 : index
    %321 = vector.load %arg18[%c0_291, %c0_292, %c0_293, %c16] : memref<1x8x8x32xf32, #tpu.memory_space<vmem>>, vector<1x8x8x8xf32>
    tpu.vector_store %arg18[%c0_291, %c0_292, %c0_293, %c16], %320 {strides = array<i32>} : memref<1x8x8x32xf32, #tpu.memory_space<vmem>>, vector<1x8x8x8xf32>,
    %322 = arith.addf %285, %288 : vector<1x8x8x8xf32>
    %c0_294 = arith.constant 0 : index
    %c0_295 = arith.constant 0 : index
    %c0_296 = arith.constant 0 : index
    %c24 = arith.constant 24 : index
    %323 = vector.load %arg18[%c0_294, %c0_295, %c0_296, %c24] : memref<1x8x8x32xf32, #tpu.memory_space<vmem>>, vector<1x8x8x8xf32>
    tpu.vector_store %arg18[%c0_294, %c0_295, %c0_296, %c24], %322 {strides = array<i32>} : memref<1x8x8x32xf32, #tpu.memory_space<vmem>>, vector<1x8x8x8xf32>,
    return
  }
  func.func @transform_0(%arg0: i32) -> (i32, i32, i32, i32) {
    %c0_i32 = arith.constant 0 : i32
    %c0_i32_0 = arith.constant 0 : i32
    %c0_i32_1 = arith.constant 0 : i32
    %c0_i32_2 = arith.constant 0 : i32
    return %arg0, %c0_i32, %c0_i32_0, %c0_i32_1 : i32, i32, i32, i32
  }
  func.func @transform_1(%arg0: i32) -> (i32, i32, i32, i32) {
    %c0_i32 = arith.constant 0 : i32
    %c0_i32_0 = arith.constant 0 : i32
    %c0_i32_1 = arith.constant 0 : i32
    %c0_i32_2 = arith.constant 0 : i32
    return %arg0, %c0_i32, %c0_i32_0, %c0_i32_1 : i32, i32, i32, i32
  }
  func.func @transform_2(%arg0: i32) -> (i32, i32) {
    %c0_i32 = arith.constant 0 : i32
    %c0_i32_0 = arith.constant 0 : i32
    %c0_i32_1 = arith.constant 0 : i32
    return %c0_i32, %c0_i32_0 : i32, i32
  }
  func.func @transform_3(%arg0: i32) -> (i32, i32) {
    %c0_i32 = arith.constant 0 : i32
    %c0_i32_0 = arith.constant 0 : i32
    %c0_i32_1 = arith.constant 0 : i32
    return %c0_i32, %c0_i32_0 : i32, i32
  }
  func.func @transform_4(%arg0: i32) -> (i32, i32) {
    %c0_i32 = arith.constant 0 : i32
    %c0_i32_0 = arith.constant 0 : i32
    %c0_i32_1 = arith.constant 0 : i32
    return %c0_i32, %c0_i32_0 : i32, i32
  }
  func.func @transform_5(%arg0: i32) -> (i32, i32) {
    %c0_i32 = arith.constant 0 : i32
    %c0_i32_0 = arith.constant 0 : i32
    %c0_i32_1 = arith.constant 0 : i32
    return %c0_i32, %c0_i32_0 : i32, i32
  }
  func.func @transform_6(%arg0: i32) -> (i32, i32) {
    %c0_i32 = arith.constant 0 : i32
    %c0_i32_0 = arith.constant 0 : i32
    %c0_i32_1 = arith.constant 0 : i32
    return %c0_i32, %c0_i32_0 : i32, i32
  }
  func.func @transform_7(%arg0: i32) -> (i32, i32) {
    %c0_i32 = arith.constant 0 : i32
    %c0_i32_0 = arith.constant 0 : i32
    %c0_i32_1 = arith.constant 0 : i32
    return %c0_i32, %c0_i32_0 : i32, i32
  }
  func.func @transform_8(%arg0: i32) -> (i32, i32) {
    %c0_i32 = arith.constant 0 : i32
    %c0_i32_0 = arith.constant 0 : i32
    %c0_i32_1 = arith.constant 0 : i32
    return %c0_i32, %c0_i32_0 : i32, i32
  }
  func.func @transform_9(%arg0: i32) -> (i32, i32) {
    %c0_i32 = arith.constant 0 : i32
    %c0_i32_0 = arith.constant 0 : i32
    %c0_i32_1 = arith.constant 0 : i32
    return %c0_i32, %c0_i32_0 : i32, i32
  }
  func.func @transform_10(%arg0: i32) -> (i32, i32) {
    %c0_i32 = arith.constant 0 : i32
    %c0_i32_0 = arith.constant 0 : i32
    %c0_i32_1 = arith.constant 0 : i32
    return %c0_i32, %c0_i32_0 : i32, i32
  }
  func.func @transform_11(%arg0: i32) -> (i32, i32) {
    %c0_i32 = arith.constant 0 : i32
    %c0_i32_0 = arith.constant 0 : i32
    %c0_i32_1 = arith.constant 0 : i32
    return %c0_i32, %c0_i32_0 : i32, i32
  }
  func.func @transform_12(%arg0: i32) -> (i32, i32) {
    %c0_i32 = arith.constant 0 : i32
    %c0_i32_0 = arith.constant 0 : i32
    %c0_i32_1 = arith.constant 0 : i32
    return %c0_i32, %c0_i32_0 : i32, i32
  }
  func.func @transform_13(%arg0: i32) -> (i32, i32) {
    %c0_i32 = arith.constant 0 : i32
    %c0_i32_0 = arith.constant 0 : i32
    %c0_i32_1 = arith.constant 0 : i32
    return %c0_i32, %c0_i32_0 : i32, i32
  }
  func.func @transform_14(%arg0: i32) -> (i32, i32) {
    %c0_i32 = arith.constant 0 : i32
    %c0_i32_0 = arith.constant 0 : i32
    %c0_i32_1 = arith.constant 0 : i32
    return %c0_i32, %c0_i32_0 : i32, i32
  }
  func.func @transform_15(%arg0: i32) -> (i32, i32) {
    %c0_i32 = arith.constant 0 : i32
    %c0_i32_0 = arith.constant 0 : i32
    %c0_i32_1 = arith.constant 0 : i32
    return %c0_i32, %c0_i32_0 : i32, i32
  }
  func.func @transform_16(%arg0: i32) -> (i32, i32, i32, i32) {
    %c0_i32 = arith.constant 0 : i32
    %c0_i32_0 = arith.constant 0 : i32
    %c0_i32_1 = arith.constant 0 : i32
    %c0_i32_2 = arith.constant 0 : i32
    %c0_i32_3 = arith.constant 0 : i32
    return %c0_i32, %c0_i32_0, %c0_i32_1, %c0_i32_2 : i32, i32, i32, i32
  }
  func.func @transform_17(%arg0: i32) -> (i32, i32, i32, i32) {
    %c0_i32 = arith.constant 0 : i32
    %c0_i32_0 = arith.constant 0 : i32
    %c0_i32_1 = arith.constant 0 : i32
    %c0_i32_2 = arith.constant 0 : i32
    return %arg0, %c0_i32, %c0_i32_0, %c0_i32_1 : i32, i32, i32, i32
  }
}

</mosaic_0001>

<llo_original>
// kernel: cell_forward.1
$region0: #{cell_forward.1}
  #allocation0 [shape = 'u32[]', space=smem, size = 0x4, offset = 0x4, fixed_abs, tag = 'smem constant byte address 0x4 - core index']
  #allocation1 [shape = 'u32[144,128]{1,0:T(1,128)}', space=vmem, size = 0x12000, scoped, tag = 'internal scratch']
  #allocation2 [shape = 'f32[1,12,12,16]{3,2,1,0:T(8,128)}', space=vmem, size = 0x18000, scoped, tag = 'scratch operand']
  #allocation3 [shape = 'f32[1,10,10,8]{3,2,1,0:T(8,128)}', space=vmem, size = 0x14000, scoped, tag = 'scratch operand']
  %s0 = inlined_call_operand.vmem [shape: f32[2,8,8,4], index: 0, kind: input, shape index: {}]
  %s1 = inlined_call_operand.vmem [shape: f32[2,8,8,4], index: 1, kind: input, shape index: {}]
  %s2 = inlined_call_operand.vmem [shape: f32[8,16], index: 2, kind: input, shape index: {}]
  %s3 = inlined_call_operand.vmem [shape: f32[1,16], index: 3, kind: input, shape index: {}]
  %s4 = inlined_call_operand.vmem [shape: f32[1,16], index: 4, kind: input, shape index: {}]
  %s5 = inlined_call_operand.vmem [shape: f32[9,16], index: 5, kind: input, shape index: {}]
  %s6 = inlined_call_operand.vmem [shape: f32[9,8], index: 6, kind: input, shape index: {}]
  %s7 = inlined_call_operand.vmem [shape: f32[24,24], index: 7, kind: input, shape index: {}]
  %s8 = inlined_call_operand.vmem [shape: f32[1,24], index: 8, kind: input, shape index: {}]
  %s9 = inlined_call_operand.vmem [shape: f32[1,24], index: 9, kind: input, shape index: {}]
  %s10 = inlined_call_operand.vmem [shape: f32[9,16], index: 10, kind: input, shape index: {}]
  %s11 = inlined_call_operand.vmem [shape: f32[16,16], index: 11, kind: input, shape index: {}]
  %s12 = inlined_call_operand.vmem [shape: f32[1,16], index: 12, kind: input, shape index: {}]
  %s13 = inlined_call_operand.vmem [shape: f32[1,16], index: 13, kind: input, shape index: {}]
  %s14 = inlined_call_operand.vmem [shape: f32[2,8], index: 14, kind: input, shape index: {}]
  %s15 = inlined_call_operand.vmem [shape: f32[2,8], index: 15, kind: input, shape index: {}]
  %s16 = inlined_call_operand.vmem [shape: f32[1,8,8,8], index: 16, kind: input, shape index: {}]
  %s17 = inlined_call_operand.hbm [shape: f32[2,8,8,32], index: 17, kind: output, shape index: {}]
  %s18 = sld [smem:[#allocation0]]
  $region101: #{cell_forward.1} parent=0
    _
  %s20 = ssub.s32 1, %s18
  %s21 = scalar_select 0, %s20, %s18
  $region1: #{cell_forward.1} parent=0
    #allocation4 [shape = 'u8[65536]{0}', space=vmem, size = 0x10000, scoped, tag = 'output window, operand 0']
    #allocation5 [shape = 's32[2]{0}', space=sflag, size = 0x8, scoped, tag = 'scoped memory for cell_forward.1']
    %22 = vsyncpa [#allocation5], 0
    %s23 = scalar_lea.sflag [#allocation5], 1
    %24 = vsyncpa %s23, 0
    loop: start=0, step=1, limit=4
    $region2: #{cell_forward.1} parent=1 // loop_pre_header
      _
    $region3: #{cell_forward.1} parent=1 // loop_header
      %s26 = sphi 0, %s30
      %p27 = scmp.ge.s32.totalorder %s26, 4
      %s36 = sphi 0, %s38
      %s39 = sphi 0, %s36
      %s40 = sphi 0, %s39
      %s56 = sphi 0, %s40
      %s62 = sphi 0, %s64
      %s65 = sphi 0, %s62
      %s66 = sphi 0, %s65
      %s82 = sphi 0, %s66
      %s86 = sphi 0, %s86
      %s88 = sphi 0, %s86
      %s89 = sphi 0, %s88
      %s103 = sphi 0, %s89
      %s107 = sphi 0, %s107
      %s109 = sphi 0, %s107
      %s110 = sphi 0, %s109
      %s124 = sphi 0, %s110
      %s128 = sphi 0, %s128
      %s130 = sphi 0, %s128
      %s131 = sphi 0, %s130
      %s145 = sphi 0, %s131
      %s149 = sphi 0, %s149
      %s151 = sphi 0, %s149
      %s152 = sphi 0, %s151
      %s166 = sphi 0, %s152
      %s170 = sphi 0, %s170
      %s172 = sphi 0, %s170
      %s173 = sphi 0, %s172
      %s187 = sphi 0, %s173
      %s191 = sphi 0, %s191
      %s193 = sphi 0, %s191
      %s194 = sphi 0, %s193
      %s208 = sphi 0, %s194
      %s212 = sphi 0, %s212
      %s214 = sphi 0, %s212
      %s215 = sphi 0, %s214
      %s229 = sphi 0, %s215
      %s233 = sphi 0, %s233
      %s235 = sphi 0, %s233
      %s236 = sphi 0, %s235
      %s250 = sphi 0, %s236
      %s254 = sphi 0, %s254
      %s256 = sphi 0, %s254
      %s257 = sphi 0, %s256
      %s271 = sphi 0, %s257
      %s275 = sphi 0, %s275
      %s277 = sphi 0, %s275
      %s278 = sphi 0, %s277
      %s292 = sphi 0, %s278
      %s296 = sphi 0, %s296
      %s298 = sphi 0, %s296
      %s299 = sphi 0, %s298
      %s313 = sphi 0, %s299
      %s317 = sphi 0, %s317
      %s319 = sphi 0, %s317
      %s320 = sphi 0, %s319
      %s334 = sphi 0, %s320
      %s338 = sphi 0, %s338
      %s340 = sphi 0, %s338
      %s341 = sphi 0, %s340
      %s355 = sphi 0, %s341
      %s359 = sphi 0, %s359
      %s361 = sphi 0, %s359
      %s362 = sphi 0, %s361
      %s376 = sphi 0, %s362
      %s380 = sphi 0, %s380
      %s382 = sphi 0, %s380
      %s383 = sphi 0, %s382
      %s397 = sphi 0, %s383
      %s403 = sphi 0, %s405
      %s406 = sphi 0, %s403
      %s407 = sphi 0, %s406
      %s423 = sphi 0, %s407
    $region4: #{cell_forward.1} parent=1 // loop_header_branch
      %29 = sbr.rel (%p27) target = $region8
    $region5: #{cell_forward.1} parent=1 // loop_body
      %s31 = ssub.s32 %s26, 1
      %s32 = ssub.s32 %s26, 2
      %s33 = sadd.s32 %s26, 1
      %s34 = ssub.s32 %s26, %s33
      %p35 = scmp.eq.s32.totalorder %s34, 0
      %s37 = sadd.s32 %s36, 1
      %s38 = scalar_select %p35, %s36, %s37
      %p41 = pneg %p35
      %p42 = scmp.eq.s32.totalorder %s26, 1
      %p43 = por %p41, %p42
      %p44 = scmp.ne.s32.totalorder %s36, %s39
      %p45 = scmp.eq.s32.totalorder %s26, 0
      %p46 = por %p44, %p45
      %p47 = scmp.ne.s32.totalorder %s36, %s39
      %p48 = scmp.eq.s32.totalorder %s31, 1
      %p49 = por %p47, %p48
      %p50 = scmp.ne.s32.totalorder %s39, %s40
      %p51 = scmp.eq.s32.totalorder %s31, 0
      %p52 = por %p50, %p51
      %p53 = scmp.ne.s32.totalorder %s39, %s40
      %p54 = scmp.eq.s32.totalorder %s32, 1
      %p55 = por %p53, %p54
      %p57 = scmp.ne.s32.totalorder %s40, %s56
      %p58 = scmp.eq.s32.totalorder %s32, 0
      %p59 = por %p57, %p58
      %s60 = ssub.s32 %s26, %s33
      %p61 = scmp.eq.s32.totalorder %s60, 0
      %s63 = sadd.s32 %s62, 1
      %s64 = scalar_select %p61, %s62, %s63
      %p67 = pneg %p61
      %p68 = scmp.eq.s32.totalorder %s26, 1
      %p69 = por %p67, %p68
      %p70 = scmp.ne.s32.totalorder %s62, %s65
      %p71 = scmp.eq.s32.totalorder %s26, 0
      %p72 = por %p70, %p71
      %p73 = scmp.ne.s32.totalorder %s62, %s65
      %p74 = scmp.eq.s32.totalorder %s31, 1
      %p75 = por %p73, %p74
      %p76 = scmp.ne.s32.totalorder %s65, %s66
      %p77 = scmp.eq.s32.totalorder %s31, 0
      %p78 = por %p76, %p77
      %p79 = scmp.ne.s32.totalorder %s65, %s66
      %p80 = scmp.eq.s32.totalorder %s32, 1
      %p81 = por %p79, %p80
      %p83 = scmp.ne.s32.totalorder %s66, %s82
      %p84 = scmp.eq.s32.totalorder %s32, 0
      %p85 = por %p83, %p84
      %s87 = sadd.s32 %s86, 1
      %p90 = scmp.eq.s32.totalorder %s26, 1
      %p91 = scmp.ne.s32.totalorder %s86, %s88
      %p92 = scmp.eq.s32.totalorder %s26, 0
      %p93 = por %p91, %p92
      %p94 = scmp.ne.s32.totalorder %s86, %s88
      %p95 = scmp.eq.s32.totalorder %s31, 1
      %p96 = por %p94, %p95
      %p97 = scmp.ne.s32.totalorder %s88, %s89
      %p98 = scmp.eq.s32.totalorder %s31, 0
      %p99 = por %p97, %p98
      %p100 = scmp.ne.s32.totalorder %s88, %s89
      %p101 = scmp.eq.s32.totalorder %s32, 1
      %p102 = por %p100, %p101
      %p104 = scmp.ne.s32.totalorder %s89, %s103
      %p105 = scmp.eq.s32.totalorder %s32, 0
      %p106 = por %p104, %p105
      %s108 = sadd.s32 %s107, 1
      %p111 = scmp.eq.s32.totalorder %s26, 1
      %p112 = scmp.ne.s32.totalorder %s107, %s109
      %p113 = scmp.eq.s32.totalorder %s26, 0
      %p114 = por %p112, %p113
      %p115 = scmp.ne.s32.totalorder %s107, %s109
      %p116 = scmp.eq.s32.totalorder %s31, 1
      %p117 = por %p115, %p116
      %p118 = scmp.ne.s32.totalorder %s109, %s110
      %p119 = scmp.eq.s32.totalorder %s31, 0
      %p120 = por %p118, %p119
      %p121 = scmp.ne.s32.totalorder %s109, %s110
      %p122 = scmp.eq.s32.totalorder %s32, 1
      %p123 = por %p121, %p122
      %p125 = scmp.ne.s32.totalorder %s110, %s124
      %p126 = scmp.eq.s32.totalorder %s32, 0
      %p127 = por %p125, %p126
      %s129 = sadd.s32 %s128, 1
      %p132 = scmp.eq.s32.totalorder %s26, 1
      %p133 = scmp.ne.s32.totalorder %s128, %s130
      %p134 = scmp.eq.s32.totalorder %s26, 0
      %p135 = por %p133, %p134
      %p136 = scmp.ne.s32.totalorder %s128, %s130
      %p137 = scmp.eq.s32.totalorder %s31, 1
      %p138 = por %p136, %p137
      %p139 = scmp.ne.s32.totalorder %s130, %s131
      %p140 = scmp.eq.s32.totalorder %s31, 0
      %p141 = por %p139, %p140
      %p142 = scmp.ne.s32.totalorder %s130, %s131
      %p143 = scmp.eq.s32.totalorder %s32, 1
      %p144 = por %p142, %p143
      %p146 = scmp.ne.s32.totalorder %s131, %s145
      %p147 = scmp.eq.s32.totalorder %s32, 0
      %p148 = por %p146, %p147
      %s150 = sadd.s32 %s149, 1
      %p153 = scmp.eq.s32.totalorder %s26, 1
      %p154 = scmp.ne.s32.totalorder %s149, %s151
      %p155 = scmp.eq.s32.totalorder %s26, 0
      %p156 = por %p154, %p155
      %p157 = scmp.ne.s32.totalorder %s149, %s151
      %p158 = scmp.eq.s32.totalorder %s31, 1
      %p159 = por %p157, %p158
      %p160 = scmp.ne.s32.totalorder %s151, %s152
      %p161 = scmp.eq.s32.totalorder %s31, 0
      %p162 = por %p160, %p161
      %p163 = scmp.ne.s32.totalorder %s151, %s152
      %p164 = scmp.eq.s32.totalorder %s32, 1
      %p165 = por %p163, %p164
      %p167 = scmp.ne.s32.totalorder %s152, %s166
      %p168 = scmp.eq.s32.totalorder %s32, 0
      %p169 = por %p167, %p168
      %s171 = sadd.s32 %s170, 1
      %p174 = scmp.eq.s32.totalorder %s26, 1
      %p175 = scmp.ne.s32.totalorder %s170, %s172
      %p176 = scmp.eq.s32.totalorder %s26, 0
      %p177 = por %p175, %p176
      %p178 = scmp.ne.s32.totalorder %s170, %s172
      %p179 = scmp.eq.s32.totalorder %s31, 1
      %p180 = por %p178, %p179
      %p181 = scmp.ne.s32.totalorder %s172, %s173
      %p182 = scmp.eq.s32.totalorder %s31, 0
      %p183 = por %p181, %p182
      %p184 = scmp.ne.s32.totalorder %s172, %s173
      %p185 = scmp.eq.s32.totalorder %s32, 1
      %p186 = por %p184, %p185
      %p188 = scmp.ne.s32.totalorder %s173, %s187
      %p189 = scmp.eq.s32.totalorder %s32, 0
      %p190 = por %p188, %p189
      %s192 = sadd.s32 %s191, 1
      %p195 = scmp.eq.s32.totalorder %s26, 1
      %p196 = scmp.ne.s32.totalorder %s191, %s193
      %p197 = scmp.eq.s32.totalorder %s26, 0
      %p198 = por %p196, %p197
      %p199 = scmp.ne.s32.totalorder %s191, %s193
      %p200 = scmp.eq.s32.totalorder %s31, 1
      %p201 = por %p199, %p200
      %p202 = scmp.ne.s32.totalorder %s193, %s194
      %p203 = scmp.eq.s32.totalorder %s31, 0
      %p204 = por %p202, %p203
      %p205 = scmp.ne.s32.totalorder %s193, %s194
      %p206 = scmp.eq.s32.totalorder %s32, 1
      %p207 = por %p205, %p206
      %p209 = scmp.ne.s32.totalorder %s194, %s208
      %p210 = scmp.eq.s32.totalorder %s32, 0
      %p211 = por %p209, %p210
      %s213 = sadd.s32 %s212, 1
      %p216 = scmp.eq.s32.totalorder %s26, 1
      %p217 = scmp.ne.s32.totalorder %s212, %s214
      %p218 = scmp.eq.s32.totalorder %s26, 0
      %p219 = por %p217, %p218
      %p220 = scmp.ne.s32.totalorder %s212, %s214
      %p221 = scmp.eq.s32.totalorder %s31, 1
      %p222 = por %p220, %p221
      %p223 = scmp.ne.s32.totalorder %s214, %s215
      %p224 = scmp.eq.s32.totalorder %s31, 0
      %p225 = por %p223, %p224
      %p226 = scmp.ne.s32.totalorder %s214, %s215
      %p227 = scmp.eq.s32.totalorder %s32, 1
      %p228 = por %p226, %p227
      %p230 = scmp.ne.s32.totalorder %s215, %s229
      %p231 = scmp.eq.s32.totalorder %s32, 0
      %p232 = por %p230, %p231
      %s234 = sadd.s32 %s233, 1
      %p237 = scmp.eq.s32.totalorder %s26, 1
      %p238 = scmp.ne.s32.totalorder %s233, %s235
      %p239 = scmp.eq.s32.totalorder %s26, 0
      %p240 = por %p238, %p239
      %p241 = scmp.ne.s32.totalorder %s233, %s235
      %p242 = scmp.eq.s32.totalorder %s31, 1
      %p243 = por %p241, %p242
      %p244 = scmp.ne.s32.totalorder %s235, %s236
      %p245 = scmp.eq.s32.totalorder %s31, 0
      %p246 = por %p244, %p245
      %p247 = scmp.ne.s32.totalorder %s235, %s236
      %p248 = scmp.eq.s32.totalorder %s32, 1
      %p249 = por %p247, %p248
      %p251 = scmp.ne.s32.totalorder %s236, %s250
      %p252 = scmp.eq.s32.totalorder %s32, 0
      %p253 = por %p251, %p252
      %s255 = sadd.s32 %s254, 1
      %p258 = scmp.eq.s32.totalorder %s26, 1
      %p259 = scmp.ne.s32.totalorder %s254, %s256
      %p260 = scmp.eq.s32.totalorder %s26, 0
      %p261 = por %p259, %p260
      %p262 = scmp.ne.s32.totalorder %s254, %s256
      %p263 = scmp.eq.s32.totalorder %s31, 1
      %p264 = por %p262, %p263
      %p265 = scmp.ne.s32.totalorder %s256, %s257
      %p266 = scmp.eq.s32.totalorder %s31, 0
      %p267 = por %p265, %p266
      %p268 = scmp.ne.s32.totalorder %s256, %s257
      %p269 = scmp.eq.s32.totalorder %s32, 1
      %p270 = por %p268, %p269
      %p272 = scmp.ne.s32.totalorder %s257, %s271
      %p273 = scmp.eq.s32.totalorder %s32, 0
      %p274 = por %p272, %p273
      %s276 = sadd.s32 %s275, 1
      %p279 = scmp.eq.s32.totalorder %s26, 1
      %p280 = scmp.ne.s32.totalorder %s275, %s277
      %p281 = scmp.eq.s32.totalorder %s26, 0
      %p282 = por %p280, %p281
      %p283 = scmp.ne.s32.totalorder %s275, %s277
      %p284 = scmp.eq.s32.totalorder %s31, 1
      %p285 = por %p283, %p284
      %p286 = scmp.ne.s32.totalorder %s277, %s278
      %p287 = scmp.eq.s32.totalorder %s31, 0
      %p288 = por %p286, %p287
      %p289 = scmp.ne.s32.totalorder %s277, %s278
      %p290 = scmp.eq.s32.totalorder %s32, 1
      %p291 = por %p289, %p290
      %p293 = scmp.ne.s32.totalorder %s278, %s292
      %p294 = scmp.eq.s32.totalorder %s32, 0
      %p295 = por %p293, %p294
      %s297 = sadd.s32 %s296, 1
      %p300 = scmp.eq.s32.totalorder %s26, 1
      %p301 = scmp.ne.s32.totalorder %s296, %s298
      %p302 = scmp.eq.s32.totalorder %s26, 0
      %p303 = por %p301, %p302
      %p304 = scmp.ne.s32.totalorder %s296, %s298
      %p305 = scmp.eq.s32.totalorder %s31, 1
      %p306 = por %p304, %p305
      %p307 = scmp.ne.s32.totalorder %s298, %s299
      %p308 = scmp.eq.s32.totalorder %s31, 0
      %p309 = por %p307, %p308
      %p310 = scmp.ne.s32.totalorder %s298, %s299
      %p311 = scmp.eq.s32.totalorder %s32, 1
      %p312 = por %p310, %p311
      %p314 = scmp.ne.s32.totalorder %s299, %s313
      %p315 = scmp.eq.s32.totalorder %s32, 0
      %p316 = por %p314, %p315
      %s318 = sadd.s32 %s317, 1
      %p321 = scmp.eq.s32.totalorder %s26, 1
      %p322 = scmp.ne.s32.totalorder %s317, %s319
      %p323 = scmp.eq.s32.totalorder %s26, 0
      %p324 = por %p322, %p323
      %p325 = scmp.ne.s32.totalorder %s317, %s319
      %p326 = scmp.eq.s32.totalorder %s31, 1
      %p327 = por %p325, %p326
      %p328 = scmp.ne.s32.totalorder %s319, %s320
      %p329 = scmp.eq.s32.totalorder %s31, 0
      %p330 = por %p328, %p329
      %p331 = scmp.ne.s32.totalorder %s319, %s320
      %p332 = scmp.eq.s32.totalorder %s32, 1
      %p333 = por %p331, %p332
      %p335 = scmp.ne.s32.totalorder %s320, %s334
      %p336 = scmp.eq.s32.totalorder %s32, 0
      %p337 = por %p335, %p336
      %s339 = sadd.s32 %s338, 1
      %p342 = scmp.eq.s32.totalorder %s26, 1
      %p343 = scmp.ne.s32.totalorder %s338, %s340
      %p344 = scmp.eq.s32.totalorder %s26, 0
      %p345 = por %p343, %p344
      %p346 = scmp.ne.s32.totalorder %s338, %s340
      %p347 = scmp.eq.s32.totalorder %s31, 1
      %p348 = por %p346, %p347
      %p349 = scmp.ne.s32.totalorder %s340, %s341
      %p350 = scmp.eq.s32.totalorder %s31, 0
      %p351 = por %p349, %p350
      %p352 = scmp.ne.s32.totalorder %s340, %s341
      %p353 = scmp.eq.s32.totalorder %s32, 1
      %p354 = por %p352, %p353
      %p356 = scmp.ne.s32.totalorder %s341, %s355
      %p357 = scmp.eq.s32.totalorder %s32, 0
      %p358 = por %p356, %p357
      %s360 = sadd.s32 %s359, 1
      %p363 = scmp.eq.s32.totalorder %s26, 1
      %p364 = scmp.ne.s32.totalorder %s359, %s361
      %p365 = scmp.eq.s32.totalorder %s26, 0
      %p366 = por %p364, %p365
      %p367 = scmp.ne.s32.totalorder %s359, %s361
      %p368 = scmp.eq.s32.totalorder %s31, 1
      %p369 = por %p367, %p368
      %p370 = scmp.ne.s32.totalorder %s361, %s362
      %p371 = scmp.eq.s32.totalorder %s31, 0
      %p372 = por %p370, %p371
      %p373 = scmp.ne.s32.totalorder %s361, %s362
      %p374 = scmp.eq.s32.totalorder %s32, 1
      %p375 = por %p373, %p374
      %p377 = scmp.ne.s32.totalorder %s362, %s376
      %p378 = scmp.eq.s32.totalorder %s32, 0
      %p379 = por %p377, %p378
      %s381 = sadd.s32 %s380, 1
      %p384 = scmp.eq.s32.totalorder %s26, 1
      %p385 = scmp.ne.s32.totalorder %s380, %s382
      %p386 = scmp.eq.s32.totalorder %s26, 0
      %p387 = por %p385, %p386
      %p388 = scmp.ne.s32.totalorder %s380, %s382
      %p389 = scmp.eq.s32.totalorder %s31, 1
      %p390 = por %p388, %p389
      %p391 = scmp.ne.s32.totalorder %s382, %s383
      %p392 = scmp.eq.s32.totalorder %s31, 0
      %p393 = por %p391, %p392
      %p394 = scmp.ne.s32.totalorder %s382, %s383
      %p395 = scmp.eq.s32.totalorder %s32, 1
      %p396 = por %p394, %p395
      %p398 = scmp.ne.s32.totalorder %s383, %s397
      %p399 = scmp.eq.s32.totalorder %s32, 0
      %p400 = por %p398, %p399
      %s401 = ssub.s32 %s26, %s33
      %p402 = scmp.eq.s32.totalorder %s401, 0
      %s404 = sadd.s32 %s403, 1
      %s405 = scalar_select %p402, %s403, %s404
      %p408 = pneg %p402
      %p409 = scmp.eq.s32.totalorder %s26, 1
      %p410 = por %p408, %p409
      %p411 = scmp.ne.s32.totalorder %s403, %s406
      %p412 = scmp.eq.s32.totalorder %s26, 0
      %p413 = por %p411, %p412
      %p414 = scmp.ne.s32.totalorder %s403, %s406
      %p415 = scmp.eq.s32.totalorder %s31, 1
      %p416 = por %p414, %p415
      %p417 = scmp.ne.s32.totalorder %s406, %s407
      %p418 = scmp.eq.s32.totalorder %s31, 0
      %p419 = por %p417, %p418
      %p420 = scmp.ne.s32.totalorder %s406, %s407
      %p421 = scmp.eq.s32.totalorder %s32, 1
      %p422 = por %p420, %p421
      %p424 = scmp.ne.s32.totalorder %s407, %s423
      %p425 = scmp.eq.s32.totalorder %s32, 0
      %p426 = por %p424, %p425
      %p427 = scmp.le.s32.totalorder 1, %s26
      %p428 = scmp.lt.s32.totalorder %s26, 3
      %p429 = pnand %p427, %p428
      %p430 = pneg %p429
      // Predicated region
      $region9: #{cell_forward.1} parent=5 // pred_check
        _
      $region10: #{cell_forward.1} parent=5 // pred_check_branch
        %432 = sbr.rel (%p429) target = $region12
      $region11: #{cell_forward.1} parent=5 // pred_region
        %s433 = ssub.s32 %s26, 1
        // Predicated region
        $region13: #{cell_forward.1} parent=11 // pred_check
          %p434 = pneg %p99
        $region14: #{cell_forward.1} parent=11 // pred_check_branch
          %436 = sbr.rel (%p434) target = $region16
        $region15: #{cell_forward.1} parent=11 // pred_region
          _
        $region16: #{cell_forward.1} parent=11 // pred_fallthru
          _
        // Predicated region
        $region17: #{cell_forward.1} parent=11 // pred_check
          %p437 = pneg %p120
        $region18: #{cell_forward.1} parent=11 // pred_check_branch
          %439 = sbr.rel (%p437) target = $region20
        $region19: #{cell_forward.1} parent=11 // pred_region
          _
        $region20: #{cell_forward.1} parent=11 // pred_fallthru
          _
        // Predicated region
        $region21: #{cell_forward.1} parent=11 // pred_check
          %p440 = pneg %p141
        $region22: #{cell_forward.1} parent=11 // pred_check_branch
          %442 = sbr.rel (%p440) target = $region24
        $region23: #{cell_forward.1} parent=11 // pred_region
          _
        $region24: #{cell_forward.1} parent=11 // pred_fallthru
          _
        // Predicated region
        $region25: #{cell_forward.1} parent=11 // pred_check
          %p443 = pneg %p162
        $region26: #{cell_forward.1} parent=11 // pred_check_branch
          %445 = sbr.rel (%p443) target = $region28
        $region27: #{cell_forward.1} parent=11 // pred_region
          _
        $region28: #{cell_forward.1} parent=11 // pred_fallthru
          _
        // Predicated region
        $region29: #{cell_forward.1} parent=11 // pred_check
          %p446 = pneg %p183
        $region30: #{cell_forward.1} parent=11 // pred_check_branch
          %448 = sbr.rel (%p446) target = $region32
        $region31: #{cell_forward.1} parent=11 // pred_region
          _
        $region32: #{cell_forward.1} parent=11 // pred_fallthru
          _
        // Predicated region
        $region33: #{cell_forward.1} parent=11 // pred_check
          %p449 = pneg %p204
        $region34: #{cell_forward.1} parent=11 // pred_check_branch
          %451 = sbr.rel (%p449) target = $region36
        $region35: #{cell_forward.1} parent=11 // pred_region
          _
        $region36: #{cell_forward.1} parent=11 // pred_fallthru
          _
        // Predicated region
        $region37: #{cell_forward.1} parent=11 // pred_check
          %p452 = pneg %p225
        $region38: #{cell_forward.1} parent=11 // pred_check_branch
          %454 = sbr.rel (%p452) target = $region40
        $region39: #{cell_forward.1} parent=11 // pred_region
          _
        $region40: #{cell_forward.1} parent=11 // pred_fallthru
          _
        // Predicated region
        $region41: #{cell_forward.1} parent=11 // pred_check
          %p455 = pneg %p246
        $region42: #{cell_forward.1} parent=11 // pred_check_branch
          %457 = sbr.rel (%p455) target = $region44
        $region43: #{cell_forward.1} parent=11 // pred_region
          _
        $region44: #{cell_forward.1} parent=11 // pred_fallthru
          _
        // Predicated region
        $region45: #{cell_forward.1} parent=11 // pred_check
          %p458 = pneg %p267
        $region46: #{cell_forward.1} parent=11 // pred_check_branch
          %460 = sbr.rel (%p458) target = $region48
        $region47: #{cell_forward.1} parent=11 // pred_region
          _
        $region48: #{cell_forward.1} parent=11 // pred_fallthru
          _
        // Predicated region
        $region49: #{cell_forward.1} parent=11 // pred_check
          %p461 = pneg %p288
        $region50: #{cell_forward.1} parent=11 // pred_check_branch
          %463 = sbr.rel (%p461) target = $region52
        $region51: #{cell_forward.1} parent=11 // pred_region
          _
        $region52: #{cell_forward.1} parent=11 // pred_fallthru
          _
        // Predicated region
        $region53: #{cell_forward.1} parent=11 // pred_check
          %p464 = pneg %p309
        $region54: #{cell_forward.1} parent=11 // pred_check_branch
          %466 = sbr.rel (%p464) target = $region56
        $region55: #{cell_forward.1} parent=11 // pred_region
          _
        $region56: #{cell_forward.1} parent=11 // pred_fallthru
          _
        // Predicated region
        $region57: #{cell_forward.1} parent=11 // pred_check
          %p467 = pneg %p330
        $region58: #{cell_forward.1} parent=11 // pred_check_branch
          %469 = sbr.rel (%p467) target = $region60
        $region59: #{cell_forward.1} parent=11 // pred_region
          _
        $region60: #{cell_forward.1} parent=11 // pred_fallthru
          _
        // Predicated region
        $region61: #{cell_forward.1} parent=11 // pred_check
          %p470 = pneg %p351
        $region62: #{cell_forward.1} parent=11 // pred_check_branch
          %472 = sbr.rel (%p470) target = $region64
        $region63: #{cell_forward.1} parent=11 // pred_region
          _
        $region64: #{cell_forward.1} parent=11 // pred_fallthru
          _
        // Predicated region
        $region65: #{cell_forward.1} parent=11 // pred_check
          %p473 = pneg %p372
        $region66: #{cell_forward.1} parent=11 // pred_check_branch
          %475 = sbr.rel (%p473) target = $region68
        $region67: #{cell_forward.1} parent=11 // pred_region
          _
        $region68: #{cell_forward.1} parent=11 // pred_fallthru
          _
        // Predicated region
        $region69: #{cell_forward.1} parent=11 // pred_check
          %p476 = pneg %p393
        $region70: #{cell_forward.1} parent=11 // pred_check_branch
          %478 = sbr.rel (%p476) target = $region72
        $region71: #{cell_forward.1} parent=11 // pred_region
          _
        $region72: #{cell_forward.1} parent=11 // pred_fallthru
          _
      $region12: #{cell_forward.1} parent=5 // pred_fallthru
        _
      %p479 = scmp.lt.s32.totalorder %s26, 2
      // Predicated region
      $region73: #{cell_forward.1} parent=5 // pred_check
        %p480 = pneg %p479
      $region74: #{cell_forward.1} parent=5 // pred_check_branch
        %482 = sbr.rel (%p480) target = $region76
      $region75: #{cell_forward.1} parent=5 // pred_region
        // Predicated region
        $region77: #{cell_forward.1} parent=75 // pred_check
          %p483 = pneg %p46
        $region78: #{cell_forward.1} parent=75 // pred_check_branch
          %485 = sbr.rel (%p483) target = $region80
        $region79: #{cell_forward.1} parent=75 // pred_region
          %p486 = scmp.lt.s32.totalorder %s26, 1
          %s487 = scalar_select %p486, %s26, 1
          %s488 = smul.addr %s487, 8
          %s489 = smul.addr %s488, 8
          %s490 = scalar_lea.vmem %s0, %s489
        $region80: #{cell_forward.1} parent=75 // pred_fallthru
          _
        // Predicated region
        $region81: #{cell_forward.1} parent=75 // pred_check
          %p491 = pneg %p72
        $region82: #{cell_forward.1} parent=75 // pred_check_branch
          %493 = sbr.rel (%p491) target = $region84
        $region83: #{cell_forward.1} parent=75 // pred_region
          %p494 = scmp.lt.s32.totalorder %s26, 1
          %s495 = scalar_select %p494, %s26, 1
          %s496 = smul.addr %s495, 8
          %s497 = smul.addr %s496, 8
          %s498 = scalar_lea.vmem %s1, %s497
        $region84: #{cell_forward.1} parent=75 // pred_fallthru
          _
      $region76: #{cell_forward.1} parent=5 // pred_fallthru
        _
      %p499 = scmp.le.s32.totalorder 1, %s26
      %p500 = scmp.lt.s32.totalorder %s26, 3
      %p501 = pnand %p499, %p500
      %p502 = pneg %p501
      // Predicated region
      $region85: #{cell_forward.1} parent=5 // pred_check
        _
      $region86: #{cell_forward.1} parent=5 // pred_check_branch
        %504 = sbr.rel (%p501) target = $region88
      $region87: #{cell_forward.1} parent=5 // pred_region
        %s505 = ssub.s32 %s26, 1
        %p506 = scmp.lt.s32.totalorder %s31, 1
        %s507 = scalar_select %p506, %s31, 1
        %s508 = smul.addr %s507, 8
        %s509 = smul.addr %s508, 8
        %s510 = scalar_lea.vmem %s0, %s509
        %p511 = pneg %p52
        %p512 = pneg %p49
        %p513 = scmp.lt.s32.totalorder %s31, 1
        %s514 = scalar_select %p513, %s31, 1
        %s515 = smul.addr %s514, 8
        %s516 = smul.addr %s515, 8
        %s517 = scalar_lea.vmem %s1, %s516
        %p518 = pneg %p78
        %p519 = pneg %p75
        %p520 = pneg %p99
        %p521 = pneg %p96
        %p522 = pneg %p120
        %p523 = pneg %p117
        %p524 = pneg %p141
        %p525 = pneg %p138
        %p526 = pneg %p162
        %p527 = pneg %p159
        %p528 = pneg %p183
        %p529 = pneg %p180
        %p530 = pneg %p204
        %p531 = pneg %p201
        %p532 = pneg %p225
        %p533 = pneg %p222
        %p534 = pneg %p246
        %p535 = pneg %p243
        %p536 = pneg %p267
        %p537 = pneg %p264
        %p538 = pneg %p288
        %p539 = pneg %p285
        %p540 = pneg %p309
        %p541 = pneg %p306
        %p542 = pneg %p330
        %p543 = pneg %p327
        %p544 = pneg %p351
        %p545 = pneg %p348
        %p546 = pneg %p372
        %p547 = pneg %p369
        %p548 = pneg %p393
        %p549 = pneg %p390
        %p550 = pneg %p419
        %p551 = pneg %p416
        %s552 = sand.u32 %s406, 1
        %s553 = scalar_lea.sflag [#allocation5], %s552
        %s554 = sand.u32 %s406, 1
        %s555 = smul.addr %s554, 64
        %s556 = scalar_lea.vmem [#allocation4], %s555
        %p557 = scmp.lt.s32.totalorder %s31, 1
        %s558 = scalar_select %p557, %s31, 1
        %s559 = smul.addr %s558, 8
        %s560 = smul.addr %s559, 8
        %s561 = scalar_lea.vmem %s0, %s560
        %p562 = scmp.lt.s32.totalorder %s31, 1
        %s563 = scalar_select %p562, %s31, 1
        %s564 = smul.addr %s563, 8
        %s565 = smul.addr %s564, 8
        %s566 = scalar_lea.vmem %s1, %s565
        %vm567 = vcmask 130048
        %568 = vst.msk [vmem:[#allocation2] sm:$0xff] %vm567, 0.0
        %vm569 = vcmask 125952
        %570 = vst.msk [vmem:[#allocation2 + $0x8] sm:$0xf] %vm569, 0.0
        %571 = vst.msk [vmem:[#allocation2 + $0x10] sm:$0xff] %vm567, 0.0
        %572 = vst.msk [vmem:[#allocation2 + $0x18] sm:$0xf] %vm569, 0.0
        %s573 = scalar_lea.vmem [#allocation2], 160
        %574 = vst.msk [vmem:[%s573] sm:$0xff] %vm567, 0.0
        %575 = vst.msk [vmem:[%s573 + $0x8] sm:$0xf] %vm569, 0.0
        %576 = vst.msk [vmem:[%s573 + $0x10] sm:$0xff] %vm567, 0.0
        %577 = vst.msk [vmem:[%s573 + $0x18] sm:$0xf] %vm569, 0.0
        %s578 = scalar_lea.vmem [#allocation2], 32
        %vm579 = vcmask 123904
        %580 = vst.msk [vmem:[%s578] sm:$0x3] %vm579, 0.0
        %581 = vst.msk [vmem:[%s578 + $0x10] sm:$0x3] %vm579, 0.0
        %582 = vst.msk [vmem:[%s578 + $0x20] sm:$0x3] %vm579, 0.0
        %583 = vst.msk [vmem:[%s578 + $0x30] sm:$0x3] %vm579, 0.0
        %584 = vst.msk [vmem:[%s578 + $0x40] sm:$0x3] %vm579, 0.0
        %585 = vst.msk [vmem:[%s578 + $0x50] sm:$0x3] %vm579, 0.0
        %586 = vst.msk [vmem:[%s578 + $0x60] sm:$0x3] %vm579, 0.0
        %587 = vst.msk [vmem:[%s578 + $0x70] sm:$0x3] %vm579, 0.0
        %588 = vst.msk [vmem:[%s578 + $0xa] sm:$0x3] %vm579, 0.0
        %589 = vst.msk [vmem:[%s578 + $0x1a] sm:$0x3] %vm579, 0.0
        %590 = vst.msk [vmem:[%s578 + $0x2a] sm:$0x3] %vm579, 0.0
        %591 = vst.msk [vmem:[%s578 + $0x3a] sm:$0x3] %vm579, 0.0
        %592 = vst.msk [vmem:[%s578 + $0x4a] sm:$0x3] %vm579, 0.0
        %593 = vst.msk [vmem:[%s578 + $0x5a] sm:$0x3] %vm579, 0.0
        %594 = vst.msk [vmem:[%s578 + $0x6a] sm:$0x3] %vm579, 0.0
        %595 = vst.msk [vmem:[%s578 + $0x7a] sm:$0x3] %vm579, 0.0
        %vm596 = vcmask 64512
        %597 = vst.msk [vmem:[#allocation3] sm:$0xff] %vm596, -inf
        %vm598 = vcmask 58368
        %599 = vst.msk [vmem:[#allocation3 + $0x8] sm:$0x3] %vm598, -inf
        %s600 = scalar_lea.vmem [#allocation3], 144
        %601 = vst.msk [vmem:[%s600] sm:$0xff] %vm596, -inf
        %602 = vst.msk [vmem:[%s600 + $0x8] sm:$0x3] %vm598, -inf
        %s603 = scalar_lea.vmem [#allocation3], 16
        %vm604 = vcmask 57344
        %605 = vst.msk [vmem:[%s603] sm:$0x1] %vm604, -inf
        %606 = vst.msk [vmem:[%s603 + $0x10] sm:$0x1] %vm604, -inf
        %607 = vst.msk [vmem:[%s603 + $0x20] sm:$0x1] %vm604, -inf
        %608 = vst.msk [vmem:[%s603 + $0x30] sm:$0x1] %vm604, -inf
        %609 = vst.msk [vmem:[%s603 + $0x40] sm:$0x1] %vm604, -inf
        %610 = vst.msk [vmem:[%s603 + $0x50] sm:$0x1] %vm604, -inf
        %611 = vst.msk [vmem:[%s603 + $0x60] sm:$0x1] %vm604, -inf
        %612 = vst.msk [vmem:[%s603 + $0x70] sm:$0x1] %vm604, -inf
        %613 = vst.msk [vmem:[%s603 + $0x9] sm:$0x1] %vm604, -inf
        %614 = vst.msk [vmem:[%s603 + $0x19] sm:$0x1] %vm604, -inf
        %615 = vst.msk [vmem:[%s603 + $0x29] sm:$0x1] %vm604, -inf
        %616 = vst.msk [vmem:[%s603 + $0x39] sm:$0x1] %vm604, -inf
        %617 = vst.msk [vmem:[%s603 + $0x49] sm:$0x1] %vm604, -inf
        %618 = vst.msk [vmem:[%s603 + $0x59] sm:$0x1] %vm604, -inf
        %619 = vst.msk [vmem:[%s603 + $0x69] sm:$0x1] %vm604, -inf
        %620 = vst.msk [vmem:[%s603 + $0x79] sm:$0x1] %vm604, -inf
        %v621 = vld [vmem:[%s561] sm:$0xff]
        %v622 = vld [vmem:[%s561 + $0x8] sm:$0xff]
        %v623 = vld [vmem:[%s561 + $0x10] sm:$0xff]
        %v624 = vld [vmem:[%s561 + $0x18] sm:$0xff]
        %v625 = vld [vmem:[%s561 + $0x20] sm:$0xff]
        %v626 = vld [vmem:[%s561 + $0x28] sm:$0xff]
        %v627 = vld [vmem:[%s561 + $0x30] sm:$0xff]
        %v628 = vld [vmem:[%s561 + $0x38] sm:$0xff]
        %v629 = vmax.f32 %v621, 0.0
        %v630 = vmax.f32 %v622, 0.0
        %v631 = vmax.f32 %v623, 0.0
        %v632 = vmax.f32 %v624, 0.0
        %v633 = vmax.f32 %v625, 0.0
        %v634 = vmax.f32 %v626, 0.0
        %v635 = vmax.f32 %v627, 0.0
        %v636 = vmax.f32 %v628, 0.0
        %v637 = vld [vmem:[%s566] sm:$0xff]
        %v638 = vld [vmem:[%s566 + $0x8] sm:$0xff]
        %v639 = vld [vmem:[%s566 + $0x10] sm:$0xff]
        %v640 = vld [vmem:[%s566 + $0x18] sm:$0xff]
        %v641 = vld [vmem:[%s566 + $0x20] sm:$0xff]
        %v642 = vld [vmem:[%s566 + $0x28] sm:$0xff]
        %v643 = vld [vmem:[%s566 + $0x30] sm:$0xff]
        %v644 = vld [vmem:[%s566 + $0x38] sm:$0xff]
        %v645 = vmax.f32 %v637, 0.0
        %v646 = vmax.f32 %v638, 0.0
        %v647 = vmax.f32 %v639, 0.0
        %v648 = vmax.f32 %v640, 0.0
        %v649 = vmax.f32 %v641, 0.0
        %v650 = vmax.f32 %v642, 0.0
        %v651 = vmax.f32 %v643, 0.0
        %v652 = vmax.f32 %v644, 0.0
        %661 = vrot.lane.b32.xlu0 %v645, 4
        %v662 = vpop.permute.xlu0 %661
        %663 = vrot.lane.b32.xlu0 %v646, 4
        %v664 = vpop.permute.xlu0 %663
        %665 = vrot.lane.b32.xlu0 %v647, 4
        %v666 = vpop.permute.xlu0 %665
        %667 = vrot.lane.b32.xlu0 %v648, 4
        %v668 = vpop.permute.xlu0 %667
        %669 = vrot.lane.b32.xlu0 %v649, 4
        %v670 = vpop.permute.xlu0 %669
        %671 = vrot.lane.b32.xlu0 %v650, 4
        %v672 = vpop.permute.xlu0 %671
        %673 = vrot.lane.b32.xlu0 %v651, 4
        %v674 = vpop.permute.xlu0 %673
        %675 = vrot.lane.b32.xlu0 %v652, 4
        %v676 = vpop.permute.xlu0 %675
        %vm685 = vcmask 31744
        %v686 = vsel %vm685, %v629, %v662
        %v687 = vsel %vm685, %v630, %v664
        %v688 = vsel %vm685, %v631, %v666
        %v689 = vsel %vm685, %v632, %v668
        %v690 = vsel %vm685, %v633, %v670
        %v691 = vsel %vm685, %v634, %v672
        %v692 = vsel %vm685, %v635, %v674
        %v693 = vsel %vm685, %v636, %v676
        %v694 = vld [vmem:[%s2] sm:$0xff]
        %v696 = vsel %vm596, %v686, 0
        %v699 = vsel %vm596, %v687, 0
        %v702 = vsel %vm596, %v688, 0
        %v705 = vsel %vm596, %v689, 0
        %v708 = vsel %vm596, %v690, 0
        %v711 = vsel %vm596, %v691, 0
        %v714 = vsel %vm596, %v692, 0
        %v717 = vsel %vm596, %v693, 0
        %719 = vmatprep.subr.mxu0 0.0
        %720 = vmatpush1.msra.mxu0 0.0
        %721 = vmatprep.subr.mxu0 0.0
        %722 = vmatpush1.msra.mxu0 0.0
        %723 = vmatprep.subr.mxu0 0.0
        %724 = vmatpush1.msra.mxu0 0.0
        %725 = vmatprep.subr.mxu0 0.0
        %726 = vmatpush1.msra.mxu0 0.0
        %727 = vmatprep.subr.mxu0 0.0
        %728 = vmatpush1.msra.mxu0 0.0
        %729 = vmatprep.subr.mxu0 0.0
        %730 = vmatpush1.msra.mxu0 0.0
        %731 = vmatprep.subr.mxu0 0.0
        %732 = vmatpush1.msra.mxu0 0.0
        %733 = vmatprep.subr.mxu0 0.0
        %734 = vmatpush1.msra.mxu0 0.0
        %735 = vmatprep.subr.mxu0 0.0
        %736 = vmatpush1.msra.mxu0 0.0
        %737 = vmatprep.subr.mxu0 0.0
        %738 = vmatpush1.msra.mxu0 0.0
        %739 = vmatprep.subr.mxu0 0.0
        %740 = vmatpush1.msra.mxu0 0.0
        %741 = vmatprep.subr.mxu0 0.0
        %742 = vmatpush1.msra.mxu0 0.0
        %743 = vmatprep.subr.mxu0 0.0
        %744 = vmatpush1.msra.mxu0 0.0
        %745 = vmatprep.subr.mxu0 0.0
        %746 = vmatpush1.msra.mxu0 0.0
        %747 = vmatprep.subr.mxu0 0.0
        %748 = vmatpush1.msra.mxu0 0.0
        %749 = vmatprep.subr.mxu0 0.0
        %750 = vmatpush1.msra.mxu0 %v694
        %751 = vmatprep.subr.mxu0 0.0
        %752 = vmatpush2.msra.mxu0 0.0
        %753 = vmatprep.subr.mxu0 0.0
        %754 = vmatpush2.msra.mxu0 0.0
        %755 = vmatprep.subr.mxu0 0.0
        %756 = vmatpush2.msra.mxu0 0.0
        %757 = vmatprep.subr.mxu0 0.0
        %758 = vmatpush2.msra.mxu0 0.0
        %759 = vmatprep.subr.mxu0 0.0
        %760 = vmatpush2.msra.mxu0 0.0
        %761 = vmatprep.subr.mxu0 0.0
        %762 = vmatpush2.msra.mxu0 0.0
        %763 = vmatprep.subr.mxu0 0.0
        %764 = vmatpush2.msra.mxu0 0.0
        %765 = vmatprep.subr.mxu0 0.0
        %766 = vmatpush2.msra.mxu0 0.0
        %767 = vmatprep.subr.mxu0 0.0
        %768 = vmatpush2.msra.mxu0 0.0
        %769 = vmatprep.subr.mxu0 0.0
        %770 = vmatpush2.msra.mxu0 0.0
        %771 = vmatprep.subr.mxu0 0.0
        %772 = vmatpush2.msra.mxu0 0.0
        %773 = vmatprep.subr.mxu0 0.0
        %774 = vmatpush2.msra.mxu0 0.0
        %775 = vmatprep.subr.mxu0 0.0
        %776 = vmatpush2.msra.mxu0 0.0
        %777 = vmatprep.subr.mxu0 0.0
        %778 = vmatpush2.msra.mxu0 0.0
        %779 = vmatprep.subr.mxu0 0.0
        %780 = vmatpush2.msra.mxu0 0.0
        %781 = vmatprep.subr.mxu0 0.0
        %782 = vmatpush2.msra.mxu0 0.0
        %783 = vmatprep.mubr.f32.mxu0 0.0
        %784 = vmatmul.mubr.f32.gmra.mxu0 %v696
        %v785 = vpop.f32.mrf.mxu0
        %v786 = vadd.f32 0.0, %v785
        %v787 = vpop.f32.mrf.mxu0
        %788 = vmatprep.mubr.f32.mxu0 0.0
        %789 = vmatmul.mubr.f32.gmra.mxu0 %v699
        %v790 = vpop.f32.mrf.mxu0
        %v791 = vadd.f32 0.0, %v790
        %v792 = vpop.f32.mrf.mxu0
        %793 = vmatprep.mubr.f32.mxu0 0.0
        %794 = vmatmul.mubr.f32.gmra.mxu0 %v702
        %v795 = vpop.f32.mrf.mxu0
        %v796 = vadd.f32 0.0, %v795
        %v797 = vpop.f32.mrf.mxu0
        %798 = vmatprep.mubr.f32.mxu0 0.0
        %799 = vmatmul.mubr.f32.gmra.mxu0 %v705
        %v800 = vpop.f32.mrf.mxu0
        %v801 = vadd.f32 0.0, %v800
        %v802 = vpop.f32.mrf.mxu0
        %803 = vmatprep.mubr.f32.mxu0 0.0
        %804 = vmatmul.mubr.f32.gmra.mxu0 %v708
        %v805 = vpop.f32.mrf.mxu0
        %v806 = vadd.f32 0.0, %v805
        %v807 = vpop.f32.mrf.mxu0
        %808 = vmatprep.mubr.f32.mxu0 0.0
        %809 = vmatmul.mubr.f32.gmra.mxu0 %v711
        %v810 = vpop.f32.mrf.mxu0
        %v811 = vadd.f32 0.0, %v810
        %v812 = vpop.f32.mrf.mxu0
        %813 = vmatprep.mubr.f32.mxu0 0.0
        %814 = vmatmul.mubr.f32.gmra.mxu0 %v714
        %v815 = vpop.f32.mrf.mxu0
        %v816 = vadd.f32 0.0, %v815
        %v817 = vpop.f32.mrf.mxu0
        %818 = vmatprep.mubr.f32.mxu0 0.0
        %819 = vmatmul.mubr.f32.gmra.mxu0 %v717
        %v820 = vpop.f32.mrf.mxu0
        %v821 = vadd.f32 0.0, %v820
        %v822 = vpop.f32.mrf.mxu0
        %823 = vdwg.mxu0
        %v824 = vld [vmem:[%s3] sm:$0x1]
        %v826 = vlaneseq
        %v827 = vshrl.u32 %v826, 7
        %v828 = vsub.s32 0, %v827
        %v829 = vrot.slane %v824, %v828
        %v831 = vmul.f32 %v786, %v829
        %v832 = vmul.f32 %v791, %v829
        %v833 = vmul.f32 %v796, %v829
        %v834 = vmul.f32 %v801, %v829
        %v835 = vmul.f32 %v806, %v829
        %v836 = vmul.f32 %v811, %v829
        %v837 = vmul.f32 %v816, %v829
        %v838 = vmul.f32 %v821, %v829
        %v839 = vld [vmem:[%s4] sm:$0x1]
        %v841 = vlaneseq
        %v842 = vshrl.u32 %v841, 7
        %v843 = vsub.s32 0, %v842
        %v844 = vrot.slane %v839, %v843
        %v846 = vadd.f32 %v831, %v844
        %v847 = vadd.f32 %v832, %v844
        %v848 = vadd.f32 %v833, %v844
        %v849 = vadd.f32 %v834, %v844
        %v850 = vadd.f32 %v835, %v844
        %v851 = vadd.f32 %v836, %v844
        %v852 = vadd.f32 %v837, %v844
        %v853 = vadd.f32 %v838, %v844
        %854 = vst.msk [vmem:[%s603 + $0x1] sm:$0xff] %vm596, %v846
        %855 = vst.msk [vmem:[%s603 + $0x11] sm:$0xff] %vm596, %v847
        %856 = vst.msk [vmem:[%s603 + $0x21] sm:$0xff] %vm596, %v848
        %857 = vst.msk [vmem:[%s603 + $0x31] sm:$0xff] %vm596, %v849
        %858 = vst.msk [vmem:[%s603 + $0x41] sm:$0xff] %vm596, %v850
        %859 = vst.msk [vmem:[%s603 + $0x51] sm:$0xff] %vm596, %v851
        %860 = vst.msk [vmem:[%s603 + $0x61] sm:$0xff] %vm596, %v852
        %861 = vst.msk [vmem:[%s603 + $0x71] sm:$0xff] %vm596, %v853
        %v862 = vld [vmem:[#allocation3] sm:$0xff]
        %v863 = vld [vmem:[#allocation3 + $0x10] sm:$0xff]
        %v864 = vld [vmem:[#allocation3 + $0x20] sm:$0xff]
        %v865 = vld [vmem:[#allocation3 + $0x30] sm:$0xff]
        %v866 = vld [vmem:[#allocation3 + $0x40] sm:$0xff]
        %v867 = vld [vmem:[#allocation3 + $0x50] sm:$0xff]
        %v868 = vld [vmem:[#allocation3 + $0x60] sm:$0xff]
        %v869 = vld [vmem:[#allocation3 + $0x70] sm:$0xff]
        %v870 = vld [vmem:[#allocation3 + $0x1] sm:$0xff]
        %v871 = vld [vmem:[#allocation3 + $0x11] sm:$0xff]
        %v872 = vld [vmem:[#allocation3 + $0x21] sm:$0xff]
        %v873 = vld [vmem:[#allocation3 + $0x31] sm:$0xff]
        %v874 = vld [vmem:[#allocation3 + $0x41] sm:$0xff]
        %v875 = vld [vmem:[#allocation3 + $0x51] sm:$0xff]
        %v876 = vld [vmem:[#allocation3 + $0x61] sm:$0xff]
        %v877 = vld [vmem:[#allocation3 + $0x71] sm:$0xff]
        %v878 = vmax.f32 %v862, %v870
        %v879 = vmax.f32 %v863, %v871
        %v880 = vmax.f32 %v864, %v872
        %v881 = vmax.f32 %v865, %v873
        %v882 = vmax.f32 %v866, %v874
        %v883 = vmax.f32 %v867, %v875
        %v884 = vmax.f32 %v868, %v876
        %v885 = vmax.f32 %v869, %v877
        %v886 = vld [vmem:[#allocation3 + $0x2] sm:$0xff]
        %v887 = vld [vmem:[#allocation3 + $0x12] sm:$0xff]
        %v888 = vld [vmem:[#allocation3 + $0x22] sm:$0xff]
        %v889 = vld [vmem:[#allocation3 + $0x32] sm:$0xff]
        %v890 = vld [vmem:[#allocation3 + $0x42] sm:$0xff]
        %v891 = vld [vmem:[#allocation3 + $0x52] sm:$0xff]
        %v892 = vld [vmem:[#allocation3 + $0x62] sm:$0xff]
        %v893 = vld [vmem:[#allocation3 + $0x72] sm:$0xff]
        %v894 = vmax.f32 %v878, %v886
        %v895 = vmax.f32 %v879, %v887
        %v896 = vmax.f32 %v880, %v888
        %v897 = vmax.f32 %v881, %v889
        %v898 = vmax.f32 %v882, %v890
        %v899 = vmax.f32 %v883, %v891
        %v900 = vmax.f32 %v884, %v892
        %v901 = vmax.f32 %v885, %v893
        %v902 = vld [vmem:[%s603] sm:$0xff]
        %v903 = vld [vmem:[%s603 + $0x10] sm:$0xff]
        %v904 = vld [vmem:[%s603 + $0x20] sm:$0xff]
        %v905 = vld [vmem:[%s603 + $0x30] sm:$0xff]
        %v906 = vld [vmem:[%s603 + $0x40] sm:$0xff]
        %v907 = vld [vmem:[%s603 + $0x50] sm:$0xff]
        %v908 = vld [vmem:[%s603 + $0x60] sm:$0xff]
        %v909 = vld [vmem:[%s603 + $0x70] sm:$0xff]
        %v910 = vmax.f32 %v894, %v902
        %v911 = vmax.f32 %v895, %v903
        %v912 = vmax.f32 %v896, %v904
        %v913 = vmax.f32 %v897, %v905
        %v914 = vmax.f32 %v898, %v906
        %v915 = vmax.f32 %v899, %v907
        %v916 = vmax.f32 %v900, %v908
        %v917 = vmax.f32 %v901, %v909
        %v918 = vld [vmem:[%s603 + $0x1] sm:$0xff]
        %v919 = vld [vmem:[%s603 + $0x11] sm:$0xff]
        %v920 = vld [vmem:[%s603 + $0x21] sm:$0xff]
        %v921 = vld [vmem:[%s603 + $0x31] sm:$0xff]
        %v922 = vld [vmem:[%s603 + $0x41] sm:$0xff]
        %v923 = vld [vmem:[%s603 + $0x51] sm:$0xff]
        %v924 = vld [vmem:[%s603 + $0x61] sm:$0xff]
        %v925 = vld [vmem:[%s603 + $0x71] sm:$0xff]
        %v926 = vmax.f32 %v910, %v918
        %v927 = vmax.f32 %v911, %v919
        %v928 = vmax.f32 %v912, %v920
        %v929 = vmax.f32 %v913, %v921
        %v930 = vmax.f32 %v914, %v922
        %v931 = vmax.f32 %v915, %v923
        %v932 = vmax.f32 %v916, %v924
        %v933 = vmax.f32 %v917, %v925
        %v934 = vld [vmem:[%s603 + $0x2] sm:$0xff]
        %v935 = vld [vmem:[%s603 + $0x12] sm:$0xff]
        %v936 = vld [vmem:[%s603 + $0x22] sm:$0xff]
        %v937 = vld [vmem:[%s603 + $0x32] sm:$0xff]
        %v938 = vld [vmem:[%s603 + $0x42] sm:$0xff]
        %v939 = vld [vmem:[%s603 + $0x52] sm:$0xff]
        %v940 = vld [vmem:[%s603 + $0x62] sm:$0xff]
        %v941 = vld [vmem:[%s603 + $0x72] sm:$0xff]
        %v942 = vmax.f32 %v926, %v934
        %v943 = vmax.f32 %v927, %v935
        %v944 = vmax.f32 %v928, %v936
        %v945 = vmax.f32 %v929, %v937
        %v946 = vmax.f32 %v930, %v938
        %v947 = vmax.f32 %v931, %v939
        %v948 = vmax.f32 %v932, %v940
        %v949 = vmax.f32 %v933, %v941
        %s950 = scalar_lea.vmem [#allocation3], 32
        %v951 = vld [vmem:[%s950] sm:$0xff]
        %v952 = vld [vmem:[%s950 + $0x10] sm:$0xff]
        %v953 = vld [vmem:[%s950 + $0x20] sm:$0xff]
        %v954 = vld [vmem:[%s950 + $0x30] sm:$0xff]
        %v955 = vld [vmem:[%s950 + $0x40] sm:$0xff]
        %v956 = vld [vmem:[%s950 + $0x50] sm:$0xff]
        %v957 = vld [vmem:[%s950 + $0x60] sm:$0xff]
        %v958 = vld [vmem:[%s950 + $0x70] sm:$0xff]
        %v959 = vmax.f32 %v942, %v951
        %v960 = vmax.f32 %v943, %v952
        %v961 = vmax.f32 %v944, %v953
        %v962 = vmax.f32 %v945, %v954
        %v963 = vmax.f32 %v946, %v955
        %v964 = vmax.f32 %v947, %v956
        %v965 = vmax.f32 %v948, %v957
        %v966 = vmax.f32 %v949, %v958
        %v967 = vld [vmem:[%s950 + $0x1] sm:$0xff]
        %v968 = vld [vmem:[%s950 + $0x11] sm:$0xff]
        %v969 = vld [vmem:[%s950 + $0x21] sm:$0xff]
        %v970 = vld [vmem:[%s950 + $0x31] sm:$0xff]
        %v971 = vld [vmem:[%s950 + $0x41] sm:$0xff]
        %v972 = vld [vmem:[%s950 + $0x51] sm:$0xff]
        %v973 = vld [vmem:[%s950 + $0x61] sm:$0xff]
        %v974 = vld [vmem:[%s950 + $0x71] sm:$0xff]
        %v975 = vmax.f32 %v959, %v967
        %v976 = vmax.f32 %v960, %v968
        %v977 = vmax.f32 %v961, %v969
        %v978 = vmax.f32 %v962, %v970
        %v979 = vmax.f32 %v963, %v971
        %v980 = vmax.f32 %v964, %v972
        %v981 = vmax.f32 %v965, %v973
        %v982 = vmax.f32 %v966, %v974
        %v983 = vld [vmem:[%s950 + $0x2] sm:$0xff]
        %v984 = vld [vmem:[%s950 + $0x12] sm:$0xff]
        %v985 = vld [vmem:[%s950 + $0x22] sm:$0xff]
        %v986 = vld [vmem:[%s950 + $0x32] sm:$0xff]
        %v987 = vld [vmem:[%s950 + $0x42] sm:$0xff]
        %v988 = vld [vmem:[%s950 + $0x52] sm:$0xff]
        %v989 = vld [vmem:[%s950 + $0x62] sm:$0xff]
        %v990 = vld [vmem:[%s950 + $0x72] sm:$0xff]
        %v991 = vmax.f32 %v975, %v983
        %v992 = vmax.f32 %v976, %v984
        %v993 = vmax.f32 %v977, %v985
        %v994 = vmax.f32 %v978, %v986
        %v995 = vmax.f32 %v979, %v987
        %v996 = vmax.f32 %v980, %v988
        %v997 = vmax.f32 %v981, %v989
        %v998 = vmax.f32 %v982, %v990
        %v999 = vld [vmem:[%s14] sm:$0x1]
        %v1000 = vlaneseq
        %v1001 = vshrl.u32 %v1000, 7
        %v1002 = vsub.s32 0, %v1001
        %v1003 = vrot.slane %v999, %v1002
        %v1004 = vmul.f32 %v991, %v1003
        %v1005 = vmul.f32 %v992, %v1003
        %v1006 = vmul.f32 %v993, %v1003
        %v1007 = vmul.f32 %v994, %v1003
        %v1008 = vmul.f32 %v995, %v1003
        %v1009 = vmul.f32 %v996, %v1003
        %v1010 = vmul.f32 %v997, %v1003
        %v1011 = vmul.f32 %v998, %v1003
        %v1012 = vld [vmem:[%s15] sm:$0x1]
        %v1013 = vlaneseq
        %v1014 = vshrl.u32 %v1013, 7
        %v1015 = vsub.s32 0, %v1014
        %v1016 = vrot.slane %v1012, %v1015
        %v1017 = vadd.f32 %v1004, %v1016
        %v1018 = vadd.f32 %v1005, %v1016
        %v1019 = vadd.f32 %v1006, %v1016
        %v1020 = vadd.f32 %v1007, %v1016
        %v1021 = vadd.f32 %v1008, %v1016
        %v1022 = vadd.f32 %v1009, %v1016
        %v1023 = vadd.f32 %v1010, %v1016
        %v1024 = vadd.f32 %v1011, %v1016
        %v1025 = vmax.f32 %v846, 0.0
        %v1026 = vmax.f32 %v847, 0.0
        %v1027 = vmax.f32 %v848, 0.0
        %v1028 = vmax.f32 %v849, 0.0
        %v1029 = vmax.f32 %v850, 0.0
        %v1030 = vmax.f32 %v851, 0.0
        %v1031 = vmax.f32 %v852, 0.0
        %v1032 = vmax.f32 %v853, 0.0
        %1041 = vrot.lane.b32.xlu0 %v1025, 8
        %v1042 = vpop.permute.xlu0 %1041
        %1043 = vrot.lane.b32.xlu0 %v1026, 8
        %v1044 = vpop.permute.xlu0 %1043
        %1045 = vrot.lane.b32.xlu0 %v1027, 8
        %v1046 = vpop.permute.xlu0 %1045
        %1047 = vrot.lane.b32.xlu0 %v1028, 8
        %v1048 = vpop.permute.xlu0 %1047
        %1049 = vrot.lane.b32.xlu0 %v1029, 8
        %v1050 = vpop.permute.xlu0 %1049
        %1051 = vrot.lane.b32.xlu0 %v1030, 8
        %v1052 = vpop.permute.xlu0 %1051
        %1053 = vrot.lane.b32.xlu0 %v1031, 8
        %v1054 = vpop.permute.xlu0 %1053
        %1055 = vrot.lane.b32.xlu0 %v1032, 8
        %v1056 = vpop.permute.xlu0 %1055
        %v1065 = vsel %vm596, %v1025, %v1042
        %v1066 = vsel %vm596, %v1026, %v1044
        %v1067 = vsel %vm596, %v1027, %v1046
        %v1068 = vsel %vm596, %v1028, %v1048
        %v1069 = vsel %vm596, %v1029, %v1050
        %v1070 = vsel %vm596, %v1030, %v1052
        %v1071 = vsel %vm596, %v1031, %v1054
        %v1072 = vsel %vm596, %v1032, %v1056
        %v1073 = vld [vmem:[%s5] sm:$0xff]
        %v1074 = vld [vmem:[%s5 + $0x8] sm:$0x1]
        %1075 = vst.msk [vmem:[%s578 + $0x2] sm:$0xff] %vm567, %v1065
        %1076 = vst.msk [vmem:[%s578 + $0x12] sm:$0xff] %vm567, %v1066
        %1077 = vst.msk [vmem:[%s578 + $0x22] sm:$0xff] %vm567, %v1067
        %1078 = vst.msk [vmem:[%s578 + $0x32] sm:$0xff] %vm567, %v1068
        %1079 = vst.msk [vmem:[%s578 + $0x42] sm:$0xff] %vm567, %v1069
        %1080 = vst.msk [vmem:[%s578 + $0x52] sm:$0xff] %vm567, %v1070
        %1081 = vst.msk [vmem:[%s578 + $0x62] sm:$0xff] %vm567, %v1071
        %1082 = vst.msk [vmem:[%s578 + $0x72] sm:$0xff] %vm567, %v1072
        %s1083 = scalar_lea.vmem [#allocation2], 16
        %v1084 = vld [vmem:[%s1083 + $0x1] sm:$0xff]
        %v1085 = vld [vmem:[%s1083 + $0x11] sm:$0xff]
        %v1086 = vld [vmem:[%s1083 + $0x21] sm:$0xff]
        %v1087 = vld [vmem:[%s1083 + $0x31] sm:$0xff]
        %v1088 = vld [vmem:[%s1083 + $0x41] sm:$0xff]
        %v1089 = vld [vmem:[%s1083 + $0x51] sm:$0xff]
        %v1090 = vld [vmem:[%s1083 + $0x61] sm:$0xff]
        %v1091 = vld [vmem:[%s1083 + $0x71] sm:$0xff]
        %v1092 = vlaneseq
        %v1093 = vshrl.u32 %v1092, 7
        %v1094 = vsub.s32 0, %v1093
        %v1095 = vrot.slane %v1073, %v1094
        %v1096 = vmul.f32 %v1084, %v1095
        %v1097 = vmul.f32 %v1085, %v1095
        %v1098 = vmul.f32 %v1086, %v1095
        %v1099 = vmul.f32 %v1087, %v1095
        %v1100 = vmul.f32 %v1088, %v1095
        %v1101 = vmul.f32 %v1089, %v1095
        %v1102 = vmul.f32 %v1090, %v1095
        %v1103 = vmul.f32 %v1091, %v1095
        %v1104 = vld [vmem:[%s1083 + $0x2] sm:$0xff]
        %v1105 = vld [vmem:[%s1083 + $0x12] sm:$0xff]
        %v1106 = vld [vmem:[%s1083 + $0x22] sm:$0xff]
        %v1107 = vld [vmem:[%s1083 + $0x32] sm:$0xff]
        %v1108 = vld [vmem:[%s1083 + $0x42] sm:$0xff]
        %v1109 = vld [vmem:[%s1083 + $0x52] sm:$0xff]
        %v1110 = vld [vmem:[%s1083 + $0x62] sm:$0xff]
        %v1111 = vld [vmem:[%s1083 + $0x72] sm:$0xff]
        %v1112 = vlaneseq
        %v1113 = vshrl.u32 %v1112, 7
        %v1114 = vsub.s32 1, %v1113
        %v1115 = vrot.slane %v1073, %v1114
        %v1116 = vmul.f32 %v1104, %v1115
        %v1117 = vmul.f32 %v1105, %v1115
        %v1118 = vmul.f32 %v1106, %v1115
        %v1119 = vmul.f32 %v1107, %v1115
        %v1120 = vmul.f32 %v1108, %v1115
        %v1121 = vmul.f32 %v1109, %v1115
        %v1122 = vmul.f32 %v1110, %v1115
        %v1123 = vmul.f32 %v1111, %v1115
        %v1124 = vadd.f32 %v1096, %v1116
        %v1125 = vadd.f32 %v1097, %v1117
        %v1126 = vadd.f32 %v1098, %v1118
        %v1127 = vadd.f32 %v1099, %v1119
        %v1128 = vadd.f32 %v1100, %v1120
        %v1129 = vadd.f32 %v1101, %v1121
        %v1130 = vadd.f32 %v1102, %v1122
        %v1131 = vadd.f32 %v1103, %v1123
        %v1132 = vld [vmem:[%s1083 + $0x3] sm:$0xff]
        %v1133 = vld [vmem:[%s1083 + $0x13] sm:$0xff]
        %v1134 = vld [vmem:[%s1083 + $0x23] sm:$0xff]
        %v1135 = vld [vmem:[%s1083 + $0x33] sm:$0xff]
        %v1136 = vld [vmem:[%s1083 + $0x43] sm:$0xff]
        %v1137 = vld [vmem:[%s1083 + $0x53] sm:$0xff]
        %v1138 = vld [vmem:[%s1083 + $0x63] sm:$0xff]
        %v1139 = vld [vmem:[%s1083 + $0x73] sm:$0xff]
        %v1140 = vlaneseq
        %v1141 = vshrl.u32 %v1140, 7
        %v1142 = vsub.s32 2, %v1141
        %v1143 = vrot.slane %v1073, %v1142
        %v1144 = vmul.f32 %v1132, %v1143
        %v1145 = vmul.f32 %v1133, %v1143
        %v1146 = vmul.f32 %v1134, %v1143
        %v1147 = vmul.f32 %v1135, %v1143
        %v1148 = vmul.f32 %v1136, %v1143
        %v1149 = vmul.f32 %v1137, %v1143
        %v1150 = vmul.f32 %v1138, %v1143
        %v1151 = vmul.f32 %v1139, %v1143
        %v1152 = vadd.f32 %v1124, %v1144
        %v1153 = vadd.f32 %v1125, %v1145
        %v1154 = vadd.f32 %v1126, %v1146
        %v1155 = vadd.f32 %v1127, %v1147
        %v1156 = vadd.f32 %v1128, %v1148
        %v1157 = vadd.f32 %v1129, %v1149
        %v1158 = vadd.f32 %v1130, %v1150
        %v1159 = vadd.f32 %v1131, %v1151
        %v1160 = vld [vmem:[%s578 + $0x1] sm:$0xff]
        %v1161 = vld [vmem:[%s578 + $0x11] sm:$0xff]
        %v1162 = vld [vmem:[%s578 + $0x21] sm:$0xff]
        %v1163 = vld [vmem:[%s578 + $0x31] sm:$0xff]
        %v1164 = vld [vmem:[%s578 + $0x41] sm:$0xff]
        %v1165 = vld [vmem:[%s578 + $0x51] sm:$0xff]
        %v1166 = vld [vmem:[%s578 + $0x61] sm:$0xff]
        %v1167 = vld [vmem:[%s578 + $0x71] sm:$0xff]
        %v1168 = vlaneseq
        %v1169 = vshrl.u32 %v1168, 7
        %v1170 = vsub.s32 3, %v1169
        %v1171 = vrot.slane %v1073, %v1170
        %v1172 = vmul.f32 %v1160, %v1171
        %v1173 = vmul.f32 %v1161, %v1171
        %v1174 = vmul.f32 %v1162, %v1171
        %v1175 = vmul.f32 %v1163, %v1171
        %v1176 = vmul.f32 %v1164, %v1171
        %v1177 = vmul.f32 %v1165, %v1171
        %v1178 = vmul.f32 %v1166, %v1171
        %v1179 = vmul.f32 %v1167, %v1171
        %v1180 = vadd.f32 %v1152, %v1172
        %v1181 = vadd.f32 %v1153, %v1173
        %v1182 = vadd.f32 %v1154, %v1174
        %v1183 = vadd.f32 %v1155, %v1175
        %v1184 = vadd.f32 %v1156, %v1176
        %v1185 = vadd.f32 %v1157, %v1177
        %v1186 = vadd.f32 %v1158, %v1178
        %v1187 = vadd.f32 %v1159, %v1179
        %v1188 = vld [vmem:[%s578 + $0x2] sm:$0xff]
        %v1189 = vld [vmem:[%s578 + $0x12] sm:$0xff]
        %v1190 = vld [vmem:[%s578 + $0x22] sm:$0xff]
        %v1191 = vld [vmem:[%s578 + $0x32] sm:$0xff]
        %v1192 = vld [vmem:[%s578 + $0x42] sm:$0xff]
        %v1193 = vld [vmem:[%s578 + $0x52] sm:$0xff]
        %v1194 = vld [vmem:[%s578 + $0x62] sm:$0xff]
        %v1195 = vld [vmem:[%s578 + $0x72] sm:$0xff]
        %v1196 = vlaneseq
        %v1197 = vshrl.u32 %v1196, 7
        %v1198 = vsub.s32 4, %v1197
        %v1199 = vrot.slane %v1073, %v1198
        %v1200 = vmul.f32 %v1188, %v1199
        %v1201 = vmul.f32 %v1189, %v1199
        %v1202 = vmul.f32 %v1190, %v1199
        %v1203 = vmul.f32 %v1191, %v1199
        %v1204 = vmul.f32 %v1192, %v1199
        %v1205 = vmul.f32 %v1193, %v1199
        %v1206 = vmul.f32 %v1194, %v1199
        %v1207 = vmul.f32 %v1195, %v1199
        %v1208 = vadd.f32 %v1180, %v1200
        %v1209 = vadd.f32 %v1181, %v1201
        %v1210 = vadd.f32 %v1182, %v1202
        %v1211 = vadd.f32 %v1183, %v1203
        %v1212 = vadd.f32 %v1184, %v1204
        %v1213 = vadd.f32 %v1185, %v1205
        %v1214 = vadd.f32 %v1186, %v1206
        %v1215 = vadd.f32 %v1187, %v1207
        %v1216 = vld [vmem:[%s578 + $0x3] sm:$0xff]
        %v1217 = vld [vmem:[%s578 + $0x13] sm:$0xff]
        %v1218 = vld [vmem:[%s578 + $0x23] sm:$0xff]
        %v1219 = vld [vmem:[%s578 + $0x33] sm:$0xff]
        %v1220 = vld [vmem:[%s578 + $0x43] sm:$0xff]
        %v1221 = vld [vmem:[%s578 + $0x53] sm:$0xff]
        %v1222 = vld [vmem:[%s578 + $0x63] sm:$0xff]
        %v1223 = vld [vmem:[%s578 + $0x73] sm:$0xff]
        %v1224 = vlaneseq
        %v1225 = vshrl.u32 %v1224, 7
        %v1226 = vsub.s32 5, %v1225
        %v1227 = vrot.slane %v1073, %v1226
        %v1228 = vmul.f32 %v1216, %v1227
        %v1229 = vmul.f32 %v1217, %v1227
        %v1230 = vmul.f32 %v1218, %v1227
        %v1231 = vmul.f32 %v1219, %v1227
        %v1232 = vmul.f32 %v1220, %v1227
        %v1233 = vmul.f32 %v1221, %v1227
        %v1234 = vmul.f32 %v1222, %v1227
        %v1235 = vmul.f32 %v1223, %v1227
        %v1236 = vadd.f32 %v1208, %v1228
        %v1237 = vadd.f32 %v1209, %v1229
        %v1238 = vadd.f32 %v1210, %v1230
        %v1239 = vadd.f32 %v1211, %v1231
        %v1240 = vadd.f32 %v1212, %v1232
        %v1241 = vadd.f32 %v1213, %v1233
        %v1242 = vadd.f32 %v1214, %v1234
        %v1243 = vadd.f32 %v1215, %v1235
        %s1244 = scalar_lea.vmem [#allocation2], 48
        %v1245 = vld [vmem:[%s1244 + $0x1] sm:$0xff]
        %v1246 = vld [vmem:[%s1244 + $0x11] sm:$0xff]
        %v1247 = vld [vmem:[%s1244 + $0x21] sm:$0xff]
        %v1248 = vld [vmem:[%s1244 + $0x31] sm:$0xff]
        %v1249 = vld [vmem:[%s1244 + $0x41] sm:$0xff]
        %v1250 = vld [vmem:[%s1244 + $0x51] sm:$0xff]
        %v1251 = vld [vmem:[%s1244 + $0x61] sm:$0xff]
        %v1252 = vld [vmem:[%s1244 + $0x71] sm:$0xff]
        %v1253 = vlaneseq
        %v1254 = vshrl.u32 %v1253, 7
        %v1255 = vsub.s32 6, %v1254
        %v1256 = vrot.slane %v1073, %v1255
        %v1257 = vmul.f32 %v1245, %v1256
        %v1258 = vmul.f32 %v1246, %v1256
        %v1259 = vmul.f32 %v1247, %v1256
        %v1260 = vmul.f32 %v1248, %v1256
        %v1261 = vmul.f32 %v1249, %v1256
        %v1262 = vmul.f32 %v1250, %v1256
        %v1263 = vmul.f32 %v1251, %v1256
        %v1264 = vmul.f32 %v1252, %v1256
        %v1265 = vadd.f32 %v1236, %v1257
        %v1266 = vadd.f32 %v1237, %v1258
        %v1267 = vadd.f32 %v1238, %v1259
        %v1268 = vadd.f32 %v1239, %v1260
        %v1269 = vadd.f32 %v1240, %v1261
        %v1270 = vadd.f32 %v1241, %v1262
        %v1271 = vadd.f32 %v1242, %v1263
        %v1272 = vadd.f32 %v1243, %v1264
        %v1273 = vld [vmem:[%s1244 + $0x2] sm:$0xff]
        %v1274 = vld [vmem:[%s1244 + $0x12] sm:$0xff]
        %v1275 = vld [vmem:[%s1244 + $0x22] sm:$0xff]
        %v1276 = vld [vmem:[%s1244 + $0x32] sm:$0xff]
        %v1277 = vld [vmem:[%s1244 + $0x42] sm:$0xff]
        %v1278 = vld [vmem:[%s1244 + $0x52] sm:$0xff]
        %v1279 = vld [vmem:[%s1244 + $0x62] sm:$0xff]
        %v1280 = vld [vmem:[%s1244 + $0x72] sm:$0xff]
        %v1281 = vlaneseq
        %v1282 = vshrl.u32 %v1281, 7
        %v1283 = vsub.s32 7, %v1282
        %v1284 = vrot.slane %v1073, %v1283
        %v1285 = vmul.f32 %v1273, %v1284
        %v1286 = vmul.f32 %v1274, %v1284
        %v1287 = vmul.f32 %v1275, %v1284
        %v1288 = vmul.f32 %v1276, %v1284
        %v1289 = vmul.f32 %v1277, %v1284
        %v1290 = vmul.f32 %v1278, %v1284
        %v1291 = vmul.f32 %v1279, %v1284
        %v1292 = vmul.f32 %v1280, %v1284
        %v1293 = vadd.f32 %v1265, %v1285
        %v1294 = vadd.f32 %v1266, %v1286
        %v1295 = vadd.f32 %v1267, %v1287
        %v1296 = vadd.f32 %v1268, %v1288
        %v1297 = vadd.f32 %v1269, %v1289
        %v1298 = vadd.f32 %v1270, %v1290
        %v1299 = vadd.f32 %v1271, %v1291
        %v1300 = vadd.f32 %v1272, %v1292
        %v1301 = vld [vmem:[%s1244 + $0x3] sm:$0xff]
        %v1302 = vld [vmem:[%s1244 + $0x13] sm:$0xff]
        %v1303 = vld [vmem:[%s1244 + $0x23] sm:$0xff]
        %v1304 = vld [vmem:[%s1244 + $0x33] sm:$0xff]
        %v1305 = vld [vmem:[%s1244 + $0x43] sm:$0xff]
        %v1306 = vld [vmem:[%s1244 + $0x53] sm:$0xff]
        %v1307 = vld [vmem:[%s1244 + $0x63] sm:$0xff]
        %v1308 = vld [vmem:[%s1244 + $0x73] sm:$0xff]
        %v1309 = vlaneseq
        %v1310 = vshrl.u32 %v1309, 7
        %v1311 = vsub.s32 0, %v1310
        %v1312 = vrot.slane %v1074, %v1311
        %v1313 = vmul.f32 %v1301, %v1312
        %v1314 = vmul.f32 %v1302, %v1312
        %v1315 = vmul.f32 %v1303, %v1312
        %v1316 = vmul.f32 %v1304, %v1312
        %v1317 = vmul.f32 %v1305, %v1312
        %v1318 = vmul.f32 %v1306, %v1312
        %v1319 = vmul.f32 %v1307, %v1312
        %v1320 = vmul.f32 %v1308, %v1312
        %v1321 = vadd.f32 %v1293, %v1313
        %v1322 = vadd.f32 %v1294, %v1314
        %v1323 = vadd.f32 %v1295, %v1315
        %v1324 = vadd.f32 %v1296, %v1316
        %v1325 = vadd.f32 %v1297, %v1317
        %v1326 = vadd.f32 %v1298, %v1318
        %v1327 = vadd.f32 %v1299, %v1319
        %v1328 = vadd.f32 %v1300, %v1320
        %v1329 = vld [vmem:[%s6] sm:$0xff]
        %v1330 = vld [vmem:[%s6 + $0x8] sm:$0x1]
        %1331 = vrot.lane.b32.xlu0 %v1025, 120
        %v1332 = vpop.permute.xlu0 %1331
        %1333 = vrot.lane.b32.xlu0 %v1026, 120
        %v1334 = vpop.permute.xlu0 %1333
        %1335 = vrot.lane.b32.xlu0 %v1027, 120
        %v1336 = vpop.permute.xlu0 %1335
        %1337 = vrot.lane.b32.xlu0 %v1028, 120
        %v1338 = vpop.permute.xlu0 %1337
        %1339 = vrot.lane.b32.xlu0 %v1029, 120
        %v1340 = vpop.permute.xlu0 %1339
        %1341 = vrot.lane.b32.xlu0 %v1030, 120
        %v1342 = vpop.permute.xlu0 %1341
        %1343 = vrot.lane.b32.xlu0 %v1031, 120
        %v1344 = vpop.permute.xlu0 %1343
        %1345 = vrot.lane.b32.xlu0 %v1032, 120
        %v1346 = vpop.permute.xlu0 %1345
        %1355 = vst.msk [vmem:[%s578 + $0x2] sm:$0xff] %vm596, %v1332
        %1356 = vst.msk [vmem:[%s578 + $0x12] sm:$0xff] %vm596, %v1334
        %1357 = vst.msk [vmem:[%s578 + $0x22] sm:$0xff] %vm596, %v1336
        %1358 = vst.msk [vmem:[%s578 + $0x32] sm:$0xff] %vm596, %v1338
        %1359 = vst.msk [vmem:[%s578 + $0x42] sm:$0xff] %vm596, %v1340
        %1360 = vst.msk [vmem:[%s578 + $0x52] sm:$0xff] %vm596, %v1342
        %1361 = vst.msk [vmem:[%s578 + $0x62] sm:$0xff] %vm596, %v1344
        %1362 = vst.msk [vmem:[%s578 + $0x72] sm:$0xff] %vm596, %v1346
        %v1363 = vld [vmem:[#allocation2] sm:$0xff]
        %v1364 = vld [vmem:[#allocation2 + $0x10] sm:$0xff]
        %v1365 = vld [vmem:[#allocation2 + $0x20] sm:$0xff]
        %v1366 = vld [vmem:[#allocation2 + $0x30] sm:$0xff]
        %v1367 = vld [vmem:[#allocation2 + $0x40] sm:$0xff]
        %v1368 = vld [vmem:[#allocation2 + $0x50] sm:$0xff]
        %v1369 = vld [vmem:[#allocation2 + $0x60] sm:$0xff]
        %v1370 = vld [vmem:[#allocation2 + $0x70] sm:$0xff]
        %v1371 = vlaneseq
        %v1372 = vshrl.u32 %v1371, 7
        %v1373 = vsub.s32 0, %v1372
        %v1374 = vrot.slane %v1329, %v1373
        %v1375 = vmul.f32 %v1363, %v1374
        %v1376 = vmul.f32 %v1364, %v1374
        %v1377 = vmul.f32 %v1365, %v1374
        %v1378 = vmul.f32 %v1366, %v1374
        %v1379 = vmul.f32 %v1367, %v1374
        %v1380 = vmul.f32 %v1368, %v1374
        %v1381 = vmul.f32 %v1369, %v1374
        %v1382 = vmul.f32 %v1370, %v1374
        %v1383 = vld [vmem:[#allocation2 + $0x2] sm:$0xff]
        %v1384 = vld [vmem:[#allocation2 + $0x12] sm:$0xff]
        %v1385 = vld [vmem:[#allocation2 + $0x22] sm:$0xff]
        %v1386 = vld [vmem:[#allocation2 + $0x32] sm:$0xff]
        %v1387 = vld [vmem:[#allocation2 + $0x42] sm:$0xff]
        %v1388 = vld [vmem:[#allocation2 + $0x52] sm:$0xff]
        %v1389 = vld [vmem:[#allocation2 + $0x62] sm:$0xff]
        %v1390 = vld [vmem:[#allocation2 + $0x72] sm:$0xff]
        %v1391 = vlaneseq
        %v1392 = vshrl.u32 %v1391, 7
        %v1393 = vsub.s32 1, %v1392
        %v1394 = vrot.slane %v1329, %v1393
        %v1395 = vmul.f32 %v1383, %v1394
        %v1396 = vmul.f32 %v1384, %v1394
        %v1397 = vmul.f32 %v1385, %v1394
        %v1398 = vmul.f32 %v1386, %v1394
        %v1399 = vmul.f32 %v1387, %v1394
        %v1400 = vmul.f32 %v1388, %v1394
        %v1401 = vmul.f32 %v1389, %v1394
        %v1402 = vmul.f32 %v1390, %v1394
        %v1403 = vadd.f32 %v1375, %v1395
        %v1404 = vadd.f32 %v1376, %v1396
        %v1405 = vadd.f32 %v1377, %v1397
        %v1406 = vadd.f32 %v1378, %v1398
        %v1407 = vadd.f32 %v1379, %v1399
        %v1408 = vadd.f32 %v1380, %v1400
        %v1409 = vadd.f32 %v1381, %v1401
        %v1410 = vadd.f32 %v1382, %v1402
        %v1411 = vld [vmem:[#allocation2 + $0x4] sm:$0xff]
        %v1412 = vld [vmem:[#allocation2 + $0x14] sm:$0xff]
        %v1413 = vld [vmem:[#allocation2 + $0x24] sm:$0xff]
        %v1414 = vld [vmem:[#allocation2 + $0x34] sm:$0xff]
        %v1415 = vld [vmem:[#allocation2 + $0x44] sm:$0xff]
        %v1416 = vld [vmem:[#allocation2 + $0x54] sm:$0xff]
        %v1417 = vld [vmem:[#allocation2 + $0x64] sm:$0xff]
        %v1418 = vld [vmem:[#allocation2 + $0x74] sm:$0xff]
        %v1419 = vlaneseq
        %v1420 = vshrl.u32 %v1419, 7
        %v1421 = vsub.s32 2, %v1420
        %v1422 = vrot.slane %v1329, %v1421
        %v1423 = vmul.f32 %v1411, %v1422
        %v1424 = vmul.f32 %v1412, %v1422
        %v1425 = vmul.f32 %v1413, %v1422
        %v1426 = vmul.f32 %v1414, %v1422
        %v1427 = vmul.f32 %v1415, %v1422
        %v1428 = vmul.f32 %v1416, %v1422
        %v1429 = vmul.f32 %v1417, %v1422
        %v1430 = vmul.f32 %v1418, %v1422
        %v1431 = vadd.f32 %v1403, %v1423
        %v1432 = vadd.f32 %v1404, %v1424
        %v1433 = vadd.f32 %v1405, %v1425
        %v1434 = vadd.f32 %v1406, %v1426
        %v1435 = vadd.f32 %v1407, %v1427
        %v1436 = vadd.f32 %v1408, %v1428
        %v1437 = vadd.f32 %v1409, %v1429
        %v1438 = vadd.f32 %v1410, %v1430
        %v1439 = vld [vmem:[%s578] sm:$0xff]
        %v1440 = vld [vmem:[%s578 + $0x10] sm:$0xff]
        %v1441 = vld [vmem:[%s578 + $0x20] sm:$0xff]
        %v1442 = vld [vmem:[%s578 + $0x30] sm:$0xff]
        %v1443 = vld [vmem:[%s578 + $0x40] sm:$0xff]
        %v1444 = vld [vmem:[%s578 + $0x50] sm:$0xff]
        %v1445 = vld [vmem:[%s578 + $0x60] sm:$0xff]
        %v1446 = vld [vmem:[%s578 + $0x70] sm:$0xff]
        %v1447 = vlaneseq
        %v1448 = vshrl.u32 %v1447, 7
        %v1449 = vsub.s32 3, %v1448
        %v1450 = vrot.slane %v1329, %v1449
        %v1451 = vmul.f32 %v1439, %v1450
        %v1452 = vmul.f32 %v1440, %v1450
        %v1453 = vmul.f32 %v1441, %v1450
        %v1454 = vmul.f32 %v1442, %v1450
        %v1455 = vmul.f32 %v1443, %v1450
        %v1456 = vmul.f32 %v1444, %v1450
        %v1457 = vmul.f32 %v1445, %v1450
        %v1458 = vmul.f32 %v1446, %v1450
        %v1459 = vadd.f32 %v1431, %v1451
        %v1460 = vadd.f32 %v1432, %v1452
        %v1461 = vadd.f32 %v1433, %v1453
        %v1462 = vadd.f32 %v1434, %v1454
        %v1463 = vadd.f32 %v1435, %v1455
        %v1464 = vadd.f32 %v1436, %v1456
        %v1465 = vadd.f32 %v1437, %v1457
        %v1466 = vadd.f32 %v1438, %v1458
        %v1467 = vld [vmem:[%s578 + $0x2] sm:$0xff]
        %v1468 = vld [vmem:[%s578 + $0x12] sm:$0xff]
        %v1469 = vld [vmem:[%s578 + $0x22] sm:$0xff]
        %v1470 = vld [vmem:[%s578 + $0x32] sm:$0xff]
        %v1471 = vld [vmem:[%s578 + $0x42] sm:$0xff]
        %v1472 = vld [vmem:[%s578 + $0x52] sm:$0xff]
        %v1473 = vld [vmem:[%s578 + $0x62] sm:$0xff]
        %v1474 = vld [vmem:[%s578 + $0x72] sm:$0xff]
        %v1475 = vlaneseq
        %v1476 = vshrl.u32 %v1475, 7
        %v1477 = vsub.s32 4, %v1476
        %v1478 = vrot.slane %v1329, %v1477
        %v1479 = vmul.f32 %v1467, %v1478
        %v1480 = vmul.f32 %v1468, %v1478
        %v1481 = vmul.f32 %v1469, %v1478
        %v1482 = vmul.f32 %v1470, %v1478
        %v1483 = vmul.f32 %v1471, %v1478
        %v1484 = vmul.f32 %v1472, %v1478
        %v1485 = vmul.f32 %v1473, %v1478
        %v1486 = vmul.f32 %v1474, %v1478
        %v1487 = vadd.f32 %v1459, %v1479
        %v1488 = vadd.f32 %v1460, %v1480
        %v1489 = vadd.f32 %v1461, %v1481
        %v1490 = vadd.f32 %v1462, %v1482
        %v1491 = vadd.f32 %v1463, %v1483
        %v1492 = vadd.f32 %v1464, %v1484
        %v1493 = vadd.f32 %v1465, %v1485
        %v1494 = vadd.f32 %v1466, %v1486
        %v1495 = vld [vmem:[%s578 + $0x4] sm:$0xff]
        %v1496 = vld [vmem:[%s578 + $0x14] sm:$0xff]
        %v1497 = vld [vmem:[%s578 + $0x24] sm:$0xff]
        %v1498 = vld [vmem:[%s578 + $0x34] sm:$0xff]
        %v1499 = vld [vmem:[%s578 + $0x44] sm:$0xff]
        %v1500 = vld [vmem:[%s578 + $0x54] sm:$0xff]
        %v1501 = vld [vmem:[%s578 + $0x64] sm:$0xff]
        %v1502 = vld [vmem:[%s578 + $0x74] sm:$0xff]
        %v1503 = vlaneseq
        %v1504 = vshrl.u32 %v1503, 7
        %v1505 = vsub.s32 5, %v1504
        %v1506 = vrot.slane %v1329, %v1505
        %v1507 = vmul.f32 %v1495, %v1506
        %v1508 = vmul.f32 %v1496, %v1506
        %v1509 = vmul.f32 %v1497, %v1506
        %v1510 = vmul.f32 %v1498, %v1506
        %v1511 = vmul.f32 %v1499, %v1506
        %v1512 = vmul.f32 %v1500, %v1506
        %v1513 = vmul.f32 %v1501, %v1506
        %v1514 = vmul.f32 %v1502, %v1506
        %v1515 = vadd.f32 %v1487, %v1507
        %v1516 = vadd.f32 %v1488, %v1508
        %v1517 = vadd.f32 %v1489, %v1509
        %v1518 = vadd.f32 %v1490, %v1510
        %v1519 = vadd.f32 %v1491, %v1511
        %v1520 = vadd.f32 %v1492, %v1512
        %v1521 = vadd.f32 %v1493, %v1513
        %v1522 = vadd.f32 %v1494, %v1514
        %s1523 = scalar_lea.vmem [#allocation2], 64
        %v1524 = vld [vmem:[%s1523] sm:$0xff]
        %v1525 = vld [vmem:[%s1523 + $0x10] sm:$0xff]
        %v1526 = vld [vmem:[%s1523 + $0x20] sm:$0xff]
        %v1527 = vld [vmem:[%s1523 + $0x30] sm:$0xff]
        %v1528 = vld [vmem:[%s1523 + $0x40] sm:$0xff]
        %v1529 = vld [vmem:[%s1523 + $0x50] sm:$0xff]
        %v1530 = vld [vmem:[%s1523 + $0x60] sm:$0xff]
        %v1531 = vld [vmem:[%s1523 + $0x70] sm:$0xff]
        %v1532 = vlaneseq
        %v1533 = vshrl.u32 %v1532, 7
        %v1534 = vsub.s32 6, %v1533
        %v1535 = vrot.slane %v1329, %v1534
        %v1536 = vmul.f32 %v1524, %v1535
        %v1537 = vmul.f32 %v1525, %v1535
        %v1538 = vmul.f32 %v1526, %v1535
        %v1539 = vmul.f32 %v1527, %v1535
        %v1540 = vmul.f32 %v1528, %v1535
        %v1541 = vmul.f32 %v1529, %v1535
        %v1542 = vmul.f32 %v1530, %v1535
        %v1543 = vmul.f32 %v1531, %v1535
        %v1544 = vadd.f32 %v1515, %v1536
        %v1545 = vadd.f32 %v1516, %v1537
        %v1546 = vadd.f32 %v1517, %v1538
        %v1547 = vadd.f32 %v1518, %v1539
        %v1548 = vadd.f32 %v1519, %v1540
        %v1549 = vadd.f32 %v1520, %v1541
        %v1550 = vadd.f32 %v1521, %v1542
        %v1551 = vadd.f32 %v1522, %v1543
        %v1552 = vld [vmem:[%s1523 + $0x2] sm:$0xff]
        %v1553 = vld [vmem:[%s1523 + $0x12] sm:$0xff]
        %v1554 = vld [vmem:[%s1523 + $0x22] sm:$0xff]
        %v1555 = vld [vmem:[%s1523 + $0x32] sm:$0xff]
        %v1556 = vld [vmem:[%s1523 + $0x42] sm:$0xff]
        %v1557 = vld [vmem:[%s1523 + $0x52] sm:$0xff]
        %v1558 = vld [vmem:[%s1523 + $0x62] sm:$0xff]
        %v1559 = vld [vmem:[%s1523 + $0x72] sm:$0xff]
        %v1560 = vlaneseq
        %v1561 = vshrl.u32 %v1560, 7
        %v1562 = vsub.s32 7, %v1561
        %v1563 = vrot.slane %v1329, %v1562
        %v1564 = vmul.f32 %v1552, %v1563
        %v1565 = vmul.f32 %v1553, %v1563
        %v1566 = vmul.f32 %v1554, %v1563
        %v1567 = vmul.f32 %v1555, %v1563
        %v1568 = vmul.f32 %v1556, %v1563
        %v1569 = vmul.f32 %v1557, %v1563
        %v1570 = vmul.f32 %v1558, %v1563
        %v1571 = vmul.f32 %v1559, %v1563
        %v1572 = vadd.f32 %v1544, %v1564
        %v1573 = vadd.f32 %v1545, %v1565
        %v1574 = vadd.f32 %v1546, %v1566
        %v1575 = vadd.f32 %v1547, %v1567
        %v1576 = vadd.f32 %v1548, %v1568
        %v1577 = vadd.f32 %v1549, %v1569
        %v1578 = vadd.f32 %v1550, %v1570
        %v1579 = vadd.f32 %v1551, %v1571
        %v1580 = vld [vmem:[%s1523 + $0x4] sm:$0xff]
        %v1581 = vld [vmem:[%s1523 + $0x14] sm:$0xff]
        %v1582 = vld [vmem:[%s1523 + $0x24] sm:$0xff]
        %v1583 = vld [vmem:[%s1523 + $0x34] sm:$0xff]
        %v1584 = vld [vmem:[%s1523 + $0x44] sm:$0xff]
        %v1585 = vld [vmem:[%s1523 + $0x54] sm:$0xff]
        %v1586 = vld [vmem:[%s1523 + $0x64] sm:$0xff]
        %v1587 = vld [vmem:[%s1523 + $0x74] sm:$0xff]
        %v1588 = vlaneseq
        %v1589 = vshrl.u32 %v1588, 7
        %v1590 = vsub.s32 0, %v1589
        %v1591 = vrot.slane %v1330, %v1590
        %v1592 = vmul.f32 %v1580, %v1591
        %v1593 = vmul.f32 %v1581, %v1591
        %v1594 = vmul.f32 %v1582, %v1591
        %v1595 = vmul.f32 %v1583, %v1591
        %v1596 = vmul.f32 %v1584, %v1591
        %v1597 = vmul.f32 %v1585, %v1591
        %v1598 = vmul.f32 %v1586, %v1591
        %v1599 = vmul.f32 %v1587, %v1591
        %v1600 = vadd.f32 %v1572, %v1592
        %v1601 = vadd.f32 %v1573, %v1593
        %v1602 = vadd.f32 %v1574, %v1594
        %v1603 = vadd.f32 %v1575, %v1595
        %v1604 = vadd.f32 %v1576, %v1596
        %v1605 = vadd.f32 %v1577, %v1597
        %v1606 = vadd.f32 %v1578, %v1598
        %v1607 = vadd.f32 %v1579, %v1599
        %1616 = vrot.lane.b32.xlu0 %v1600, 16
        %v1617 = vpop.permute.xlu0 %1616
        %1618 = vrot.lane.b32.xlu0 %v1601, 16
        %v1619 = vpop.permute.xlu0 %1618
        %1620 = vrot.lane.b32.xlu0 %v1602, 16
        %v1621 = vpop.permute.xlu0 %1620
        %1622 = vrot.lane.b32.xlu0 %v1603, 16
        %v1623 = vpop.permute.xlu0 %1622
        %1624 = vrot.lane.b32.xlu0 %v1604, 16
        %v1625 = vpop.permute.xlu0 %1624
        %1626 = vrot.lane.b32.xlu0 %v1605, 16
        %v1627 = vpop.permute.xlu0 %1626
        %1628 = vrot.lane.b32.xlu0 %v1606, 16
        %v1629 = vpop.permute.xlu0 %1628
        %1630 = vrot.lane.b32.xlu0 %v1607, 16
        %v1631 = vpop.permute.xlu0 %1630
        %v1640 = vsel %vm567, %v1321, %v1617
        %v1641 = vsel %vm567, %v1322, %v1619
        %v1642 = vsel %vm567, %v1323, %v1621
        %v1643 = vsel %vm567, %v1324, %v1623
        %v1644 = vsel %vm567, %v1325, %v1625
        %v1645 = vsel %vm567, %v1326, %v1627
        %v1646 = vsel %vm567, %v1327, %v1629
        %v1647 = vsel %vm567, %v1328, %v1631
        %v1648 = vld [vmem:[%s7] sm:$0xff]
        %v1649 = vld [vmem:[%s7 + $0x8] sm:$0xff]
        %v1650 = vld [vmem:[%s7 + $0x10] sm:$0xff]
        %vm1651 = vcmask 195584
        %v1653 = vsel %vm1651, %v1640, 0
        %v1656 = vsel %vm1651, %v1641, 0
        %v1659 = vsel %vm1651, %v1642, 0
        %v1662 = vsel %vm1651, %v1643, 0
        %v1665 = vsel %vm1651, %v1644, 0
        %v1668 = vsel %vm1651, %v1645, 0
        %v1671 = vsel %vm1651, %v1646, 0
        %v1674 = vsel %vm1651, %v1647, 0
        %1676 = vmatprep.subr.mxu0 0.0
        %1677 = vmatpush1.msra.mxu0 0.0
        %1678 = vmatprep.subr.mxu0 0.0
        %1679 = vmatpush1.msra.mxu0 0.0
        %1680 = vmatprep.subr.mxu0 0.0
        %1681 = vmatpush1.msra.mxu0 0.0
        %1682 = vmatprep.subr.mxu0 0.0
        %1683 = vmatpush1.msra.mxu0 0.0
        %1684 = vmatprep.subr.mxu0 0.0
        %1685 = vmatpush1.msra.mxu0 0.0
        %1686 = vmatprep.subr.mxu0 0.0
        %1687 = vmatpush1.msra.mxu0 0.0
        %1688 = vmatprep.subr.mxu0 0.0
        %1689 = vmatpush1.msra.mxu0 0.0
        %1690 = vmatprep.subr.mxu0 0.0
        %1691 = vmatpush1.msra.mxu0 0.0
        %1692 = vmatprep.subr.mxu0 0.0
        %1693 = vmatpush1.msra.mxu0 0.0
        %1694 = vmatprep.subr.mxu0 0.0
        %1695 = vmatpush1.msra.mxu0 0.0
        %1696 = vmatprep.subr.mxu0 0.0
        %1697 = vmatpush1.msra.mxu0 0.0
        %1698 = vmatprep.subr.mxu0 0.0
        %1699 = vmatpush1.msra.mxu0 0.0
        %1700 = vmatprep.subr.mxu0 0.0
        %1701 = vmatpush1.msra.mxu0 0.0
        %1702 = vmatprep.subr.mxu0 0.0
        %1703 = vmatpush1.msra.mxu0 %v1650
        %1704 = vmatprep.subr.mxu0 0.0
        %1705 = vmatpush1.msra.mxu0 %v1649
        %1706 = vmatprep.subr.mxu0 0.0
        %1707 = vmatpush1.msra.mxu0 %v1648
        %1708 = vmatprep.subr.mxu0 0.0
        %1709 = vmatpush2.msra.mxu0 0.0
        %1710 = vmatprep.subr.mxu0 0.0
        %1711 = vmatpush2.msra.mxu0 0.0
        %1712 = vmatprep.subr.mxu0 0.0
        %1713 = vmatpush2.msra.mxu0 0.0
        %1714 = vmatprep.subr.mxu0 0.0
        %1715 = vmatpush2.msra.mxu0 0.0
        %1716 = vmatprep.subr.mxu0 0.0
        %1717 = vmatpush2.msra.mxu0 0.0
        %1718 = vmatprep.subr.mxu0 0.0
        %1719 = vmatpush2.msra.mxu0 0.0
        %1720 = vmatprep.subr.mxu0 0.0
        %1721 = vmatpush2.msra.mxu0 0.0
        %1722 = vmatprep.subr.mxu0 0.0
        %1723 = vmatpush2.msra.mxu0 0.0
        %1724 = vmatprep.subr.mxu0 0.0
        %1725 = vmatpush2.msra.mxu0 0.0
        %1726 = vmatprep.subr.mxu0 0.0
        %1727 = vmatpush2.msra.mxu0 0.0
        %1728 = vmatprep.subr.mxu0 0.0
        %1729 = vmatpush2.msra.mxu0 0.0
        %1730 = vmatprep.subr.mxu0 0.0
        %1731 = vmatpush2.msra.mxu0 0.0
        %1732 = vmatprep.subr.mxu0 0.0
        %1733 = vmatpush2.msra.mxu0 0.0
        %1734 = vmatprep.subr.mxu0 0.0
        %1735 = vmatpush2.msra.mxu0 0.0
        %1736 = vmatprep.subr.mxu0 0.0
        %1737 = vmatpush2.msra.mxu0 0.0
        %1738 = vmatprep.subr.mxu0 0.0
        %1739 = vmatpush2.msra.mxu0 0.0
        %1740 = vmatprep.mubr.f32.mxu0 0.0
        %1741 = vmatmul.mubr.f32.gmra.mxu0 %v1653
        %v1742 = vpop.f32.mrf.mxu0
        %v1743 = vadd.f32 0.0, %v1742
        %v1744 = vpop.f32.mrf.mxu0
        %1745 = vmatprep.mubr.f32.mxu0 0.0
        %1746 = vmatmul.mubr.f32.gmra.mxu0 %v1656
        %v1747 = vpop.f32.mrf.mxu0
        %v1748 = vadd.f32 0.0, %v1747
        %v1749 = vpop.f32.mrf.mxu0
        %1750 = vmatprep.mubr.f32.mxu0 0.0
        %1751 = vmatmul.mubr.f32.gmra.mxu0 %v1659
        %v1752 = vpop.f32.mrf.mxu0
        %v1753 = vadd.f32 0.0, %v1752
        %v1754 = vpop.f32.mrf.mxu0
        %1755 = vmatprep.mubr.f32.mxu0 0.0
        %1756 = vmatmul.mubr.f32.gmra.mxu0 %v1662
        %v1757 = vpop.f32.mrf.mxu0
        %v1758 = vadd.f32 0.0, %v1757
        %v1759 = vpop.f32.mrf.mxu0
        %1760 = vmatprep.mubr.f32.mxu0 0.0
        %1761 = vmatmul.mubr.f32.gmra.mxu0 %v1665
        %v1762 = vpop.f32.mrf.mxu0
        %v1763 = vadd.f32 0.0, %v1762
        %v1764 = vpop.f32.mrf.mxu0
        %1765 = vmatprep.mubr.f32.mxu0 0.0
        %1766 = vmatmul.mubr.f32.gmra.mxu0 %v1668
        %v1767 = vpop.f32.mrf.mxu0
        %v1768 = vadd.f32 0.0, %v1767
        %v1769 = vpop.f32.mrf.mxu0
        %1770 = vmatprep.mubr.f32.mxu0 0.0
        %1771 = vmatmul.mubr.f32.gmra.mxu0 %v1671
        %v1772 = vpop.f32.mrf.mxu0
        %v1773 = vadd.f32 0.0, %v1772
        %v1774 = vpop.f32.mrf.mxu0
        %1775 = vmatprep.mubr.f32.mxu0 0.0
        %1776 = vmatmul.mubr.f32.gmra.mxu0 %v1674
        %v1777 = vpop.f32.mrf.mxu0
        %v1778 = vadd.f32 0.0, %v1777
        %v1779 = vpop.f32.mrf.mxu0
        %1780 = vdwg.mxu0
        %v1781 = vld [vmem:[%s8] sm:$0x1]
        %v1783 = vlaneseq
        %v1784 = vshrl.u32 %v1783, 7
        %v1785 = vsub.s32 0, %v1784
        %v1786 = vrot.slane %v1781, %v1785
        %v1788 = vmul.f32 %v1743, %v1786
        %v1789 = vmul.f32 %v1748, %v1786
        %v1790 = vmul.f32 %v1753, %v1786
        %v1791 = vmul.f32 %v1758, %v1786
        %v1792 = vmul.f32 %v1763, %v1786
        %v1793 = vmul.f32 %v1768, %v1786
        %v1794 = vmul.f32 %v1773, %v1786
        %v1795 = vmul.f32 %v1778, %v1786
        %v1796 = vld [vmem:[%s9] sm:$0x1]
        %v1798 = vlaneseq
        %v1799 = vshrl.u32 %v1798, 7
        %v1800 = vsub.s32 0, %v1799
        %v1801 = vrot.slane %v1796, %v1800
        %v1803 = vadd.f32 %v1788, %v1801
        %v1804 = vadd.f32 %v1789, %v1801
        %v1805 = vadd.f32 %v1790, %v1801
        %v1806 = vadd.f32 %v1791, %v1801
        %v1807 = vadd.f32 %v1792, %v1801
        %v1808 = vadd.f32 %v1793, %v1801
        %v1809 = vadd.f32 %v1794, %v1801
        %v1810 = vadd.f32 %v1795, %v1801
        %v1811 = vmax.f32 %v1803, 0.0
        %v1812 = vmax.f32 %v1804, 0.0
        %v1813 = vmax.f32 %v1805, 0.0
        %v1814 = vmax.f32 %v1806, 0.0
        %v1815 = vmax.f32 %v1807, 0.0
        %v1816 = vmax.f32 %v1808, 0.0
        %v1817 = vmax.f32 %v1809, 0.0
        %v1818 = vmax.f32 %v1810, 0.0
        %v1819 = vld [vmem:[%s10] sm:$0xff]
        %v1820 = vld [vmem:[%s10 + $0x8] sm:$0x1]
        %1821 = vst.msk [vmem:[%s578 + $0x2] sm:$0xff] %vm567, %v1811
        %1822 = vst.msk [vmem:[%s578 + $0x12] sm:$0xff] %vm567, %v1812
        %1823 = vst.msk [vmem:[%s578 + $0x22] sm:$0xff] %vm567, %v1813
        %1824 = vst.msk [vmem:[%s578 + $0x32] sm:$0xff] %vm567, %v1814
        %1825 = vst.msk [vmem:[%s578 + $0x42] sm:$0xff] %vm567, %v1815
        %1826 = vst.msk [vmem:[%s578 + $0x52] sm:$0xff] %vm567, %v1816
        %1827 = vst.msk [vmem:[%s578 + $0x62] sm:$0xff] %vm567, %v1817
        %1828 = vst.msk [vmem:[%s578 + $0x72] sm:$0xff] %vm567, %v1818
        %v1829 = vld [vmem:[%s1083 + $0x1] sm:$0xff]
        %v1830 = vld [vmem:[%s1083 + $0x11] sm:$0xff]
        %v1831 = vld [vmem:[%s1083 + $0x21] sm:$0xff]
        %v1832 = vld [vmem:[%s1083 + $0x31] sm:$0xff]
        %v1833 = vld [vmem:[%s1083 + $0x41] sm:$0xff]
        %v1834 = vld [vmem:[%s1083 + $0x51] sm:$0xff]
        %v1835 = vld [vmem:[%s1083 + $0x61] sm:$0xff]
        %v1836 = vld [vmem:[%s1083 + $0x71] sm:$0xff]
        %v1837 = vlaneseq
        %v1838 = vshrl.u32 %v1837, 7
        %v1839 = vsub.s32 0, %v1838
        %v1840 = vrot.slane %v1819, %v1839
        %v1841 = vmul.f32 %v1829, %v1840
        %v1842 = vmul.f32 %v1830, %v1840
        %v1843 = vmul.f32 %v1831, %v1840
        %v1844 = vmul.f32 %v1832, %v1840
        %v1845 = vmul.f32 %v1833, %v1840
        %v1846 = vmul.f32 %v1834, %v1840
        %v1847 = vmul.f32 %v1835, %v1840
        %v1848 = vmul.f32 %v1836, %v1840
        %v1849 = vld [vmem:[%s1083 + $0x2] sm:$0xff]
        %v1850 = vld [vmem:[%s1083 + $0x12] sm:$0xff]
        %v1851 = vld [vmem:[%s1083 + $0x22] sm:$0xff]
        %v1852 = vld [vmem:[%s1083 + $0x32] sm:$0xff]
        %v1853 = vld [vmem:[%s1083 + $0x42] sm:$0xff]
        %v1854 = vld [vmem:[%s1083 + $0x52] sm:$0xff]
        %v1855 = vld [vmem:[%s1083 + $0x62] sm:$0xff]
        %v1856 = vld [vmem:[%s1083 + $0x72] sm:$0xff]
        %v1857 = vlaneseq
        %v1858 = vshrl.u32 %v1857, 7
        %v1859 = vsub.s32 1, %v1858
        %v1860 = vrot.slane %v1819, %v1859
        %v1861 = vmul.f32 %v1849, %v1860
        %v1862 = vmul.f32 %v1850, %v1860
        %v1863 = vmul.f32 %v1851, %v1860
        %v1864 = vmul.f32 %v1852, %v1860
        %v1865 = vmul.f32 %v1853, %v1860
        %v1866 = vmul.f32 %v1854, %v1860
        %v1867 = vmul.f32 %v1855, %v1860
        %v1868 = vmul.f32 %v1856, %v1860
        %v1869 = vadd.f32 %v1841, %v1861
        %v1870 = vadd.f32 %v1842, %v1862
        %v1871 = vadd.f32 %v1843, %v1863
        %v1872 = vadd.f32 %v1844, %v1864
        %v1873 = vadd.f32 %v1845, %v1865
        %v1874 = vadd.f32 %v1846, %v1866
        %v1875 = vadd.f32 %v1847, %v1867
        %v1876 = vadd.f32 %v1848, %v1868
        %v1877 = vld [vmem:[%s1083 + $0x3] sm:$0xff]
        %v1878 = vld [vmem:[%s1083 + $0x13] sm:$0xff]
        %v1879 = vld [vmem:[%s1083 + $0x23] sm:$0xff]
        %v1880 = vld [vmem:[%s1083 + $0x33] sm:$0xff]
        %v1881 = vld [vmem:[%s1083 + $0x43] sm:$0xff]
        %v1882 = vld [vmem:[%s1083 + $0x53] sm:$0xff]
        %v1883 = vld [vmem:[%s1083 + $0x63] sm:$0xff]
        %v1884 = vld [vmem:[%s1083 + $0x73] sm:$0xff]
        %v1885 = vlaneseq
        %v1886 = vshrl.u32 %v1885, 7
        %v1887 = vsub.s32 2, %v1886
        %v1888 = vrot.slane %v1819, %v1887
        %v1889 = vmul.f32 %v1877, %v1888
        %v1890 = vmul.f32 %v1878, %v1888
        %v1891 = vmul.f32 %v1879, %v1888
        %v1892 = vmul.f32 %v1880, %v1888
        %v1893 = vmul.f32 %v1881, %v1888
        %v1894 = vmul.f32 %v1882, %v1888
        %v1895 = vmul.f32 %v1883, %v1888
        %v1896 = vmul.f32 %v1884, %v1888
        %v1897 = vadd.f32 %v1869, %v1889
        %v1898 = vadd.f32 %v1870, %v1890
        %v1899 = vadd.f32 %v1871, %v1891
        %v1900 = vadd.f32 %v1872, %v1892
        %v1901 = vadd.f32 %v1873, %v1893
        %v1902 = vadd.f32 %v1874, %v1894
        %v1903 = vadd.f32 %v1875, %v1895
        %v1904 = vadd.f32 %v1876, %v1896
        %v1905 = vld [vmem:[%s578 + $0x1] sm:$0xff]
        %v1906 = vld [vmem:[%s578 + $0x11] sm:$0xff]
        %v1907 = vld [vmem:[%s578 + $0x21] sm:$0xff]
        %v1908 = vld [vmem:[%s578 + $0x31] sm:$0xff]
        %v1909 = vld [vmem:[%s578 + $0x41] sm:$0xff]
        %v1910 = vld [vmem:[%s578 + $0x51] sm:$0xff]
        %v1911 = vld [vmem:[%s578 + $0x61] sm:$0xff]
        %v1912 = vld [vmem:[%s578 + $0x71] sm:$0xff]
        %v1913 = vlaneseq
        %v1914 = vshrl.u32 %v1913, 7
        %v1915 = vsub.s32 3, %v1914
        %v1916 = vrot.slane %v1819, %v1915
        %v1917 = vmul.f32 %v1905, %v1916
        %v1918 = vmul.f32 %v1906, %v1916
        %v1919 = vmul.f32 %v1907, %v1916
        %v1920 = vmul.f32 %v1908, %v1916
        %v1921 = vmul.f32 %v1909, %v1916
        %v1922 = vmul.f32 %v1910, %v1916
        %v1923 = vmul.f32 %v1911, %v1916
        %v1924 = vmul.f32 %v1912, %v1916
        %v1925 = vadd.f32 %v1897, %v1917
        %v1926 = vadd.f32 %v1898, %v1918
        %v1927 = vadd.f32 %v1899, %v1919
        %v1928 = vadd.f32 %v1900, %v1920
        %v1929 = vadd.f32 %v1901, %v1921
        %v1930 = vadd.f32 %v1902, %v1922
        %v1931 = vadd.f32 %v1903, %v1923
        %v1932 = vadd.f32 %v1904, %v1924
        %v1933 = vld [vmem:[%s578 + $0x2] sm:$0xff]
        %v1934 = vld [vmem:[%s578 + $0x12] sm:$0xff]
        %v1935 = vld [vmem:[%s578 + $0x22] sm:$0xff]
        %v1936 = vld [vmem:[%s578 + $0x32] sm:$0xff]
        %v1937 = vld [vmem:[%s578 + $0x42] sm:$0xff]
        %v1938 = vld [vmem:[%s578 + $0x52] sm:$0xff]
        %v1939 = vld [vmem:[%s578 + $0x62] sm:$0xff]
        %v1940 = vld [vmem:[%s578 + $0x72] sm:$0xff]
        %v1941 = vlaneseq
        %v1942 = vshrl.u32 %v1941, 7
        %v1943 = vsub.s32 4, %v1942
        %v1944 = vrot.slane %v1819, %v1943
        %v1945 = vmul.f32 %v1933, %v1944
        %v1946 = vmul.f32 %v1934, %v1944
        %v1947 = vmul.f32 %v1935, %v1944
        %v1948 = vmul.f32 %v1936, %v1944
        %v1949 = vmul.f32 %v1937, %v1944
        %v1950 = vmul.f32 %v1938, %v1944
        %v1951 = vmul.f32 %v1939, %v1944
        %v1952 = vmul.f32 %v1940, %v1944
        %v1953 = vadd.f32 %v1925, %v1945
        %v1954 = vadd.f32 %v1926, %v1946
        %v1955 = vadd.f32 %v1927, %v1947
        %v1956 = vadd.f32 %v1928, %v1948
        %v1957 = vadd.f32 %v1929, %v1949
        %v1958 = vadd.f32 %v1930, %v1950
        %v1959 = vadd.f32 %v1931, %v1951
        %v1960 = vadd.f32 %v1932, %v1952
        %v1961 = vld [vmem:[%s578 + $0x3] sm:$0xff]
        %v1962 = vld [vmem:[%s578 + $0x13] sm:$0xff]
        %v1963 = vld [vmem:[%s578 + $0x23] sm:$0xff]
        %v1964 = vld [vmem:[%s578 + $0x33] sm:$0xff]
        %v1965 = vld [vmem:[%s578 + $0x43] sm:$0xff]
        %v1966 = vld [vmem:[%s578 + $0x53] sm:$0xff]
        %v1967 = vld [vmem:[%s578 + $0x63] sm:$0xff]
        %v1968 = vld [vmem:[%s578 + $0x73] sm:$0xff]
        %v1969 = vlaneseq
        %v1970 = vshrl.u32 %v1969, 7
        %v1971 = vsub.s32 5, %v1970
        %v1972 = vrot.slane %v1819, %v1971
        %v1973 = vmul.f32 %v1961, %v1972
        %v1974 = vmul.f32 %v1962, %v1972
        %v1975 = vmul.f32 %v1963, %v1972
        %v1976 = vmul.f32 %v1964, %v1972
        %v1977 = vmul.f32 %v1965, %v1972
        %v1978 = vmul.f32 %v1966, %v1972
        %v1979 = vmul.f32 %v1967, %v1972
        %v1980 = vmul.f32 %v1968, %v1972
        %v1981 = vadd.f32 %v1953, %v1973
        %v1982 = vadd.f32 %v1954, %v1974
        %v1983 = vadd.f32 %v1955, %v1975
        %v1984 = vadd.f32 %v1956, %v1976
        %v1985 = vadd.f32 %v1957, %v1977
        %v1986 = vadd.f32 %v1958, %v1978
        %v1987 = vadd.f32 %v1959, %v1979
        %v1988 = vadd.f32 %v1960, %v1980
        %v1989 = vld [vmem:[%s1244 + $0x1] sm:$0xff]
        %v1990 = vld [vmem:[%s1244 + $0x11] sm:$0xff]
        %v1991 = vld [vmem:[%s1244 + $0x21] sm:$0xff]
        %v1992 = vld [vmem:[%s1244 + $0x31] sm:$0xff]
        %v1993 = vld [vmem:[%s1244 + $0x41] sm:$0xff]
        %v1994 = vld [vmem:[%s1244 + $0x51] sm:$0xff]
        %v1995 = vld [vmem:[%s1244 + $0x61] sm:$0xff]
        %v1996 = vld [vmem:[%s1244 + $0x71] sm:$0xff]
        %v1997 = vlaneseq
        %v1998 = vshrl.u32 %v1997, 7
        %v1999 = vsub.s32 6, %v1998
        %v2000 = vrot.slane %v1819, %v1999
        %v2001 = vmul.f32 %v1989, %v2000
        %v2002 = vmul.f32 %v1990, %v2000
        %v2003 = vmul.f32 %v1991, %v2000
        %v2004 = vmul.f32 %v1992, %v2000
        %v2005 = vmul.f32 %v1993, %v2000
        %v2006 = vmul.f32 %v1994, %v2000
        %v2007 = vmul.f32 %v1995, %v2000
        %v2008 = vmul.f32 %v1996, %v2000
        %v2009 = vadd.f32 %v1981, %v2001
        %v2010 = vadd.f32 %v1982, %v2002
        %v2011 = vadd.f32 %v1983, %v2003
        %v2012 = vadd.f32 %v1984, %v2004
        %v2013 = vadd.f32 %v1985, %v2005
        %v2014 = vadd.f32 %v1986, %v2006
        %v2015 = vadd.f32 %v1987, %v2007
        %v2016 = vadd.f32 %v1988, %v2008
        %v2017 = vld [vmem:[%s1244 + $0x2] sm:$0xff]
        %v2018 = vld [vmem:[%s1244 + $0x12] sm:$0xff]
        %v2019 = vld [vmem:[%s1244 + $0x22] sm:$0xff]
        %v2020 = vld [vmem:[%s1244 + $0x32] sm:$0xff]
        %v2021 = vld [vmem:[%s1244 + $0x42] sm:$0xff]
        %v2022 = vld [vmem:[%s1244 + $0x52] sm:$0xff]
        %v2023 = vld [vmem:[%s1244 + $0x62] sm:$0xff]
        %v2024 = vld [vmem:[%s1244 + $0x72] sm:$0xff]
        %v2025 = vlaneseq
        %v2026 = vshrl.u32 %v2025, 7
        %v2027 = vsub.s32 7, %v2026
        %v2028 = vrot.slane %v1819, %v2027
        %v2029 = vmul.f32 %v2017, %v2028
        %v2030 = vmul.f32 %v2018, %v2028
        %v2031 = vmul.f32 %v2019, %v2028
        %v2032 = vmul.f32 %v2020, %v2028
        %v2033 = vmul.f32 %v2021, %v2028
        %v2034 = vmul.f32 %v2022, %v2028
        %v2035 = vmul.f32 %v2023, %v2028
        %v2036 = vmul.f32 %v2024, %v2028
        %v2037 = vadd.f32 %v2009, %v2029
        %v2038 = vadd.f32 %v2010, %v2030
        %v2039 = vadd.f32 %v2011, %v2031
        %v2040 = vadd.f32 %v2012, %v2032
        %v2041 = vadd.f32 %v2013, %v2033
        %v2042 = vadd.f32 %v2014, %v2034
        %v2043 = vadd.f32 %v2015, %v2035
        %v2044 = vadd.f32 %v2016, %v2036
        %v2045 = vld [vmem:[%s1244 + $0x3] sm:$0xff]
        %v2046 = vld [vmem:[%s1244 + $0x13] sm:$0xff]
        %v2047 = vld [vmem:[%s1244 + $0x23] sm:$0xff]
        %v2048 = vld [vmem:[%s1244 + $0x33] sm:$0xff]
        %v2049 = vld [vmem:[%s1244 + $0x43] sm:$0xff]
        %v2050 = vld [vmem:[%s1244 + $0x53] sm:$0xff]
        %v2051 = vld [vmem:[%s1244 + $0x63] sm:$0xff]
        %v2052 = vld [vmem:[%s1244 + $0x73] sm:$0xff]
        %v2053 = vlaneseq
        %v2054 = vshrl.u32 %v2053, 7
        %v2055 = vsub.s32 0, %v2054
        %v2056 = vrot.slane %v1820, %v2055
        %v2057 = vmul.f32 %v2045, %v2056
        %v2058 = vmul.f32 %v2046, %v2056
        %v2059 = vmul.f32 %v2047, %v2056
        %v2060 = vmul.f32 %v2048, %v2056
        %v2061 = vmul.f32 %v2049, %v2056
        %v2062 = vmul.f32 %v2050, %v2056
        %v2063 = vmul.f32 %v2051, %v2056
        %v2064 = vmul.f32 %v2052, %v2056
        %v2065 = vadd.f32 %v2037, %v2057
        %v2066 = vadd.f32 %v2038, %v2058
        %v2067 = vadd.f32 %v2039, %v2059
        %v2068 = vadd.f32 %v2040, %v2060
        %v2069 = vadd.f32 %v2041, %v2061
        %v2070 = vadd.f32 %v2042, %v2062
        %v2071 = vadd.f32 %v2043, %v2063
        %v2072 = vadd.f32 %v2044, %v2064
        %v2073 = vld [vmem:[%s11] sm:$0xff]
        %v2074 = vld [vmem:[%s11 + $0x8] sm:$0xff]
        %v2076 = vsel %vm567, %v2065, 0
        %v2079 = vsel %vm567, %v2066, 0
        %v2082 = vsel %vm567, %v2067, 0
        %v2085 = vsel %vm567, %v2068, 0
        %v2088 = vsel %vm567, %v2069, 0
        %v2091 = vsel %vm567, %v2070, 0
        %v2094 = vsel %vm567, %v2071, 0
        %v2097 = vsel %vm567, %v2072, 0
        %2099 = vmatprep.subr.mxu0 0.0
        %2100 = vmatpush1.msra.mxu0 0.0
        %2101 = vmatprep.subr.mxu0 0.0
        %2102 = vmatpush1.msra.mxu0 0.0
        %2103 = vmatprep.subr.mxu0 0.0
        %2104 = vmatpush1.msra.mxu0 0.0
        %2105 = vmatprep.subr.mxu0 0.0
        %2106 = vmatpush1.msra.mxu0 0.0
        %2107 = vmatprep.subr.mxu0 0.0
        %2108 = vmatpush1.msra.mxu0 0.0
        %2109 = vmatprep.subr.mxu0 0.0
        %2110 = vmatpush1.msra.mxu0 0.0
        %2111 = vmatprep.subr.mxu0 0.0
        %2112 = vmatpush1.msra.mxu0 0.0
        %2113 = vmatprep.subr.mxu0 0.0
        %2114 = vmatpush1.msra.mxu0 0.0
        %2115 = vmatprep.subr.mxu0 0.0
        %2116 = vmatpush1.msra.mxu0 0.0
        %2117 = vmatprep.subr.mxu0 0.0
        %2118 = vmatpush1.msra.mxu0 0.0
        %2119 = vmatprep.subr.mxu0 0.0
        %2120 = vmatpush1.msra.mxu0 0.0
        %2121 = vmatprep.subr.mxu0 0.0
        %2122 = vmatpush1.msra.mxu0 0.0
        %2123 = vmatprep.subr.mxu0 0.0
        %2124 = vmatpush1.msra.mxu0 0.0
        %2125 = vmatprep.subr.mxu0 0.0
        %2126 = vmatpush1.msra.mxu0 0.0
        %2127 = vmatprep.subr.mxu0 0.0
        %2128 = vmatpush1.msra.mxu0 %v2074
        %2129 = vmatprep.subr.mxu0 0.0
        %2130 = vmatpush1.msra.mxu0 %v2073
        %2131 = vmatprep.subr.mxu0 0.0
        %2132 = vmatpush2.msra.mxu0 0.0
        %2133 = vmatprep.subr.mxu0 0.0
        %2134 = vmatpush2.msra.mxu0 0.0
        %2135 = vmatprep.subr.mxu0 0.0
        %2136 = vmatpush2.msra.mxu0 0.0
        %2137 = vmatprep.subr.mxu0 0.0
        %2138 = vmatpush2.msra.mxu0 0.0
        %2139 = vmatprep.subr.mxu0 0.0
        %2140 = vmatpush2.msra.mxu0 0.0
        %2141 = vmatprep.subr.mxu0 0.0
        %2142 = vmatpush2.msra.mxu0 0.0
        %2143 = vmatprep.subr.mxu0 0.0
        %2144 = vmatpush2.msra.mxu0 0.0
        %2145 = vmatprep.subr.mxu0 0.0
        %2146 = vmatpush2.msra.mxu0 0.0
        %2147 = vmatprep.subr.mxu0 0.0
        %2148 = vmatpush2.msra.mxu0 0.0
        %2149 = vmatprep.subr.mxu0 0.0
        %2150 = vmatpush2.msra.mxu0 0.0
        %2151 = vmatprep.subr.mxu0 0.0
        %2152 = vmatpush2.msra.mxu0 0.0
        %2153 = vmatprep.subr.mxu0 0.0
        %2154 = vmatpush2.msra.mxu0 0.0
        %2155 = vmatprep.subr.mxu0 0.0
        %2156 = vmatpush2.msra.mxu0 0.0
        %2157 = vmatprep.subr.mxu0 0.0
        %2158 = vmatpush2.msra.mxu0 0.0
        %2159 = vmatprep.subr.mxu0 0.0
        %2160 = vmatpush2.msra.mxu0 0.0
        %2161 = vmatprep.subr.mxu0 0.0
        %2162 = vmatpush2.msra.mxu0 0.0
        %2163 = vmatprep.mubr.f32.mxu0 0.0
        %2164 = vmatmul.mubr.f32.gmra.mxu0 %v2076
        %v2165 = vpop.f32.mrf.mxu0
        %v2166 = vadd.f32 0.0, %v2165
        %v2167 = vpop.f32.mrf.mxu0
        %2168 = vmatprep.mubr.f32.mxu0 0.0
        %2169 = vmatmul.mubr.f32.gmra.mxu0 %v2079
        %v2170 = vpop.f32.mrf.mxu0
        %v2171 = vadd.f32 0.0, %v2170
        %v2172 = vpop.f32.mrf.mxu0
        %2173 = vmatprep.mubr.f32.mxu0 0.0
        %2174 = vmatmul.mubr.f32.gmra.mxu0 %v2082
        %v2175 = vpop.f32.mrf.mxu0
        %v2176 = vadd.f32 0.0, %v2175
        %v2177 = vpop.f32.mrf.mxu0
        %2178 = vmatprep.mubr.f32.mxu0 0.0
        %2179 = vmatmul.mubr.f32.gmra.mxu0 %v2085
        %v2180 = vpop.f32.mrf.mxu0
        %v2181 = vadd.f32 0.0, %v2180
        %v2182 = vpop.f32.mrf.mxu0
        %2183 = vmatprep.mubr.f32.mxu0 0.0
        %2184 = vmatmul.mubr.f32.gmra.mxu0 %v2088
        %v2185 = vpop.f32.mrf.mxu0
        %v2186 = vadd.f32 0.0, %v2185
        %v2187 = vpop.f32.mrf.mxu0
        %2188 = vmatprep.mubr.f32.mxu0 0.0
        %2189 = vmatmul.mubr.f32.gmra.mxu0 %v2091
        %v2190 = vpop.f32.mrf.mxu0
        %v2191 = vadd.f32 0.0, %v2190
        %v2192 = vpop.f32.mrf.mxu0
        %2193 = vmatprep.mubr.f32.mxu0 0.0
        %2194 = vmatmul.mubr.f32.gmra.mxu0 %v2094
        %v2195 = vpop.f32.mrf.mxu0
        %v2196 = vadd.f32 0.0, %v2195
        %v2197 = vpop.f32.mrf.mxu0
        %2198 = vmatprep.mubr.f32.mxu0 0.0
        %2199 = vmatmul.mubr.f32.gmra.mxu0 %v2097
        %v2200 = vpop.f32.mrf.mxu0
        %v2201 = vadd.f32 0.0, %v2200
        %v2202 = vpop.f32.mrf.mxu0
        %2203 = vdwg.mxu0
        %v2204 = vld [vmem:[%s12] sm:$0x1]
        %v2206 = vlaneseq
        %v2207 = vshrl.u32 %v2206, 7
        %v2208 = vsub.s32 0, %v2207
        %v2209 = vrot.slane %v2204, %v2208
        %v2211 = vmul.f32 %v2166, %v2209
        %v2212 = vmul.f32 %v2171, %v2209
        %v2213 = vmul.f32 %v2176, %v2209
        %v2214 = vmul.f32 %v2181, %v2209
        %v2215 = vmul.f32 %v2186, %v2209
        %v2216 = vmul.f32 %v2191, %v2209
        %v2217 = vmul.f32 %v2196, %v2209
        %v2218 = vmul.f32 %v2201, %v2209
        %v2219 = vld [vmem:[%s13] sm:$0x1]
        %v2221 = vlaneseq
        %v2222 = vshrl.u32 %v2221, 7
        %v2223 = vsub.s32 0, %v2222
        %v2224 = vrot.slane %v2219, %v2223
        %v2226 = vadd.f32 %v2211, %v2224
        %v2227 = vadd.f32 %v2212, %v2224
        %v2228 = vadd.f32 %v2213, %v2224
        %v2229 = vadd.f32 %v2214, %v2224
        %v2230 = vadd.f32 %v2215, %v2224
        %v2231 = vadd.f32 %v2216, %v2224
        %v2232 = vadd.f32 %v2217, %v2224
        %v2233 = vadd.f32 %v2218, %v2224
        %2242 = vrot.lane.b32.xlu0 %v846, 120
        %v2243 = vpop.permute.xlu0 %2242
        %2244 = vrot.lane.b32.xlu0 %v847, 120
        %v2245 = vpop.permute.xlu0 %2244
        %2246 = vrot.lane.b32.xlu0 %v848, 120
        %v2247 = vpop.permute.xlu0 %2246
        %2248 = vrot.lane.b32.xlu0 %v849, 120
        %v2249 = vpop.permute.xlu0 %2248
        %2250 = vrot.lane.b32.xlu0 %v850, 120
        %v2251 = vpop.permute.xlu0 %2250
        %2252 = vrot.lane.b32.xlu0 %v851, 120
        %v2253 = vpop.permute.xlu0 %2252
        %2254 = vrot.lane.b32.xlu0 %v852, 120
        %v2255 = vpop.permute.xlu0 %2254
        %2256 = vrot.lane.b32.xlu0 %v853, 120
        %v2257 = vpop.permute.xlu0 %2256
        %v2266 = vadd.f32 %v2226, %v2243
        %v2267 = vadd.f32 %v2227, %v2245
        %v2268 = vadd.f32 %v2228, %v2247
        %v2269 = vadd.f32 %v2229, %v2249
        %v2270 = vadd.f32 %v2230, %v2251
        %v2271 = vadd.f32 %v2231, %v2253
        %v2272 = vadd.f32 %v2232, %v2255
        %v2273 = vadd.f32 %v2233, %v2257
        %2274 = vst.msk [vmem:[%s556] sm:$0xff] %vm596, %v2266
        %2275 = vst.msk [vmem:[%s556 + $0x8] sm:$0xff] %vm596, %v2267
        %2276 = vst.msk [vmem:[%s556 + $0x10] sm:$0xff] %vm596, %v2268
        %2277 = vst.msk [vmem:[%s556 + $0x18] sm:$0xff] %vm596, %v2269
        %2278 = vst.msk [vmem:[%s556 + $0x20] sm:$0xff] %vm596, %v2270
        %2279 = vst.msk [vmem:[%s556 + $0x28] sm:$0xff] %vm596, %v2271
        %2280 = vst.msk [vmem:[%s556 + $0x30] sm:$0xff] %vm596, %v2272
        %2281 = vst.msk [vmem:[%s556 + $0x38] sm:$0xff] %vm596, %v2273
        %2290 = vrot.lane.b32.xlu0 %v1017, 16
        %v2291 = vpop.permute.xlu0 %2290
        %2292 = vrot.lane.b32.xlu0 %v1018, 16
        %v2293 = vpop.permute.xlu0 %2292
        %2294 = vrot.lane.b32.xlu0 %v1019, 16
        %v2295 = vpop.permute.xlu0 %2294
        %2296 = vrot.lane.b32.xlu0 %v1020, 16
        %v2297 = vpop.permute.xlu0 %2296
        %2298 = vrot.lane.b32.xlu0 %v1021, 16
        %v2299 = vpop.permute.xlu0 %2298
        %2300 = vrot.lane.b32.xlu0 %v1022, 16
        %v2301 = vpop.permute.xlu0 %2300
        %2302 = vrot.lane.b32.xlu0 %v1023, 16
        %v2303 = vpop.permute.xlu0 %2302
        %2304 = vrot.lane.b32.xlu0 %v1024, 16
        %v2305 = vpop.permute.xlu0 %2304
        %v2314 = vadd.f32 %v1803, %v2291
        %v2315 = vadd.f32 %v1804, %v2293
        %v2316 = vadd.f32 %v1805, %v2295
        %v2317 = vadd.f32 %v1806, %v2297
        %v2318 = vadd.f32 %v1807, %v2299
        %v2319 = vadd.f32 %v1808, %v2301
        %v2320 = vadd.f32 %v1809, %v2303
        %v2321 = vadd.f32 %v1810, %v2305
        %2330 = vrot.lane.b32.xlu0 %v2314, 120
        %v2331 = vpop.permute.xlu0 %2330
        %2332 = vrot.lane.b32.xlu0 %v2315, 120
        %v2333 = vpop.permute.xlu0 %2332
        %2334 = vrot.lane.b32.xlu0 %v2316, 120
        %v2335 = vpop.permute.xlu0 %2334
        %2336 = vrot.lane.b32.xlu0 %v2317, 120
        %v2337 = vpop.permute.xlu0 %2336
        %2338 = vrot.lane.b32.xlu0 %v2318, 120
        %v2339 = vpop.permute.xlu0 %2338
        %2340 = vrot.lane.b32.xlu0 %v2319, 120
        %v2341 = vpop.permute.xlu0 %2340
        %2342 = vrot.lane.b32.xlu0 %v2320, 120
        %v2343 = vpop.permute.xlu0 %2342
        %2344 = vrot.lane.b32.xlu0 %v2321, 120
        %v2345 = vpop.permute.xlu0 %2344
        %vm2354 = vcmask 130112
        %2355 = vst.msk [vmem:[%s556] sm:$0xff] %vm2354, %v2331
        %2356 = vst.msk [vmem:[%s556 + $0x8] sm:$0xff] %vm2354, %v2333
        %2357 = vst.msk [vmem:[%s556 + $0x10] sm:$0xff] %vm2354, %v2335
        %2358 = vst.msk [vmem:[%s556 + $0x18] sm:$0xff] %vm2354, %v2337
        %2359 = vst.msk [vmem:[%s556 + $0x20] sm:$0xff] %vm2354, %v2339
        %2360 = vst.msk [vmem:[%s556 + $0x28] sm:$0xff] %vm2354, %v2341
        %2361 = vst.msk [vmem:[%s556 + $0x30] sm:$0xff] %vm2354, %v2343
        %2362 = vst.msk [vmem:[%s556 + $0x38] sm:$0xff] %vm2354, %v2345
        %2363 = vst.msk [vmem:[%s578 + $0x2] sm:$0xff] %vm596, %v2266
        %2364 = vst.msk [vmem:[%s578 + $0x12] sm:$0xff] %vm596, %v2267
        %2365 = vst.msk [vmem:[%s578 + $0x22] sm:$0xff] %vm596, %v2268
        %2366 = vst.msk [vmem:[%s578 + $0x32] sm:$0xff] %vm596, %v2269
        %2367 = vst.msk [vmem:[%s578 + $0x42] sm:$0xff] %vm596, %v2270
        %2368 = vst.msk [vmem:[%s578 + $0x52] sm:$0xff] %vm596, %v2271
        %2369 = vst.msk [vmem:[%s578 + $0x62] sm:$0xff] %vm596, %v2272
        %2370 = vst.msk [vmem:[%s578 + $0x72] sm:$0xff] %vm596, %v2273
        %v2371 = vld [vmem:[%s1083 + $0x1] sm:$0xff]
        %v2372 = vld [vmem:[%s1083 + $0x11] sm:$0xff]
        %v2373 = vld [vmem:[%s1083 + $0x21] sm:$0xff]
        %v2374 = vld [vmem:[%s1083 + $0x31] sm:$0xff]
        %v2375 = vld [vmem:[%s1083 + $0x41] sm:$0xff]
        %v2376 = vld [vmem:[%s1083 + $0x51] sm:$0xff]
        %v2377 = vld [vmem:[%s1083 + $0x61] sm:$0xff]
        %v2378 = vld [vmem:[%s1083 + $0x71] sm:$0xff]
        %v2379 = vld [vmem:[%s1083 + $0x2] sm:$0xff]
        %v2380 = vld [vmem:[%s1083 + $0x12] sm:$0xff]
        %v2381 = vld [vmem:[%s1083 + $0x22] sm:$0xff]
        %v2382 = vld [vmem:[%s1083 + $0x32] sm:$0xff]
        %v2383 = vld [vmem:[%s1083 + $0x42] sm:$0xff]
        %v2384 = vld [vmem:[%s1083 + $0x52] sm:$0xff]
        %v2385 = vld [vmem:[%s1083 + $0x62] sm:$0xff]
        %v2386 = vld [vmem:[%s1083 + $0x72] sm:$0xff]
        %v2387 = vadd.f32 %v2371, %v2379
        %v2388 = vadd.f32 %v2372, %v2380
        %v2389 = vadd.f32 %v2373, %v2381
        %v2390 = vadd.f32 %v2374, %v2382
        %v2391 = vadd.f32 %v2375, %v2383
        %v2392 = vadd.f32 %v2376, %v2384
        %v2393 = vadd.f32 %v2377, %v2385
        %v2394 = vadd.f32 %v2378, %v2386
        %v2395 = vld [vmem:[%s1083 + $0x3] sm:$0xff]
        %v2396 = vld [vmem:[%s1083 + $0x13] sm:$0xff]
        %v2397 = vld [vmem:[%s1083 + $0x23] sm:$0xff]
        %v2398 = vld [vmem:[%s1083 + $0x33] sm:$0xff]
        %v2399 = vld [vmem:[%s1083 + $0x43] sm:$0xff]
        %v2400 = vld [vmem:[%s1083 + $0x53] sm:$0xff]
        %v2401 = vld [vmem:[%s1083 + $0x63] sm:$0xff]
        %v2402 = vld [vmem:[%s1083 + $0x73] sm:$0xff]
        %v2403 = vadd.f32 %v2387, %v2395
        %v2404 = vadd.f32 %v2388, %v2396
        %v2405 = vadd.f32 %v2389, %v2397
        %v2406 = vadd.f32 %v2390, %v2398
        %v2407 = vadd.f32 %v2391, %v2399
        %v2408 = vadd.f32 %v2392, %v2400
        %v2409 = vadd.f32 %v2393, %v2401
        %v2410 = vadd.f32 %v2394, %v2402
        %v2411 = vld [vmem:[%s578 + $0x1] sm:$0xff]
        %v2412 = vld [vmem:[%s578 + $0x11] sm:$0xff]
        %v2413 = vld [vmem:[%s578 + $0x21] sm:$0xff]
        %v2414 = vld [vmem:[%s578 + $0x31] sm:$0xff]
        %v2415 = vld [vmem:[%s578 + $0x41] sm:$0xff]
        %v2416 = vld [vmem:[%s578 + $0x51] sm:$0xff]
        %v2417 = vld [vmem:[%s578 + $0x61] sm:$0xff]
        %v2418 = vld [vmem:[%s578 + $0x71] sm:$0xff]
        %v2419 = vadd.f32 %v2403, %v2411
        %v2420 = vadd.f32 %v2404, %v2412
        %v2421 = vadd.f32 %v2405, %v2413
        %v2422 = vadd.f32 %v2406, %v2414
        %v2423 = vadd.f32 %v2407, %v2415
        %v2424 = vadd.f32 %v2408, %v2416
        %v2425 = vadd.f32 %v2409, %v2417
        %v2426 = vadd.f32 %v2410, %v2418
        %v2427 = vld [vmem:[%s578 + $0x2] sm:$0xff]
        %v2428 = vld [vmem:[%s578 + $0x12] sm:$0xff]
        %v2429 = vld [vmem:[%s578 + $0x22] sm:$0xff]
        %v2430 = vld [vmem:[%s578 + $0x32] sm:$0xff]
        %v2431 = vld [vmem:[%s578 + $0x42] sm:$0xff]
        %v2432 = vld [vmem:[%s578 + $0x52] sm:$0xff]
        %v2433 = vld [vmem:[%s578 + $0x62] sm:$0xff]
        %v2434 = vld [vmem:[%s578 + $0x72] sm:$0xff]
        %v2435 = vadd.f32 %v2419, %v2427
        %v2436 = vadd.f32 %v2420, %v2428
        %v2437 = vadd.f32 %v2421, %v2429
        %v2438 = vadd.f32 %v2422, %v2430
        %v2439 = vadd.f32 %v2423, %v2431
        %v2440 = vadd.f32 %v2424, %v2432
        %v2441 = vadd.f32 %v2425, %v2433
        %v2442 = vadd.f32 %v2426, %v2434
        %v2443 = vld [vmem:[%s578 + $0x3] sm:$0xff]
        %v2444 = vld [vmem:[%s578 + $0x13] sm:$0xff]
        %v2445 = vld [vmem:[%s578 + $0x23] sm:$0xff]
        %v2446 = vld [vmem:[%s578 + $0x33] sm:$0xff]
        %v2447 = vld [vmem:[%s578 + $0x43] sm:$0xff]
        %v2448 = vld [vmem:[%s578 + $0x53] sm:$0xff]
        %v2449 = vld [vmem:[%s578 + $0x63] sm:$0xff]
        %v2450 = vld [vmem:[%s578 + $0x73] sm:$0xff]
        %v2451 = vadd.f32 %v2435, %v2443
        %v2452 = vadd.f32 %v2436, %v2444
        %v2453 = vadd.f32 %v2437, %v2445
        %v2454 = vadd.f32 %v2438, %v2446
        %v2455 = vadd.f32 %v2439, %v2447
        %v2456 = vadd.f32 %v2440, %v2448
        %v2457 = vadd.f32 %v2441, %v2449
        %v2458 = vadd.f32 %v2442, %v2450
        %v2459 = vld [vmem:[%s1244 + $0x1] sm:$0xff]
        %v2460 = vld [vmem:[%s1244 + $0x11] sm:$0xff]
        %v2461 = vld [vmem:[%s1244 + $0x21] sm:$0xff]
        %v2462 = vld [vmem:[%s1244 + $0x31] sm:$0xff]
        %v2463 = vld [vmem:[%s1244 + $0x41] sm:$0xff]
        %v2464 = vld [vmem:[%s1244 + $0x51] sm:$0xff]
        %v2465 = vld [vmem:[%s1244 + $0x61] sm:$0xff]
        %v2466 = vld [vmem:[%s1244 + $0x71] sm:$0xff]
        %v2467 = vadd.f32 %v2451, %v2459
        %v2468 = vadd.f32 %v2452, %v2460
        %v2469 = vadd.f32 %v2453, %v2461
        %v2470 = vadd.f32 %v2454, %v2462
        %v2471 = vadd.f32 %v2455, %v2463
        %v2472 = vadd.f32 %v2456, %v2464
        %v2473 = vadd.f32 %v2457, %v2465
        %v2474 = vadd.f32 %v2458, %v2466
        %v2475 = vld [vmem:[%s1244 + $0x2] sm:$0xff]
        %v2476 = vld [vmem:[%s1244 + $0x12] sm:$0xff]
        %v2477 = vld [vmem:[%s1244 + $0x22] sm:$0xff]
        %v2478 = vld [vmem:[%s1244 + $0x32] sm:$0xff]
        %v2479 = vld [vmem:[%s1244 + $0x42] sm:$0xff]
        %v2480 = vld [vmem:[%s1244 + $0x52] sm:$0xff]
        %v2481 = vld [vmem:[%s1244 + $0x62] sm:$0xff]
        %v2482 = vld [vmem:[%s1244 + $0x72] sm:$0xff]
        %v2483 = vadd.f32 %v2467, %v2475
        %v2484 = vadd.f32 %v2468, %v2476
        %v2485 = vadd.f32 %v2469, %v2477
        %v2486 = vadd.f32 %v2470, %v2478
        %v2487 = vadd.f32 %v2471, %v2479
        %v2488 = vadd.f32 %v2472, %v2480
        %v2489 = vadd.f32 %v2473, %v2481
        %v2490 = vadd.f32 %v2474, %v2482
        %v2491 = vld [vmem:[%s1244 + $0x3] sm:$0xff]
        %v2492 = vld [vmem:[%s1244 + $0x13] sm:$0xff]
        %v2493 = vld [vmem:[%s1244 + $0x23] sm:$0xff]
        %v2494 = vld [vmem:[%s1244 + $0x33] sm:$0xff]
        %v2495 = vld [vmem:[%s1244 + $0x43] sm:$0xff]
        %v2496 = vld [vmem:[%s1244 + $0x53] sm:$0xff]
        %v2497 = vld [vmem:[%s1244 + $0x63] sm:$0xff]
        %v2498 = vld [vmem:[%s1244 + $0x73] sm:$0xff]
        %v2499 = vadd.f32 %v2483, %v2491
        %v2500 = vadd.f32 %v2484, %v2492
        %v2501 = vadd.f32 %v2485, %v2493
        %v2502 = vadd.f32 %v2486, %v2494
        %v2503 = vadd.f32 %v2487, %v2495
        %v2504 = vadd.f32 %v2488, %v2496
        %v2505 = vadd.f32 %v2489, %v2497
        %v2506 = vadd.f32 %v2490, %v2498
        %v2507 = vld [vmem:[%s16] sm:$0xff]
        %v2508 = vld [vmem:[%s16 + $0x8] sm:$0xff]
        %v2509 = vld [vmem:[%s16 + $0x10] sm:$0xff]
        %v2510 = vld [vmem:[%s16 + $0x18] sm:$0xff]
        %v2511 = vld [vmem:[%s16 + $0x20] sm:$0xff]
        %v2512 = vld [vmem:[%s16 + $0x28] sm:$0xff]
        %v2513 = vld [vmem:[%s16 + $0x30] sm:$0xff]
        %v2514 = vld [vmem:[%s16 + $0x38] sm:$0xff]
        %v2515 = vmul.f32 %v2499, %v2507
        %v2516 = vmul.f32 %v2500, %v2508
        %v2517 = vmul.f32 %v2501, %v2509
        %v2518 = vmul.f32 %v2502, %v2510
        %v2519 = vmul.f32 %v2503, %v2511
        %v2520 = vmul.f32 %v2504, %v2512
        %v2521 = vmul.f32 %v2505, %v2513
        %v2522 = vmul.f32 %v2506, %v2514
        %v2523 = vld [vmem:[%s14 + $0x1] sm:$0x1]
        %v2524 = vlaneseq
        %v2525 = vshrl.u32 %v2524, 7
        %v2526 = vsub.s32 0, %v2525
        %v2527 = vrot.slane %v2523, %v2526
        %v2528 = vmul.f32 %v2515, %v2527
        %v2529 = vmul.f32 %v2516, %v2527
        %v2530 = vmul.f32 %v2517, %v2527
        %v2531 = vmul.f32 %v2518, %v2527
        %v2532 = vmul.f32 %v2519, %v2527
        %v2533 = vmul.f32 %v2520, %v2527
        %v2534 = vmul.f32 %v2521, %v2527
        %v2535 = vmul.f32 %v2522, %v2527
        %v2536 = vld [vmem:[%s15 + $0x1] sm:$0x1]
        %v2537 = vlaneseq
        %v2538 = vshrl.u32 %v2537, 7
        %v2539 = vsub.s32 0, %v2538
        %v2540 = vrot.slane %v2536, %v2539
        %v2541 = vadd.f32 %v2528, %v2540
        %v2542 = vadd.f32 %v2529, %v2540
        %v2543 = vadd.f32 %v2530, %v2540
        %v2544 = vadd.f32 %v2531, %v2540
        %v2545 = vadd.f32 %v2532, %v2540
        %v2546 = vadd.f32 %v2533, %v2540
        %v2547 = vadd.f32 %v2534, %v2540
        %v2548 = vadd.f32 %v2535, %v2540
        %2549 = vrot.lane.b32.xlu0 %v2314, 112
        %v2550 = vpop.permute.xlu0 %2549
        %2551 = vrot.lane.b32.xlu0 %v2315, 112
        %v2552 = vpop.permute.xlu0 %2551
        %2553 = vrot.lane.b32.xlu0 %v2316, 112
        %v2554 = vpop.permute.xlu0 %2553
        %2555 = vrot.lane.b32.xlu0 %v2317, 112
        %v2556 = vpop.permute.xlu0 %2555
        %2557 = vrot.lane.b32.xlu0 %v2318, 112
        %v2558 = vpop.permute.xlu0 %2557
        %2559 = vrot.lane.b32.xlu0 %v2319, 112
        %v2560 = vpop.permute.xlu0 %2559
        %2561 = vrot.lane.b32.xlu0 %v2320, 112
        %v2562 = vpop.permute.xlu0 %2561
        %2563 = vrot.lane.b32.xlu0 %v2321, 112
        %v2564 = vpop.permute.xlu0 %2563
        %v2573 = vadd.f32 %v2541, %v2550
        %v2574 = vadd.f32 %v2542, %v2552
        %v2575 = vadd.f32 %v2543, %v2554
        %v2576 = vadd.f32 %v2544, %v2556
        %v2577 = vadd.f32 %v2545, %v2558
        %v2578 = vadd.f32 %v2546, %v2560
        %v2579 = vadd.f32 %v2547, %v2562
        %v2580 = vadd.f32 %v2548, %v2564
        %2589 = vrot.lane.b32.xlu0 %v2573, 16
        %v2590 = vpop.permute.xlu0 %2589
        %2591 = vrot.lane.b32.xlu0 %v2574, 16
        %v2592 = vpop.permute.xlu0 %2591
        %2593 = vrot.lane.b32.xlu0 %v2575, 16
        %v2594 = vpop.permute.xlu0 %2593
        %2595 = vrot.lane.b32.xlu0 %v2576, 16
        %v2596 = vpop.permute.xlu0 %2595
        %2597 = vrot.lane.b32.xlu0 %v2577, 16
        %v2598 = vpop.permute.xlu0 %2597
        %2599 = vrot.lane.b32.xlu0 %v2578, 16
        %v2600 = vpop.permute.xlu0 %2599
        %2601 = vrot.lane.b32.xlu0 %v2579, 16
        %v2602 = vpop.permute.xlu0 %2601
        %2603 = vrot.lane.b32.xlu0 %v2580, 16
        %v2604 = vpop.permute.xlu0 %2603
        %vm2613 = vcmask 195712
        %2614 = vst.msk [vmem:[%s556] sm:$0xff] %vm2613, %v2590
        %2615 = vst.msk [vmem:[%s556 + $0x8] sm:$0xff] %vm2613, %v2592
        %2616 = vst.msk [vmem:[%s556 + $0x10] sm:$0xff] %vm2613, %v2594
        %2617 = vst.msk [vmem:[%s556 + $0x18] sm:$0xff] %vm2613, %v2596
        %2618 = vst.msk [vmem:[%s556 + $0x20] sm:$0xff] %vm2613, %v2598
        %2619 = vst.msk [vmem:[%s556 + $0x28] sm:$0xff] %vm2613, %v2600
        %2620 = vst.msk [vmem:[%s556 + $0x30] sm:$0xff] %vm2613, %v2602
        %2621 = vst.msk [vmem:[%s556 + $0x38] sm:$0xff] %vm2613, %v2604
        %2630 = vrot.lane.b32.xlu0 %v2266, 8
        %v2631 = vpop.permute.xlu0 %2630
        %2632 = vrot.lane.b32.xlu0 %v2267, 8
        %v2633 = vpop.permute.xlu0 %2632
        %2634 = vrot.lane.b32.xlu0 %v2268, 8
        %v2635 = vpop.permute.xlu0 %2634
        %2636 = vrot.lane.b32.xlu0 %v2269, 8
        %v2637 = vpop.permute.xlu0 %2636
        %2638 = vrot.lane.b32.xlu0 %v2270, 8
        %v2639 = vpop.permute.xlu0 %2638
        %2640 = vrot.lane.b32.xlu0 %v2271, 8
        %v2641 = vpop.permute.xlu0 %2640
        %2642 = vrot.lane.b32.xlu0 %v2272, 8
        %v2643 = vpop.permute.xlu0 %2642
        %2644 = vrot.lane.b32.xlu0 %v2273, 8
        %v2645 = vpop.permute.xlu0 %2644
        %v2654 = vadd.f32 %v2226, %v2631
        %v2655 = vadd.f32 %v2227, %v2633
        %v2656 = vadd.f32 %v2228, %v2635
        %v2657 = vadd.f32 %v2229, %v2637
        %v2658 = vadd.f32 %v2230, %v2639
        %v2659 = vadd.f32 %v2231, %v2641
        %v2660 = vadd.f32 %v2232, %v2643
        %v2661 = vadd.f32 %v2233, %v2645
        %2670 = vrot.lane.b32.xlu0 %v2654, 16
        %v2671 = vpop.permute.xlu0 %2670
        %2672 = vrot.lane.b32.xlu0 %v2655, 16
        %v2673 = vpop.permute.xlu0 %2672
        %2674 = vrot.lane.b32.xlu0 %v2656, 16
        %v2675 = vpop.permute.xlu0 %2674
        %2676 = vrot.lane.b32.xlu0 %v2657, 16
        %v2677 = vpop.permute.xlu0 %2676
        %2678 = vrot.lane.b32.xlu0 %v2658, 16
        %v2679 = vpop.permute.xlu0 %2678
        %2680 = vrot.lane.b32.xlu0 %v2659, 16
        %v2681 = vpop.permute.xlu0 %2680
        %2682 = vrot.lane.b32.xlu0 %v2660, 16
        %v2683 = vpop.permute.xlu0 %2682
        %2684 = vrot.lane.b32.xlu0 %v2661, 16
        %v2685 = vpop.permute.xlu0 %2684
        %vm2694 = vcmask 261312
        %2695 = vst.msk [vmem:[%s556] sm:$0xff] %vm2694, %v2671
        %2696 = vst.msk [vmem:[%s556 + $0x8] sm:$0xff] %vm2694, %v2673
        %2697 = vst.msk [vmem:[%s556 + $0x10] sm:$0xff] %vm2694, %v2675
        %2698 = vst.msk [vmem:[%s556 + $0x18] sm:$0xff] %vm2694, %v2677
        %2699 = vst.msk [vmem:[%s556 + $0x20] sm:$0xff] %vm2694, %v2679
        %2700 = vst.msk [vmem:[%s556 + $0x28] sm:$0xff] %vm2694, %v2681
        %2701 = vst.msk [vmem:[%s556 + $0x30] sm:$0xff] %vm2694, %v2683
        %2702 = vst.msk [vmem:[%s556 + $0x38] sm:$0xff] %vm2694, %v2685
        %s2703 = sand.u32 %s406, 1
        %s2704 = scalar_lea.sflag [#allocation5], %s2703
        %s2705 = sand.u32 %s406, 1
        %s2706 = smul.addr %s2705, 64
        %s2707 = scalar_lea.vmem [#allocation4], %s2706
        // Predicated region
        $region89: #{cell_forward.1} parent=87 // pred_check
          %p2708 = pneg %p416
        $region90: #{cell_forward.1} parent=87 // pred_check_branch
          %2710 = sbr.rel (%p2708) target = $region92
        $region91: #{cell_forward.1} parent=87 // pred_region
          %s2712 = ssub.s32 1024, 1024
          %2713 = vsyncadd %s2704, %s2712
          %s2714 = smul.addr %s31, 8
          %s2715 = smul.addr %s2714, 128
          %s2716 = scalar_lea.hbm %s17, %s2715
          %s2717 = sshll.u32 %s2707, 4
          %s2718 = int_to_ptr.vmem [resolvable:$true] %s2717
          %2723 = dma.vmem_to_hbm [thread:$0]  %s2718, 1024, %s2716, %s2704, 128, 128, 8
        $region92: #{cell_forward.1} parent=87 // pred_fallthru
          _
      $region88: #{cell_forward.1} parent=5 // pred_fallthru
        _
      %p2724 = scmp.le.s32.totalorder 2, %s26
      // Predicated region
      $region93: #{cell_forward.1} parent=5 // pred_check
        %p2725 = pneg %p2724
      $region94: #{cell_forward.1} parent=5 // pred_check_branch
        %2727 = sbr.rel (%p2725) target = $region96
      $region95: #{cell_forward.1} parent=5 // pred_region
        %s2728 = ssub.s32 %s26, 2
        // Predicated region
        $region97: #{cell_forward.1} parent=95 // pred_check
          %p2729 = pneg %p422
        $region98: #{cell_forward.1} parent=95 // pred_check_branch
          %2731 = sbr.rel (%p2729) target = $region100
        $region99: #{cell_forward.1} parent=95 // pred_region
          %s2732 = sand.u32 %s407, 1
          %s2733 = scalar_lea.sflag [#allocation5], %s2732
          %s2734 = sand.u32 %s407, 1
          %s2735 = smul.addr %s2734, 64
          %s2736 = scalar_lea.vmem [#allocation4], %s2735
          %2737 = dma.done %s2733, 1024
        $region100: #{cell_forward.1} parent=95 // pred_fallthru
          _
      $region96: #{cell_forward.1} parent=5 // pred_fallthru
        _
    $region6: #{cell_forward.1} parent=1 // loop_footer
      %s30 = sadd.s32 1, %s26
    $region7: #{cell_forward.1} parent=1 // loop_footer_branch
      %25 = sbr.rel target = $region3
    $region8: #{cell_forward.1} parent=1 // loop_exit
      _
    %2738 = vsyncpa [#allocation5], 1
    %s2739 = scalar_lea.sflag [#allocation5], 1
    %2740 = vsyncpa %s2739, 1

</llo_original>
